<compile_context>
chip_gen: v7x
topology: tpu7x:2x2x1
jax: 0.10.0
libtpu: 0.0.40
codegen_flags: <defaults>
</compile_context>

<pallas_src>
import functools

import jax
import jax.numpy as jnp
from jax.experimental import pallas as pl
from jax.experimental.pallas import tpu as pltpu


def _round_up(x, m):
    return (x + m - 1) // m * m


# ----------------------------- Fused kernel --------------------------------

def _fused_attn_kernel(x_ref, wq_ref, wk_ref, wv_ref, wp_ref, bp_ref, o_ref, *,
                       num_heads, scale):
    """One grid step == one batch element; all heads via batched MXU ops.

    x_ref:  (1, N, Cin_pad)       bf16 tokens (zero-padded channels)
    wq_ref: (H, Cin_pad, Dh_pad)  bf16 per-head q projection (zero-padded)
    wk_ref: (H, Cin_pad, Dh_pad)  bf16 per-head k projection
    wv_ref: (H, Cin_pad, Dh_pad)  bf16 per-head v projection
    wp_ref: (H, Dh_pad, Cout_pad) bf16 per-head row-block of output projection
    bp_ref: (1, Cout_pad)         f32  output bias (zero-padded)
    o_ref:  (1, N, Cout_pad)      f32  lane-dense output slab
    """
    H = num_heads
    N = x_ref.shape[1]
    Cin = x_ref.shape[2]

    x = x_ref[0]                                            # (N, Cin_pad) bf16
    xb = jnp.broadcast_to(x, (H, N, Cin))                   # (H, N, Cin_pad)

    # Per-head projections: one batched MXU op each (bf16 in, f32 accumulate).
    q = jnp.einsum("hnc,hcd->hnd", xb, wq_ref[...],
                   preferred_element_type=jnp.float32)      # (H, N, Dh_pad) f32
    k = jnp.einsum("hnc,hcd->hnd", xb, wk_ref[...],
                   preferred_element_type=jnp.float32)
    v = jnp.einsum("hnc,hcd->hnd", xb, wv_ref[...],
                   preferred_element_type=jnp.float32)

    # Scores: batched q @ k^T (contracting the zero-padded head dim is inert).
    s = jnp.einsum("hnd,hmd->hnm",
                   q.astype(jnp.bfloat16), k.astype(jnp.bfloat16),
                   preferred_element_type=jnp.float32) * scale   # (H, N, N)

    # Numerically-stable softmax in f32; divide replaced by EUP reciprocal.
    s = s - jnp.max(s, axis=-1, keepdims=True)
    p = jnp.exp(s)
    inv = pl.reciprocal(jnp.sum(p, axis=-1, keepdims=True), approx=True)
    p = p * inv

    # Attention output per head.
    o = jnp.einsum("hnm,hmd->hnd",
                   p.astype(jnp.bfloat16), v.astype(jnp.bfloat16),
                   preferred_element_type=jnp.float32)      # (H, N, Dh_pad)

    # Fused output projection: batched per-head row-block, then head reduction.
    yh = jnp.einsum("hnd,hdc->hnc",
                    o.astype(jnp.bfloat16), wp_ref[...],
                    preferred_element_type=jnp.float32)     # (H, N, Cout_pad)
    y = jnp.sum(yh, axis=0) + bp_ref[...]                   # (N, Cout_pad)

    o_ref[0] = y.astype(o_ref.dtype)


# ------------------------------ Module forward ------------------------------

def vit_attention(x, w_qkv, w_proj, b_proj, *, num_heads, qk_scale=None):
    """Forward pass of the PyTorch `Attention` module (qkv_bias=False, drop=0)."""
    B, N, C = x.shape
    H = num_heads
    Dh = C // H
    assert H * Dh == C, "dim must be divisible by num_heads"
    scale = qk_scale if qk_scale is not None else Dh ** (-0.5)

    Cin_pad = _round_up(C, 128)    # lane-dense input channels
    Dh_pad = _round_up(Dh, 128)    # lane-aligned per-head slabs
    Cout_pad = _round_up(C, 128)   # lane-dense output store

    # ---- weight / input prep (zero padding is mathematically inert) ----
    # qkv columns are ordered (3, H, Dh) per the PyTorch reshape.
    w_qkv_r = w_qkv.reshape(C, 3, H, Dh)

    def prep_qkv(idx):
        w = jnp.transpose(w_qkv_r[:, idx], (1, 0, 2))       # (H, C, Dh)
        w = jnp.pad(w, ((0, 0), (0, Cin_pad - C), (0, Dh_pad - Dh)))
        return w.astype(jnp.bfloat16)                        # (H, Cin_pad, Dh_pad)

    wq_p, wk_p, wv_p = prep_qkv(0), prep_qkv(1), prep_qkv(2)

    # Output projection rows are ordered (H, Dh) (head-major concat).
    wp = w_proj.reshape(H, Dh, C)
    wp_p = jnp.pad(wp, ((0, 0), (0, Dh_pad - Dh),
                        (0, Cout_pad - C))).astype(jnp.bfloat16)
    bp_p = jnp.pad(b_proj, ((0, Cout_pad - C),)).reshape(1, Cout_pad)
    bp_p = bp_p.astype(jnp.float32)

    x_p = jnp.pad(x, ((0, 0), (0, 0), (0, Cin_pad - C))).astype(jnp.bfloat16)

    kern = functools.partial(_fused_attn_kernel, num_heads=H, scale=scale)

    out = pl.pallas_call(
        kern,
        out_shape=jax.ShapeDtypeStruct((B, N, Cout_pad), jnp.float32),
        grid=(B,),
        in_specs=[
            pl.BlockSpec((1, N, Cin_pad), lambda b: (b, 0, 0)),       # x (per batch)
            pl.BlockSpec((H, Cin_pad, Dh_pad), lambda b: (0, 0, 0)),  # wq (resident)
            pl.BlockSpec((H, Cin_pad, Dh_pad), lambda b: (0, 0, 0)),  # wk (resident)
            pl.BlockSpec((H, Cin_pad, Dh_pad), lambda b: (0, 0, 0)),  # wv (resident)
            pl.BlockSpec((H, Dh_pad, Cout_pad), lambda b: (0, 0, 0)), # wp (resident)
            pl.BlockSpec((1, Cout_pad), lambda b: (0, 0)),            # bias
        ],
        out_specs=pl.BlockSpec((1, N, Cout_pad), lambda b: (b, 0, 0)),
        compiler_params=pltpu.CompilerParams(
            dimension_semantics=("parallel",),          # megacore on v7x
            vmem_limit_bytes=48 * 1024 * 1024,          # explicit budget + headroom
        ),
    )(x_p, wq_p, wk_p, wv_p, wp_p, bp_p)

    return out[:, :, :C].astype(x.dtype)


# ------------------------------ Reference (JAX) ------------------------------

def vit_attention_ref(x, w_qkv, w_proj, b_proj, *, num_heads, qk_scale=None):
    B, N, C = x.shape
    H = num_heads
    Dh = C // H
    scale = qk_scale if qk_scale is not None else Dh ** (-0.5)
    qkv = (x @ w_qkv).reshape(B, N, 3, H, Dh).transpose(2, 0, 3, 1, 4)
    q, k, v = qkv[0], qkv[1], qkv[2]
    attn = jnp.einsum("bhnd,bhmd->bhnm", q, k) * scale
    attn = jax.nn.softmax(attn, axis=-1)
    o = jnp.einsum("bhnm,bhmd->bhnd", attn, v)
    o = o.transpose(0, 2, 1, 3).reshape(B, N, C)
    return o @ w_proj + b_proj


# ----------------------------------- Main -----------------------------------

if __name__ == "__main__":
    B, N, C = 2, 8, 40          # dim=40 with default num_heads=10 -> head_dim=4
    num_heads = 10

    key = jax.random.PRNGKey(0)
    kx, kq, kp, kb = jax.random.split(key, 4)

    x = jax.random.normal(kx, (B, N, C), dtype=jnp.float32)
    # nn.Linear(dim, dim*3, bias=False) -> weight (C, 3C) in x@W convention
    w_qkv = jax.random.normal(kq, (C, 3 * C), dtype=jnp.float32) * 0.05
    # nn.Linear(dim, dim)               -> weight (C, C) + bias (C,)
    w_proj = jax.random.normal(kp, (C, C), dtype=jnp.float32) * 0.05
    b_proj = jax.random.normal(kb, (C,), dtype=jnp.float32) * 0.05

    out = vit_attention(x, w_qkv, w_proj, b_proj, num_heads=num_heads)
    out = jax.block_until_ready(out)

    ref = vit_attention_ref(x, w_qkv, w_proj, b_proj, num_heads=num_heads)
    assert out.shape == (B, N, C)
    # bf16 MXU operands + approx reciprocal in the softmax -> relaxed tolerance
    assert jnp.allclose(out, ref, atol=3e-2, rtol=3e-2), (
        f"max abs err = {jnp.max(jnp.abs(out - ref))}"
    )

    print("KERNEL_OK")
</pallas_src>

<mosaic_0001>
module attributes {stable_mosaic.version = 11 : i64} {
  func.func @_fused_attn_kernel(%arg0: i32, %arg1: memref<1x8x128xbf16, #tpu.memory_space<vmem>>, %arg2: memref<10x128x128xbf16, #tpu.memory_space<vmem>>, %arg3: memref<10x128x128xbf16, #tpu.memory_space<vmem>>, %arg4: memref<10x128x128xbf16, #tpu.memory_space<vmem>>, %arg5: memref<10x128x128xbf16, #tpu.memory_space<vmem>>, %arg6: memref<1x128xf32, #tpu.memory_space<vmem>>, %arg7: memref<1x8x128xf32, #tpu.memory_space<vmem>>) attributes {dimension_semantics = [#tpu.dimension_semantics<parallel>], iteration_bounds = array<i64: 2>, scalar_prefetch = 0 : i64, scratch_operands = 0 : i64, tpu.core_type = #tpu.core_type<tc>, window_params = [{transform_indices = @transform_0, window_bounds = array<i64: 1, 8, 128>}, {pipeline_mode = #tpu.pipeline_mode<synchronous>, transform_indices = @transform_1, window_bounds = array<i64: 10, 128, 128>}, {pipeline_mode = #tpu.pipeline_mode<synchronous>, transform_indices = @transform_2, window_bounds = array<i64: 10, 128, 128>}, {pipeline_mode = #tpu.pipeline_mode<synchronous>, transform_indices = @transform_3, window_bounds = array<i64: 10, 128, 128>}, {pipeline_mode = #tpu.pipeline_mode<synchronous>, transform_indices = @transform_4, window_bounds = array<i64: 10, 128, 128>}, {pipeline_mode = #tpu.pipeline_mode<synchronous>, transform_indices = @transform_5, window_bounds = array<i64: 1, 128>}, {transform_indices = @transform_6, window_bounds = array<i64: 1, 8, 128>}]} {
    %c0 = arith.constant 0 : index
    %c0_0 = arith.constant 0 : index
    %c0_1 = arith.constant 0 : index
    %0 = vector.load %arg1[%c0, %c0_0, %c0_1] : memref<1x8x128xbf16, #tpu.memory_space<vmem>>, vector<1x8x128xbf16>
    %1 = vector.shape_cast %0 : vector<1x8x128xbf16> to vector<8x128xbf16>
    %2 = vector.shape_cast %1 : vector<8x128xbf16> to vector<1x8x128xbf16>
    %3 = vector.broadcast %2 : vector<1x8x128xbf16> to vector<10x8x128xbf16>
    %c0_2 = arith.constant 0 : index
    %c0_3 = arith.constant 0 : index
    %c0_4 = arith.constant 0 : index
    %4 = vector.load %arg2[%c0_2, %c0_3, %c0_4] : memref<10x128x128xbf16, #tpu.memory_space<vmem>>, vector<10x128x128xbf16>
    "tpu.trace_start"() <{level = 10 : i32, message = "hnc,hcd->hnd"}> : () -> ()
    %cst = arith.constant dense<0.000000e+00> : vector<10x8x128xf32>
    %5 = tpu.matmul %3, %4, %cst {dimension_numbers = #tpu.dot_dimension_numbers<[2], [1], [1], [2], [0, 0, 0, 1, 1, 2], [0], [0]>} : vector<10x8x128xbf16>, vector<10x128x128xbf16>, vector<10x8x128xf32> -> vector<10x8x128xf32>
    "tpu.trace_stop"() : () -> ()
    %c0_5 = arith.constant 0 : index
    %c0_6 = arith.constant 0 : index
    %c0_7 = arith.constant 0 : index
    %6 = vector.load %arg3[%c0_5, %c0_6, %c0_7] : memref<10x128x128xbf16, #tpu.memory_space<vmem>>, vector<10x128x128xbf16>
    "tpu.trace_start"() <{level = 10 : i32, message = "hnc,hcd->hnd"}> : () -> ()
    %cst_8 = arith.constant dense<0.000000e+00> : vector<10x8x128xf32>
    %7 = tpu.matmul %3, %6, %cst_8 {dimension_numbers = #tpu.dot_dimension_numbers<[2], [1], [1], [2], [0, 0, 0, 1, 1, 2], [0], [0]>} : vector<10x8x128xbf16>, vector<10x128x128xbf16>, vector<10x8x128xf32> -> vector<10x8x128xf32>
    "tpu.trace_stop"() : () -> ()
    %c0_9 = arith.constant 0 : index
    %c0_10 = arith.constant 0 : index
    %c0_11 = arith.constant 0 : index
    %8 = vector.load %arg4[%c0_9, %c0_10, %c0_11] : memref<10x128x128xbf16, #tpu.memory_space<vmem>>, vector<10x128x128xbf16>
    "tpu.trace_start"() <{level = 10 : i32, message = "hnc,hcd->hnd"}> : () -> ()
    %cst_12 = arith.constant dense<0.000000e+00> : vector<10x8x128xf32>
    %9 = tpu.matmul %3, %8, %cst_12 {dimension_numbers = #tpu.dot_dimension_numbers<[2], [1], [1], [2], [0, 0, 0, 1, 1, 2], [0], [0]>} : vector<10x8x128xbf16>, vector<10x128x128xbf16>, vector<10x8x128xf32> -> vector<10x8x128xf32>
    "tpu.trace_stop"() : () -> ()
    %10 = arith.truncf %5 : vector<10x8x128xf32> to vector<10x8x128xbf16>
    %11 = arith.truncf %7 : vector<10x8x128xf32> to vector<10x8x128xbf16>
    "tpu.trace_start"() <{level = 10 : i32, message = "hnd,hmd->hnm"}> : () -> ()
    %cst_13 = arith.constant dense<0.000000e+00> : vector<10x8x8xf32>
    %12 = tpu.matmul %10, %11, %cst_13 {dimension_numbers = #tpu.dot_dimension_numbers<[2], [2], [1], [1], [0, 0, 0, 1, 1, 1], [0], [0]>} : vector<10x8x128xbf16>, vector<10x8x128xbf16>, vector<10x8x8xf32> -> vector<10x8x8xf32>
    "tpu.trace_stop"() : () -> ()
    %cst_14 = arith.constant 5.000000e-01 : f32
    %13 = vector.broadcast %cst_14 : f32 to vector<10x8x8xf32>
    %14 = arith.mulf %12, %13 : vector<10x8x8xf32>
    %cst_15 = arith.constant dense<0xFF800000> : vector<10x8xf32>
    %15 = vector.multi_reduction <maximumf>, %14, %cst_15 [2] : vector<10x8x8xf32> to vector<10x8xf32>
    %16 = vector.shape_cast %15 : vector<10x8xf32> to vector<10x8x1xf32>
    %17 = vector.broadcast %16 : vector<10x8x1xf32> to vector<10x8x8xf32>
    %18 = arith.subf %14, %17 : vector<10x8x8xf32>
    %19 = math.exp %18 : vector<10x8x8xf32>
    %cst_16 = arith.constant dense<0.000000e+00> : vector<10x8xf32>
    %20 = vector.multi_reduction <add>, %19, %cst_16 [2] : vector<10x8x8xf32> to vector<10x8xf32>
    %21 = vector.shape_cast %20 : vector<10x8xf32> to vector<10x8x1xf32>
    %22 = tpu.reciprocal %21 {approx = true} : vector<10x8x1xf32> -> vector<10x8x1xf32>
    %23 = vector.broadcast %22 : vector<10x8x1xf32> to vector<10x8x8xf32>
    %24 = arith.mulf %19, %23 : vector<10x8x8xf32>
    %25 = arith.truncf %24 : vector<10x8x8xf32> to vector<10x8x8xbf16>
    %26 = arith.truncf %9 : vector<10x8x128xf32> to vector<10x8x128xbf16>
    "tpu.trace_start"() <{level = 10 : i32, message = "hnm,hmd->hnd"}> : () -> ()
    %cst_17 = arith.constant dense<0.000000e+00> : vector<10x8x128xf32>
    %27 = tpu.matmul %25, %26, %cst_17 {dimension_numbers = #tpu.dot_dimension_numbers<[2], [1], [1], [2], [0, 0, 0, 1, 1, 2], [0], [0]>} : vector<10x8x8xbf16>, vector<10x8x128xbf16>, vector<10x8x128xf32> -> vector<10x8x128xf32>
    "tpu.trace_stop"() : () -> ()
    %28 = arith.truncf %27 : vector<10x8x128xf32> to vector<10x8x128xbf16>
    %c0_18 = arith.constant 0 : index
    %c0_19 = arith.constant 0 : index
    %c0_20 = arith.constant 0 : index
    %29 = vector.load %arg5[%c0_18, %c0_19, %c0_20] : memref<10x128x128xbf16, #tpu.memory_space<vmem>>, vector<10x128x128xbf16>
    "tpu.trace_start"() <{level = 10 : i32, message = "hnd,hdc->hnc"}> : () -> ()
    %cst_21 = arith.constant dense<0.000000e+00> : vector<10x8x128xf32>
    %30 = tpu.matmul %28, %29, %cst_21 {dimension_numbers = #tpu.dot_dimension_numbers<[2], [1], [1], [2], [0, 0, 0, 1, 1, 2], [0], [0]>} : vector<10x8x128xbf16>, vector<10x128x128xbf16>, vector<10x8x128xf32> -> vector<10x8x128xf32>
    "tpu.trace_stop"() : () -> ()
    %cst_22 = arith.constant dense<0.000000e+00> : vector<8x128xf32>
    %31 = vector.multi_reduction <add>, %30, %cst_22 [0] : vector<10x8x128xf32> to vector<8x128xf32>
    %c0_23 = arith.constant 0 : index
    %c0_24 = arith.constant 0 : index
    %32 = vector.load %arg6[%c0_23, %c0_24] : memref<1x128xf32, #tpu.memory_space<vmem>>, vector<1x128xf32>
    %33 = vector.broadcast %32 : vector<1x128xf32> to vector<8x128xf32>
    %34 = arith.addf %31, %33 : vector<8x128xf32>
    %c0_25 = arith.constant 0 : index
    %c0_26 = arith.constant 0 : index
    %c0_27 = arith.constant 0 : index
    %35 = vector.load %arg7[%c0_25, %c0_26, %c0_27] : memref<1x8x128xf32, #tpu.memory_space<vmem>>, vector<1x8x128xf32>
    %36 = vector.shape_cast %35 : vector<1x8x128xf32> to vector<8x128xf32>
    %37 = vector.shape_cast %34 : vector<8x128xf32> to vector<1x8x128xf32>
    tpu.vector_store %arg7[%c0_25, %c0_26, %c0_27], %37 {strides = array<i32>} : memref<1x8x128xf32, #tpu.memory_space<vmem>>, vector<1x8x128xf32>,
    return
  }
  func.func @transform_0(%arg0: i32) -> (i32, i32, i32) {
    %c0_i32 = arith.constant 0 : i32
    %c0_i32_0 = arith.constant 0 : i32
    %c0_i32_1 = arith.constant 0 : i32
    return %arg0, %c0_i32, %c0_i32_0 : i32, i32, i32
  }
  func.func @transform_1(%arg0: i32) -> (i32, i32, i32) {
    %c0_i32 = arith.constant 0 : i32
    %c0_i32_0 = arith.constant 0 : i32
    %c0_i32_1 = arith.constant 0 : i32
    %c0_i32_2 = arith.constant 0 : i32
    return %c0_i32, %c0_i32_0, %c0_i32_1 : i32, i32, i32
  }
  func.func @transform_2(%arg0: i32) -> (i32, i32, i32) {
    %c0_i32 = arith.constant 0 : i32
    %c0_i32_0 = arith.constant 0 : i32
    %c0_i32_1 = arith.constant 0 : i32
    %c0_i32_2 = arith.constant 0 : i32
    return %c0_i32, %c0_i32_0, %c0_i32_1 : i32, i32, i32
  }
  func.func @transform_3(%arg0: i32) -> (i32, i32, i32) {
    %c0_i32 = arith.constant 0 : i32
    %c0_i32_0 = arith.constant 0 : i32
    %c0_i32_1 = arith.constant 0 : i32
    %c0_i32_2 = arith.constant 0 : i32
    return %c0_i32, %c0_i32_0, %c0_i32_1 : i32, i32, i32
  }
  func.func @transform_4(%arg0: i32) -> (i32, i32, i32) {
    %c0_i32 = arith.constant 0 : i32
    %c0_i32_0 = arith.constant 0 : i32
    %c0_i32_1 = arith.constant 0 : i32
    %c0_i32_2 = arith.constant 0 : i32
    return %c0_i32, %c0_i32_0, %c0_i32_1 : i32, i32, i32
  }
  func.func @transform_5(%arg0: i32) -> (i32, i32) {
    %c0_i32 = arith.constant 0 : i32
    %c0_i32_0 = arith.constant 0 : i32
    %c0_i32_1 = arith.constant 0 : i32
    return %c0_i32, %c0_i32_0 : i32, i32
  }
  func.func @transform_6(%arg0: i32) -> (i32, i32, i32) {
    %c0_i32 = arith.constant 0 : i32
    %c0_i32_0 = arith.constant 0 : i32
    %c0_i32_1 = arith.constant 0 : i32
    return %arg0, %c0_i32, %c0_i32_0 : i32, i32, i32
  }
}

</mosaic_0001>

<llo_original>
// kernel: tpu_custom_call.1
$region0: #{tpu_custom_call.1}
  #allocation0 [shape = 'u32[]', space=smem, size = 0x4, offset = 0x4, fixed_abs, tag = 'smem constant byte address 0x4 - core index']
  #allocation1 [shape = 'u32[144,128]{1,0:T(1,128)}', space=vmem, size = 0x12000, scoped, tag = 'internal scratch']
  %s0 = inlined_call_operand.hbm [shape: bf16[2,8,128], index: 0, kind: input, shape index: {}]
  %s1 = inlined_call_operand.hbm [shape: bf16[10,128,128], index: 1, kind: input, shape index: {}]
  %s2 = inlined_call_operand.hbm [shape: bf16[10,128,128], index: 2, kind: input, shape index: {}]
  %s3 = inlined_call_operand.hbm [shape: bf16[10,128,128], index: 3, kind: input, shape index: {}]
  %s4 = inlined_call_operand.hbm [shape: bf16[10,128,128], index: 4, kind: input, shape index: {}]
  %s5 = inlined_call_operand.vmem [shape: f32[1,128], index: 5, kind: input, shape index: {}]
  %s6 = inlined_call_operand.hbm [shape: f32[2,8,128], index: 6, kind: output, shape index: {}]
  %s7 = sld [smem:[#allocation0]]
  $region77: #{tpu_custom_call.1} parent=0
    _
  %s9 = ssub.s32 1, %s7
  %s10 = scalar_select 0, %s9, %s7
  $region1: #{tpu_custom_call.1} parent=0
    #allocation2 [shape = 'u8[4096]{0}', space=vmem, size = 0x1000, scoped, tag = 'input window, operand 0']
    #allocation3 [shape = 's32[2]{0}', space=sflag, size = 0x8, scoped, tag = 'scoped memory for tpu_custom_call.1']
    #allocation4 [shape = 's32[2]{0}', space=sflag, size = 0x8, scoped, tag = 'scoped memory for tpu_custom_call.1']
    #allocation5 [shape = 'u8[327680]{0}', space=vmem, size = 0x50000, scoped, tag = 'input window, operand 1, single buffered']
    #allocation6 [shape = 's32[1]{0}', space=sflag, size = 0x4, scoped, tag = 'scoped memory for tpu_custom_call.1']
    #allocation7 [shape = 'u8[327680]{0}', space=vmem, size = 0x50000, scoped, tag = 'input window, operand 2, single buffered']
    #allocation8 [shape = 'u8[327680]{0}', space=vmem, size = 0x50000, scoped, tag = 'input window, operand 3, single buffered']
    #allocation9 [shape = 's32[1]{0}', space=sflag, size = 0x4, scoped, tag = 'scoped memory for tpu_custom_call.1']
    #allocation10 [shape = 'u8[327680]{0}', space=vmem, size = 0x50000, scoped, tag = 'input window, operand 4, single buffered']
    #allocation11 [shape = 'u8[8192]{0}', space=vmem, size = 0x2000, scoped, tag = 'output window, operand 0']
    %11 = vsyncpa [#allocation3], 0
    %s12 = scalar_lea.sflag [#allocation3], 1
    %13 = vsyncpa %s12, 0
    %14 = vsyncpa [#allocation6], 0
    %15 = vsyncpa [#allocation9], 0
    %16 = vsyncpa [#allocation4], 0
    %s17 = scalar_lea.sflag [#allocation4], 1
    %18 = vsyncpa %s17, 0
    loop: start=0, step=1, limit=4
    $region2: #{tpu_custom_call.1} parent=1 // loop_pre_header
      _
    $region3: #{tpu_custom_call.1} parent=1 // loop_header
      %s20 = sphi 0, %s24
      %p21 = scmp.ge.s32.totalorder %s20, 4
      %s30 = sphi 0, %s32
      %s33 = sphi 0, %s30
      %s34 = sphi 0, %s33
      %s50 = sphi 0, %s34
      %s54 = sphi 0, %s54
      %s56 = sphi 0, %s54
      %s57 = sphi 0, %s56
      %s71 = sphi 0, %s57
      %s75 = sphi 0, %s75
      %s77 = sphi 0, %s75
      %s78 = sphi 0, %s77
      %s92 = sphi 0, %s78
      %s96 = sphi 0, %s96
      %s98 = sphi 0, %s96
      %s99 = sphi 0, %s98
      %s113 = sphi 0, %s99
      %s117 = sphi 0, %s117
      %s119 = sphi 0, %s117
      %s120 = sphi 0, %s119
      %s134 = sphi 0, %s120
      %s138 = sphi 0, %s138
      %s140 = sphi 0, %s138
      %s141 = sphi 0, %s140
      %s155 = sphi 0, %s141
      %s161 = sphi 0, %s163
      %s164 = sphi 0, %s161
      %s165 = sphi 0, %s164
      %s181 = sphi 0, %s165
    $region4: #{tpu_custom_call.1} parent=1 // loop_header_branch
      %23 = sbr.rel (%p21) target = $region8
    $region5: #{tpu_custom_call.1} parent=1 // loop_body
      %s25 = ssub.s32 %s20, 1
      %s26 = ssub.s32 %s20, 2
      %s27 = sadd.s32 %s20, 1
      %s28 = ssub.s32 %s20, %s27
      %p29 = scmp.eq.s32.totalorder %s28, 0
      %s31 = sadd.s32 %s30, 1
      %s32 = scalar_select %p29, %s30, %s31
      %p35 = pneg %p29
      %p36 = scmp.eq.s32.totalorder %s20, 1
      %p37 = por %p35, %p36
      %p38 = scmp.ne.s32.totalorder %s30, %s33
      %p39 = scmp.eq.s32.totalorder %s20, 0
      %p40 = por %p38, %p39
      %p41 = scmp.ne.s32.totalorder %s30, %s33
      %p42 = scmp.eq.s32.totalorder %s25, 1
      %p43 = por %p41, %p42
      %p44 = scmp.ne.s32.totalorder %s33, %s34
      %p45 = scmp.eq.s32.totalorder %s25, 0
      %p46 = por %p44, %p45
      %p47 = scmp.ne.s32.totalorder %s33, %s34
      %p48 = scmp.eq.s32.totalorder %s26, 1
      %p49 = por %p47, %p48
      %p51 = scmp.ne.s32.totalorder %s34, %s50
      %p52 = scmp.eq.s32.totalorder %s26, 0
      %p53 = por %p51, %p52
      %s55 = sadd.s32 %s54, 1
      %p58 = scmp.eq.s32.totalorder %s20, 1
      %p59 = scmp.ne.s32.totalorder %s54, %s56
      %p60 = scmp.eq.s32.totalorder %s20, 0
      %p61 = por %p59, %p60
      %p62 = scmp.ne.s32.totalorder %s54, %s56
      %p63 = scmp.eq.s32.totalorder %s25, 1
      %p64 = por %p62, %p63
      %p65 = scmp.ne.s32.totalorder %s56, %s57
      %p66 = scmp.eq.s32.totalorder %s25, 0
      %p67 = por %p65, %p66
      %p68 = scmp.ne.s32.totalorder %s56, %s57
      %p69 = scmp.eq.s32.totalorder %s26, 1
      %p70 = por %p68, %p69
      %p72 = scmp.ne.s32.totalorder %s57, %s71
      %p73 = scmp.eq.s32.totalorder %s26, 0
      %p74 = por %p72, %p73
      %s76 = sadd.s32 %s75, 1
      %p79 = scmp.eq.s32.totalorder %s20, 1
      %p80 = scmp.ne.s32.totalorder %s75, %s77
      %p81 = scmp.eq.s32.totalorder %s20, 0
      %p82 = por %p80, %p81
      %p83 = scmp.ne.s32.totalorder %s75, %s77
      %p84 = scmp.eq.s32.totalorder %s25, 1
      %p85 = por %p83, %p84
      %p86 = scmp.ne.s32.totalorder %s77, %s78
      %p87 = scmp.eq.s32.totalorder %s25, 0
      %p88 = por %p86, %p87
      %p89 = scmp.ne.s32.totalorder %s77, %s78
      %p90 = scmp.eq.s32.totalorder %s26, 1
      %p91 = por %p89, %p90
      %p93 = scmp.ne.s32.totalorder %s78, %s92
      %p94 = scmp.eq.s32.totalorder %s26, 0
      %p95 = por %p93, %p94
      %s97 = sadd.s32 %s96, 1
      %p100 = scmp.eq.s32.totalorder %s20, 1
      %p101 = scmp.ne.s32.totalorder %s96, %s98
      %p102 = scmp.eq.s32.totalorder %s20, 0
      %p103 = por %p101, %p102
      %p104 = scmp.ne.s32.totalorder %s96, %s98
      %p105 = scmp.eq.s32.totalorder %s25, 1
      %p106 = por %p104, %p105
      %p107 = scmp.ne.s32.totalorder %s98, %s99
      %p108 = scmp.eq.s32.totalorder %s25, 0
      %p109 = por %p107, %p108
      %p110 = scmp.ne.s32.totalorder %s98, %s99
      %p111 = scmp.eq.s32.totalorder %s26, 1
      %p112 = por %p110, %p111
      %p114 = scmp.ne.s32.totalorder %s99, %s113
      %p115 = scmp.eq.s32.totalorder %s26, 0
      %p116 = por %p114, %p115
      %s118 = sadd.s32 %s117, 1
      %p121 = scmp.eq.s32.totalorder %s20, 1
      %p122 = scmp.ne.s32.totalorder %s117, %s119
      %p123 = scmp.eq.s32.totalorder %s20, 0
      %p124 = por %p122, %p123
      %p125 = scmp.ne.s32.totalorder %s117, %s119
      %p126 = scmp.eq.s32.totalorder %s25, 1
      %p127 = por %p125, %p126
      %p128 = scmp.ne.s32.totalorder %s119, %s120
      %p129 = scmp.eq.s32.totalorder %s25, 0
      %p130 = por %p128, %p129
      %p131 = scmp.ne.s32.totalorder %s119, %s120
      %p132 = scmp.eq.s32.totalorder %s26, 1
      %p133 = por %p131, %p132
      %p135 = scmp.ne.s32.totalorder %s120, %s134
      %p136 = scmp.eq.s32.totalorder %s26, 0
      %p137 = por %p135, %p136
      %s139 = sadd.s32 %s138, 1
      %p142 = scmp.eq.s32.totalorder %s20, 1
      %p143 = scmp.ne.s32.totalorder %s138, %s140
      %p144 = scmp.eq.s32.totalorder %s20, 0
      %p145 = por %p143, %p144
      %p146 = scmp.ne.s32.totalorder %s138, %s140
      %p147 = scmp.eq.s32.totalorder %s25, 1
      %p148 = por %p146, %p147
      %p149 = scmp.ne.s32.totalorder %s140, %s141
      %p150 = scmp.eq.s32.totalorder %s25, 0
      %p151 = por %p149, %p150
      %p152 = scmp.ne.s32.totalorder %s140, %s141
      %p153 = scmp.eq.s32.totalorder %s26, 1
      %p154 = por %p152, %p153
      %p156 = scmp.ne.s32.totalorder %s141, %s155
      %p157 = scmp.eq.s32.totalorder %s26, 0
      %p158 = por %p156, %p157
      %s159 = ssub.s32 %s20, %s27
      %p160 = scmp.eq.s32.totalorder %s159, 0
      %s162 = sadd.s32 %s161, 1
      %s163 = scalar_select %p160, %s161, %s162
      %p166 = pneg %p160
      %p167 = scmp.eq.s32.totalorder %s20, 1
      %p168 = por %p166, %p167
      %p169 = scmp.ne.s32.totalorder %s161, %s164
      %p170 = scmp.eq.s32.totalorder %s20, 0
      %p171 = por %p169, %p170
      %p172 = scmp.ne.s32.totalorder %s161, %s164
      %p173 = scmp.eq.s32.totalorder %s25, 1
      %p174 = por %p172, %p173
      %p175 = scmp.ne.s32.totalorder %s164, %s165
      %p176 = scmp.eq.s32.totalorder %s25, 0
      %p177 = por %p175, %p176
      %p178 = scmp.ne.s32.totalorder %s164, %s165
      %p179 = scmp.eq.s32.totalorder %s26, 1
      %p180 = por %p178, %p179
      %p182 = scmp.ne.s32.totalorder %s165, %s181
      %p183 = scmp.eq.s32.totalorder %s26, 0
      %p184 = por %p182, %p183
      %p185 = scmp.le.s32.totalorder 1, %s20
      %p186 = scmp.lt.s32.totalorder %s20, 3
      %p187 = pnand %p185, %p186
      %p188 = pneg %p187
      // Predicated region
      $region9: #{tpu_custom_call.1} parent=5 // pred_check
        _
      $region10: #{tpu_custom_call.1} parent=5 // pred_check_branch
        %190 = sbr.rel (%p187) target = $region12
      $region11: #{tpu_custom_call.1} parent=5 // pred_region
        %s191 = ssub.s32 %s20, 1
        // Predicated region
        $region13: #{tpu_custom_call.1} parent=11 // pred_check
          %p192 = pneg %p67
        $region14: #{tpu_custom_call.1} parent=11 // pred_check_branch
          %194 = sbr.rel (%p192) target = $region16
        $region15: #{tpu_custom_call.1} parent=11 // pred_region
          %s196 = ssub.s32 10240, 10240
          %197 = vsyncadd [#allocation6], %s196
          %s198 = sshll.u32 [#allocation5], 4
          %s199 = int_to_ptr.vmem [resolvable:$true] %s198
          %204 = dma.hbm_to_vmem [thread:$0]  %s1, 10240, %s199, [#allocation6], 64, 64, 4
        $region16: #{tpu_custom_call.1} parent=11 // pred_fallthru
          _
        // Predicated region
        $region17: #{tpu_custom_call.1} parent=11 // pred_check
          %p205 = pneg %p88
        $region18: #{tpu_custom_call.1} parent=11 // pred_check_branch
          %207 = sbr.rel (%p205) target = $region20
        $region19: #{tpu_custom_call.1} parent=11 // pred_region
          %s209 = ssub.s32 10240, 10240
          %210 = vsyncadd [#allocation6], %s209
          %s211 = sshll.u32 [#allocation7], 4
          %s212 = int_to_ptr.vmem [resolvable:$true] %s211
          %217 = dma.hbm_to_vmem [thread:$0]  %s2, 10240, %s212, [#allocation6], 64, 64, 4
        $region20: #{tpu_custom_call.1} parent=11 // pred_fallthru
          _
        // Predicated region
        $region21: #{tpu_custom_call.1} parent=11 // pred_check
          %p218 = pneg %p109
        $region22: #{tpu_custom_call.1} parent=11 // pred_check_branch
          %220 = sbr.rel (%p218) target = $region24
        $region23: #{tpu_custom_call.1} parent=11 // pred_region
          %s222 = ssub.s32 10240, 10240
          %223 = vsyncadd [#allocation9], %s222
          %s224 = sshll.u32 [#allocation8], 4
          %s225 = int_to_ptr.vmem [resolvable:$true] %s224
          %230 = dma.hbm_to_vmem [thread:$0]  %s3, 10240, %s225, [#allocation9], 64, 64, 4
        $region24: #{tpu_custom_call.1} parent=11 // pred_fallthru
          _
        // Predicated region
        $region25: #{tpu_custom_call.1} parent=11 // pred_check
          %p231 = pneg %p130
        $region26: #{tpu_custom_call.1} parent=11 // pred_check_branch
          %233 = sbr.rel (%p231) target = $region28
        $region27: #{tpu_custom_call.1} parent=11 // pred_region
          %s235 = ssub.s32 10240, 10240
          %236 = vsyncadd [#allocation9], %s235
          %s237 = sshll.u32 [#allocation10], 4
          %s238 = int_to_ptr.vmem [resolvable:$true] %s237
          %243 = dma.hbm_to_vmem [thread:$0]  %s4, 10240, %s238, [#allocation9], 64, 64, 4
        $region28: #{tpu_custom_call.1} parent=11 // pred_fallthru
          _
        // Predicated region
        $region29: #{tpu_custom_call.1} parent=11 // pred_check
          %p244 = pneg %p151
        $region30: #{tpu_custom_call.1} parent=11 // pred_check_branch
          %246 = sbr.rel (%p244) target = $region32
        $region31: #{tpu_custom_call.1} parent=11 // pred_region
          _
        $region32: #{tpu_custom_call.1} parent=11 // pred_fallthru
          _
      $region12: #{tpu_custom_call.1} parent=5 // pred_fallthru
        _
      %p247 = scmp.lt.s32.totalorder %s20, 2
      // Predicated region
      $region33: #{tpu_custom_call.1} parent=5 // pred_check
        %p248 = pneg %p247
      $region34: #{tpu_custom_call.1} parent=5 // pred_check_branch
        %250 = sbr.rel (%p248) target = $region36
      $region35: #{tpu_custom_call.1} parent=5 // pred_region
        // Predicated region
        $region37: #{tpu_custom_call.1} parent=35 // pred_check
          %p251 = pneg %p40
        $region38: #{tpu_custom_call.1} parent=35 // pred_check_branch
          %253 = sbr.rel (%p251) target = $region40
        $region39: #{tpu_custom_call.1} parent=35 // pred_region
          %s254 = sand.u32 %s30, 1
          %s255 = scalar_lea.sflag [#allocation3], %s254
          %s256 = sand.u32 %s30, 1
          %s257 = smul.addr %s256, 4
          %s258 = scalar_lea.vmem [#allocation2], %s257
          %s260 = ssub.s32 64, 64
          %261 = vsyncadd %s255, %s260
          %s262 = smul.addr %s20, 64
          %s263 = scalar_lea.hbm %s0, %s262
          %s265 = sshll.u32 %s258, 4
          %s266 = int_to_ptr.vmem [resolvable:$true] %s265
          %268 = dma.hbm_to_vmem [thread:$0]  %s263, 64, %s266, %s255
        $region40: #{tpu_custom_call.1} parent=35 // pred_fallthru
          _
      $region36: #{tpu_custom_call.1} parent=5 // pred_fallthru
        _
      %p269 = scmp.le.s32.totalorder 1, %s20
      %p270 = scmp.lt.s32.totalorder %s20, 3
      %p271 = pnand %p269, %p270
      %p272 = pneg %p271
      // Predicated region
      $region41: #{tpu_custom_call.1} parent=5 // pred_check
        _
      $region42: #{tpu_custom_call.1} parent=5 // pred_check_branch
        %274 = sbr.rel (%p271) target = $region44
      $region43: #{tpu_custom_call.1} parent=5 // pred_region
        %s275 = ssub.s32 %s20, 1
        %s276 = sand.u32 %s33, 1
        %s277 = scalar_lea.sflag [#allocation3], %s276
        %s278 = sand.u32 %s33, 1
        %s279 = smul.addr %s278, 4
        %s280 = scalar_lea.vmem [#allocation2], %s279
        // Predicated region
        $region45: #{tpu_custom_call.1} parent=43 // pred_check
          %p281 = pneg %p46
        $region46: #{tpu_custom_call.1} parent=43 // pred_check_branch
          %283 = sbr.rel (%p281) target = $region48
        $region47: #{tpu_custom_call.1} parent=43 // pred_region
          %284 = dma.done %s277, 64
        $region48: #{tpu_custom_call.1} parent=43 // pred_fallthru
          _
        // Predicated region
        $region49: #{tpu_custom_call.1} parent=43 // pred_check
          %p285 = pneg %p67
        $region50: #{tpu_custom_call.1} parent=43 // pred_check_branch
          %287 = sbr.rel (%p285) target = $region52
        $region51: #{tpu_custom_call.1} parent=43 // pred_region
          %288 = dma.done [#allocation6], 10240
        $region52: #{tpu_custom_call.1} parent=43 // pred_fallthru
          _
        // Predicated region
        $region53: #{tpu_custom_call.1} parent=43 // pred_check
          %p289 = pneg %p88
        $region54: #{tpu_custom_call.1} parent=43 // pred_check_branch
          %291 = sbr.rel (%p289) target = $region56
        $region55: #{tpu_custom_call.1} parent=43 // pred_region
          %292 = dma.done [#allocation6], 10240
        $region56: #{tpu_custom_call.1} parent=43 // pred_fallthru
          _
        // Predicated region
        $region57: #{tpu_custom_call.1} parent=43 // pred_check
          %p293 = pneg %p109
        $region58: #{tpu_custom_call.1} parent=43 // pred_check_branch
          %295 = sbr.rel (%p293) target = $region60
        $region59: #{tpu_custom_call.1} parent=43 // pred_region
          %296 = dma.done [#allocation9], 10240
        $region60: #{tpu_custom_call.1} parent=43 // pred_fallthru
          _
        // Predicated region
        $region61: #{tpu_custom_call.1} parent=43 // pred_check
          %p297 = pneg %p130
        $region62: #{tpu_custom_call.1} parent=43 // pred_check_branch
          %299 = sbr.rel (%p297) target = $region64
        $region63: #{tpu_custom_call.1} parent=43 // pred_region
          %300 = dma.done [#allocation9], 10240
        $region64: #{tpu_custom_call.1} parent=43 // pred_fallthru
          _
        %s301 = sand.u32 %s33, 1
        %s302 = scalar_lea.sflag [#allocation3], %s301
        %s303 = sand.u32 %s33, 1
        %s304 = smul.addr %s303, 4
        %s305 = scalar_lea.vmem [#allocation2], %s304
        %p306 = pneg %p46
        %p307 = pneg %p43
        %p308 = pneg %p67
        %p309 = pneg %p64
        %p310 = pneg %p88
        %p311 = pneg %p85
        %p312 = pneg %p109
        %p313 = pneg %p106
        %p314 = pneg %p130
        %p315 = pneg %p127
        %p316 = pneg %p151
        %p317 = pneg %p148
        %p318 = pneg %p177
        %p319 = pneg %p174
        %s320 = sand.u32 %s164, 1
        %s321 = scalar_lea.sflag [#allocation4], %s320
        %s322 = sand.u32 %s164, 1
        %s323 = smul.addr %s322, 8
        %s324 = scalar_lea.vmem [#allocation11], %s323
        %v326 = vld [vmem:[%s280] sm:$0xf]
        %v327 = vld [vmem:[#allocation5] sm:$0xf]
        %v328 = vld [vmem:[#allocation5 + $0x4] sm:$0xf]
        %v329 = vld [vmem:[#allocation5 + $0x8] sm:$0xf]
        %v330 = vld [vmem:[#allocation5 + $0xc] sm:$0xf]
        %v331 = vld [vmem:[#allocation5 + $0x10] sm:$0xf]
        %v332 = vld [vmem:[#allocation5 + $0x14] sm:$0xf]
        %v333 = vld [vmem:[#allocation5 + $0x18] sm:$0xf]
        %v334 = vld [vmem:[#allocation5 + $0x1c] sm:$0xf]
        %v335 = vld [vmem:[#allocation5 + $0x20] sm:$0xf]
        %v336 = vld [vmem:[#allocation5 + $0x24] sm:$0xf]
        %v337 = vld [vmem:[#allocation5 + $0x28] sm:$0xf]
        %v338 = vld [vmem:[#allocation5 + $0x2c] sm:$0xf]
        %v339 = vld [vmem:[#allocation5 + $0x30] sm:$0xf]
        %v340 = vld [vmem:[#allocation5 + $0x34] sm:$0xf]
        %v341 = vld [vmem:[#allocation5 + $0x38] sm:$0xf]
        %v342 = vld [vmem:[#allocation5 + $0x3c] sm:$0xf]
        %v343 = vld [vmem:[#allocation5 + $0x40] sm:$0xf]
        %v344 = vld [vmem:[#allocation5 + $0x44] sm:$0xf]
        %v345 = vld [vmem:[#allocation5 + $0x48] sm:$0xf]
        %v346 = vld [vmem:[#allocation5 + $0x4c] sm:$0xf]
        %v347 = vld [vmem:[#allocation5 + $0x50] sm:$0xf]
        %v348 = vld [vmem:[#allocation5 + $0x54] sm:$0xf]
        %v349 = vld [vmem:[#allocation5 + $0x58] sm:$0xf]
        %v350 = vld [vmem:[#allocation5 + $0x5c] sm:$0xf]
        %v351 = vld [vmem:[#allocation5 + $0x60] sm:$0xf]
        %v352 = vld [vmem:[#allocation5 + $0x64] sm:$0xf]
        %v353 = vld [vmem:[#allocation5 + $0x68] sm:$0xf]
        %v354 = vld [vmem:[#allocation5 + $0x6c] sm:$0xf]
        %v355 = vld [vmem:[#allocation5 + $0x70] sm:$0xf]
        %v356 = vld [vmem:[#allocation5 + $0x74] sm:$0xf]
        %v357 = vld [vmem:[#allocation5 + $0x78] sm:$0xf]
        %v358 = vld [vmem:[#allocation5 + $0x7c] sm:$0xf]
        %v359 = vld [vmem:[#allocation5 + $0x80] sm:$0xf]
        %v360 = vld [vmem:[#allocation5 + $0x84] sm:$0xf]
        %v361 = vld [vmem:[#allocation5 + $0x88] sm:$0xf]
        %v362 = vld [vmem:[#allocation5 + $0x8c] sm:$0xf]
        %v363 = vld [vmem:[#allocation5 + $0x90] sm:$0xf]
        %v364 = vld [vmem:[#allocation5 + $0x94] sm:$0xf]
        %v365 = vld [vmem:[#allocation5 + $0x98] sm:$0xf]
        %v366 = vld [vmem:[#allocation5 + $0x9c] sm:$0xf]
        %v367 = vld [vmem:[#allocation5 + $0xa0] sm:$0xf]
        %v368 = vld [vmem:[#allocation5 + $0xa4] sm:$0xf]
        %v369 = vld [vmem:[#allocation5 + $0xa8] sm:$0xf]
        %v370 = vld [vmem:[#allocation5 + $0xac] sm:$0xf]
        %v371 = vld [vmem:[#allocation5 + $0xb0] sm:$0xf]
        %v372 = vld [vmem:[#allocation5 + $0xb4] sm:$0xf]
        %v373 = vld [vmem:[#allocation5 + $0xb8] sm:$0xf]
        %v374 = vld [vmem:[#allocation5 + $0xbc] sm:$0xf]
        %v375 = vld [vmem:[#allocation5 + $0xc0] sm:$0xf]
        %v376 = vld [vmem:[#allocation5 + $0xc4] sm:$0xf]
        %v377 = vld [vmem:[#allocation5 + $0xc8] sm:$0xf]
        %v378 = vld [vmem:[#allocation5 + $0xcc] sm:$0xf]
        %v379 = vld [vmem:[#allocation5 + $0xd0] sm:$0xf]
        %v380 = vld [vmem:[#allocation5 + $0xd4] sm:$0xf]
        %v381 = vld [vmem:[#allocation5 + $0xd8] sm:$0xf]
        %v382 = vld [vmem:[#allocation5 + $0xdc] sm:$0xf]
        %v383 = vld [vmem:[#allocation5 + $0xe0] sm:$0xf]
        %v384 = vld [vmem:[#allocation5 + $0xe4] sm:$0xf]
        %v385 = vld [vmem:[#allocation5 + $0xe8] sm:$0xf]
        %v386 = vld [vmem:[#allocation5 + $0xec] sm:$0xf]
        %v387 = vld [vmem:[#allocation5 + $0xf0] sm:$0xf]
        %v388 = vld [vmem:[#allocation5 + $0xf4] sm:$0xf]
        %v389 = vld [vmem:[#allocation5 + $0xf8] sm:$0xf]
        %v390 = vld [vmem:[#allocation5 + $0xfc] sm:$0xf]
        %v391 = vld [vmem:[#allocation5 + $0x100] sm:$0xf]
        %v392 = vld [vmem:[#allocation5 + $0x104] sm:$0xf]
        %v393 = vld [vmem:[#allocation5 + $0x108] sm:$0xf]
        %v394 = vld [vmem:[#allocation5 + $0x10c] sm:$0xf]
        %v395 = vld [vmem:[#allocation5 + $0x110] sm:$0xf]
        %v396 = vld [vmem:[#allocation5 + $0x114] sm:$0xf]
        %v397 = vld [vmem:[#allocation5 + $0x118] sm:$0xf]
        %v398 = vld [vmem:[#allocation5 + $0x11c] sm:$0xf]
        %v399 = vld [vmem:[#allocation5 + $0x120] sm:$0xf]
        %v400 = vld [vmem:[#allocation5 + $0x124] sm:$0xf]
        %v401 = vld [vmem:[#allocation5 + $0x128] sm:$0xf]
        %v402 = vld [vmem:[#allocation5 + $0x12c] sm:$0xf]
        %v403 = vld [vmem:[#allocation5 + $0x130] sm:$0xf]
        %v404 = vld [vmem:[#allocation5 + $0x134] sm:$0xf]
        %v405 = vld [vmem:[#allocation5 + $0x138] sm:$0xf]
        %v406 = vld [vmem:[#allocation5 + $0x13c] sm:$0xf]
        %v407 = vld [vmem:[#allocation5 + $0x140] sm:$0xf]
        %v408 = vld [vmem:[#allocation5 + $0x144] sm:$0xf]
        %v409 = vld [vmem:[#allocation5 + $0x148] sm:$0xf]
        %v410 = vld [vmem:[#allocation5 + $0x14c] sm:$0xf]
        %v411 = vld [vmem:[#allocation5 + $0x150] sm:$0xf]
        %v412 = vld [vmem:[#allocation5 + $0x154] sm:$0xf]
        %v413 = vld [vmem:[#allocation5 + $0x158] sm:$0xf]
        %v414 = vld [vmem:[#allocation5 + $0x15c] sm:$0xf]
        %v415 = vld [vmem:[#allocation5 + $0x160] sm:$0xf]
        %v416 = vld [vmem:[#allocation5 + $0x164] sm:$0xf]
        %v417 = vld [vmem:[#allocation5 + $0x168] sm:$0xf]
        %v418 = vld [vmem:[#allocation5 + $0x16c] sm:$0xf]
        %v419 = vld [vmem:[#allocation5 + $0x170] sm:$0xf]
        %v420 = vld [vmem:[#allocation5 + $0x174] sm:$0xf]
        %v421 = vld [vmem:[#allocation5 + $0x178] sm:$0xf]
        %v422 = vld [vmem:[#allocation5 + $0x17c] sm:$0xf]
        %v423 = vld [vmem:[#allocation5 + $0x180] sm:$0xf]
        %v424 = vld [vmem:[#allocation5 + $0x184] sm:$0xf]
        %v425 = vld [vmem:[#allocation5 + $0x188] sm:$0xf]
        %v426 = vld [vmem:[#allocation5 + $0x18c] sm:$0xf]
        %v427 = vld [vmem:[#allocation5 + $0x190] sm:$0xf]
        %v428 = vld [vmem:[#allocation5 + $0x194] sm:$0xf]
        %v429 = vld [vmem:[#allocation5 + $0x198] sm:$0xf]
        %v430 = vld [vmem:[#allocation5 + $0x19c] sm:$0xf]
        %v431 = vld [vmem:[#allocation5 + $0x1a0] sm:$0xf]
        %v432 = vld [vmem:[#allocation5 + $0x1a4] sm:$0xf]
        %v433 = vld [vmem:[#allocation5 + $0x1a8] sm:$0xf]
        %v434 = vld [vmem:[#allocation5 + $0x1ac] sm:$0xf]
        %v435 = vld [vmem:[#allocation5 + $0x1b0] sm:$0xf]
        %v436 = vld [vmem:[#allocation5 + $0x1b4] sm:$0xf]
        %v437 = vld [vmem:[#allocation5 + $0x1b8] sm:$0xf]
        %v438 = vld [vmem:[#allocation5 + $0x1bc] sm:$0xf]
        %v439 = vld [vmem:[#allocation5 + $0x1c0] sm:$0xf]
        %v440 = vld [vmem:[#allocation5 + $0x1c4] sm:$0xf]
        %v441 = vld [vmem:[#allocation5 + $0x1c8] sm:$0xf]
        %v442 = vld [vmem:[#allocation5 + $0x1cc] sm:$0xf]
        %v443 = vld [vmem:[#allocation5 + $0x1d0] sm:$0xf]
        %v444 = vld [vmem:[#allocation5 + $0x1d4] sm:$0xf]
        %v445 = vld [vmem:[#allocation5 + $0x1d8] sm:$0xf]
        %v446 = vld [vmem:[#allocation5 + $0x1dc] sm:$0xf]
        %v447 = vld [vmem:[#allocation5 + $0x1e0] sm:$0xf]
        %v448 = vld [vmem:[#allocation5 + $0x1e4] sm:$0xf]
        %v449 = vld [vmem:[#allocation5 + $0x1e8] sm:$0xf]
        %v450 = vld [vmem:[#allocation5 + $0x1ec] sm:$0xf]
        %v451 = vld [vmem:[#allocation5 + $0x1f0] sm:$0xf]
        %v452 = vld [vmem:[#allocation5 + $0x1f4] sm:$0xf]
        %v453 = vld [vmem:[#allocation5 + $0x1f8] sm:$0xf]
        %v454 = vld [vmem:[#allocation5 + $0x1fc] sm:$0xf]
        %v455 = vld [vmem:[#allocation5 + $0x200] sm:$0xf]
        %v456 = vld [vmem:[#allocation5 + $0x204] sm:$0xf]
        %v457 = vld [vmem:[#allocation5 + $0x208] sm:$0xf]
        %v458 = vld [vmem:[#allocation5 + $0x20c] sm:$0xf]
        %v459 = vld [vmem:[#allocation5 + $0x210] sm:$0xf]
        %v460 = vld [vmem:[#allocation5 + $0x214] sm:$0xf]
        %v461 = vld [vmem:[#allocation5 + $0x218] sm:$0xf]
        %v462 = vld [vmem:[#allocation5 + $0x21c] sm:$0xf]
        %v463 = vld [vmem:[#allocation5 + $0x220] sm:$0xf]
        %v464 = vld [vmem:[#allocation5 + $0x224] sm:$0xf]
        %v465 = vld [vmem:[#allocation5 + $0x228] sm:$0xf]
        %v466 = vld [vmem:[#allocation5 + $0x22c] sm:$0xf]
        %v467 = vld [vmem:[#allocation5 + $0x230] sm:$0xf]
        %v468 = vld [vmem:[#allocation5 + $0x234] sm:$0xf]
        %v469 = vld [vmem:[#allocation5 + $0x238] sm:$0xf]
        %v470 = vld [vmem:[#allocation5 + $0x23c] sm:$0xf]
        %v471 = vld [vmem:[#allocation5 + $0x240] sm:$0xf]
        %v472 = vld [vmem:[#allocation5 + $0x244] sm:$0xf]
        %v473 = vld [vmem:[#allocation5 + $0x248] sm:$0xf]
        %v474 = vld [vmem:[#allocation5 + $0x24c] sm:$0xf]
        %v475 = vld [vmem:[#allocation5 + $0x250] sm:$0xf]
        %v476 = vld [vmem:[#allocation5 + $0x254] sm:$0xf]
        %v477 = vld [vmem:[#allocation5 + $0x258] sm:$0xf]
        %v478 = vld [vmem:[#allocation5 + $0x25c] sm:$0xf]
        %v479 = vld [vmem:[#allocation5 + $0x260] sm:$0xf]
        %v480 = vld [vmem:[#allocation5 + $0x264] sm:$0xf]
        %v481 = vld [vmem:[#allocation5 + $0x268] sm:$0xf]
        %v482 = vld [vmem:[#allocation5 + $0x26c] sm:$0xf]
        %v483 = vld [vmem:[#allocation5 + $0x270] sm:$0xf]
        %v484 = vld [vmem:[#allocation5 + $0x274] sm:$0xf]
        %v485 = vld [vmem:[#allocation5 + $0x278] sm:$0xf]
        %v486 = vld [vmem:[#allocation5 + $0x27c] sm:$0xf]
        %v503 = vunpack.c.l.b16 %v327
        %v504 = vunpack.c.l.b16 %v328
        %v505 = vunpack.c.l.b16 %v329
        %v506 = vunpack.c.l.b16 %v330
        %v507 = vunpack.c.l.b16 %v331
        %v508 = vunpack.c.l.b16 %v332
        %v509 = vunpack.c.l.b16 %v333
        %v510 = vunpack.c.l.b16 %v334
        %v511 = vunpack.c.l.b16 %v335
        %v512 = vunpack.c.l.b16 %v336
        %v513 = vunpack.c.l.b16 %v337
        %v514 = vunpack.c.l.b16 %v338
        %v515 = vunpack.c.l.b16 %v339
        %v516 = vunpack.c.l.b16 %v340
        %v517 = vunpack.c.l.b16 %v341
        %v518 = vunpack.c.l.b16 %v342
        %v519 = vpack.c.b16 %v504, %v503
        %v520 = vpack.c.b16 %v506, %v505
        %v521 = vpack.c.b16 %v508, %v507
        %v522 = vpack.c.b16 %v510, %v509
        %v523 = vpack.c.b16 %v512, %v511
        %v524 = vpack.c.b16 %v514, %v513
        %v525 = vpack.c.b16 %v516, %v515
        %v526 = vpack.c.b16 %v518, %v517
        %535 = vmatprep.subr.bf16.mxu0 0
        %536 = vmatpush1.bf16.msra.mxu0 %v519
        %537 = vmatprep.subr.bf16.mxu0 0
        %538 = vmatpush1.bf16.msra.mxu0 %v520
        %539 = vmatprep.subr.bf16.mxu0 0
        %540 = vmatpush1.bf16.msra.mxu0 %v521
        %541 = vmatprep.subr.bf16.mxu0 0
        %542 = vmatpush1.bf16.msra.mxu0 %v522
        %543 = vmatprep.subr.bf16.mxu0 0
        %544 = vmatpush1.bf16.msra.mxu0 %v523
        %545 = vmatprep.subr.bf16.mxu0 0
        %546 = vmatpush1.bf16.msra.mxu0 %v524
        %547 = vmatprep.subr.bf16.mxu0 0
        %548 = vmatpush1.bf16.msra.mxu0 %v525
        %549 = vmatprep.subr.bf16.mxu0 0
        %550 = vmatpush1.bf16.msra.mxu0 %v526
        %551 = vmatprep.subr.bf16.mxu0 0
        %552 = vmatpush1.bf16.msra.mxu0 0
        %553 = vmatprep.subr.bf16.mxu0 0
        %554 = vmatpush1.bf16.msra.mxu0 0
        %555 = vmatprep.subr.bf16.mxu0 0
        %556 = vmatpush1.bf16.msra.mxu0 0
        %557 = vmatprep.subr.bf16.mxu0 0
        %558 = vmatpush1.bf16.msra.mxu0 0
        %559 = vmatprep.subr.bf16.mxu0 0
        %560 = vmatpush1.bf16.msra.mxu0 0
        %561 = vmatprep.subr.bf16.mxu0 0
        %562 = vmatpush1.bf16.msra.mxu0 0
        %563 = vmatprep.subr.bf16.mxu0 0
        %564 = vmatpush1.bf16.msra.mxu0 0
        %565 = vmatprep.subr.bf16.mxu0 0
        %566 = vmatpush1.bf16.msra.mxu0 0
        %567 = vmatprep.mubr.bf16.mxu0 0
        %568 = vmatmul.mubr.bf16.gmra.mrb[0].mxu0 %v326
        %v569 = vpop.f32.mrb[0].mxu0
        %v570 = vadd.f32 0.0, %v569
        %v571 = vpop.f32.mrb[0].mxu0
        %v572 = vpop.f32.mrb[0].mxu0
        %v573 = vpop.f32.mrb[0].mxu0
        %574 = vdwg.mxu0
        %v591 = vunpack.c.l.b16 %v343
        %v592 = vunpack.c.l.b16 %v344
        %v593 = vunpack.c.l.b16 %v345
        %v594 = vunpack.c.l.b16 %v346
        %v595 = vunpack.c.l.b16 %v347
        %v596 = vunpack.c.l.b16 %v348
        %v597 = vunpack.c.l.b16 %v349
        %v598 = vunpack.c.l.b16 %v350
        %v599 = vunpack.c.l.b16 %v351
        %v600 = vunpack.c.l.b16 %v352
        %v601 = vunpack.c.l.b16 %v353
        %v602 = vunpack.c.l.b16 %v354
        %v603 = vunpack.c.l.b16 %v355
        %v604 = vunpack.c.l.b16 %v356
        %v605 = vunpack.c.l.b16 %v357
        %v606 = vunpack.c.l.b16 %v358
        %v607 = vpack.c.b16 %v592, %v591
        %v608 = vpack.c.b16 %v594, %v593
        %v609 = vpack.c.b16 %v596, %v595
        %v610 = vpack.c.b16 %v598, %v597
        %v611 = vpack.c.b16 %v600, %v599
        %v612 = vpack.c.b16 %v602, %v601
        %v613 = vpack.c.b16 %v604, %v603
        %v614 = vpack.c.b16 %v606, %v605
        %623 = vmatprep.subr.bf16.mxu0 0
        %624 = vmatpush1.bf16.msra.mxu0 %v607
        %625 = vmatprep.subr.bf16.mxu0 0
        %626 = vmatpush1.bf16.msra.mxu0 %v608
        %627 = vmatprep.subr.bf16.mxu0 0
        %628 = vmatpush1.bf16.msra.mxu0 %v609
        %629 = vmatprep.subr.bf16.mxu0 0
        %630 = vmatpush1.bf16.msra.mxu0 %v610
        %631 = vmatprep.subr.bf16.mxu0 0
        %632 = vmatpush1.bf16.msra.mxu0 %v611
        %633 = vmatprep.subr.bf16.mxu0 0
        %634 = vmatpush1.bf16.msra.mxu0 %v612
        %635 = vmatprep.subr.bf16.mxu0 0
        %636 = vmatpush1.bf16.msra.mxu0 %v613
        %637 = vmatprep.subr.bf16.mxu0 0
        %638 = vmatpush1.bf16.msra.mxu0 %v614
        %639 = vmatprep.subr.bf16.mxu0 0
        %640 = vmatpush1.bf16.msra.mxu0 0
        %641 = vmatprep.subr.bf16.mxu0 0
        %642 = vmatpush1.bf16.msra.mxu0 0
        %643 = vmatprep.subr.bf16.mxu0 0
        %644 = vmatpush1.bf16.msra.mxu0 0
        %645 = vmatprep.subr.bf16.mxu0 0
        %646 = vmatpush1.bf16.msra.mxu0 0
        %647 = vmatprep.subr.bf16.mxu0 0
        %648 = vmatpush1.bf16.msra.mxu0 0
        %649 = vmatprep.subr.bf16.mxu0 0
        %650 = vmatpush1.bf16.msra.mxu0 0
        %651 = vmatprep.subr.bf16.mxu0 0
        %652 = vmatpush1.bf16.msra.mxu0 0
        %653 = vmatprep.subr.bf16.mxu0 0
        %654 = vmatpush1.bf16.msra.mxu0 0
        %655 = vmatprep.mubr.bf16.mxu0 0
        %656 = vmatmul.mubr.bf16.gmra.mrb[0].mxu0 %v326
        %v657 = vpop.f32.mrb[0].mxu0
        %v658 = vadd.f32 0.0, %v657
        %v659 = vpop.f32.mrb[0].mxu0
        %v660 = vpop.f32.mrb[0].mxu0
        %v661 = vpop.f32.mrb[0].mxu0
        %662 = vdwg.mxu0
        %v679 = vunpack.c.l.b16 %v359
        %v680 = vunpack.c.l.b16 %v360
        %v681 = vunpack.c.l.b16 %v361
        %v682 = vunpack.c.l.b16 %v362
        %v683 = vunpack.c.l.b16 %v363
        %v684 = vunpack.c.l.b16 %v364
        %v685 = vunpack.c.l.b16 %v365
        %v686 = vunpack.c.l.b16 %v366
        %v687 = vunpack.c.l.b16 %v367
        %v688 = vunpack.c.l.b16 %v368
        %v689 = vunpack.c.l.b16 %v369
        %v690 = vunpack.c.l.b16 %v370
        %v691 = vunpack.c.l.b16 %v371
        %v692 = vunpack.c.l.b16 %v372
        %v693 = vunpack.c.l.b16 %v373
        %v694 = vunpack.c.l.b16 %v374
        %v695 = vpack.c.b16 %v680, %v679
        %v696 = vpack.c.b16 %v682, %v681
        %v697 = vpack.c.b16 %v684, %v683
        %v698 = vpack.c.b16 %v686, %v685
        %v699 = vpack.c.b16 %v688, %v687
        %v700 = vpack.c.b16 %v690, %v689
        %v701 = vpack.c.b16 %v692, %v691
        %v702 = vpack.c.b16 %v694, %v693
        %711 = vmatprep.subr.bf16.mxu0 0
        %712 = vmatpush1.bf16.msra.mxu0 %v695
        %713 = vmatprep.subr.bf16.mxu0 0
        %714 = vmatpush1.bf16.msra.mxu0 %v696
        %715 = vmatprep.subr.bf16.mxu0 0
        %716 = vmatpush1.bf16.msra.mxu0 %v697
        %717 = vmatprep.subr.bf16.mxu0 0
        %718 = vmatpush1.bf16.msra.mxu0 %v698
        %719 = vmatprep.subr.bf16.mxu0 0
        %720 = vmatpush1.bf16.msra.mxu0 %v699
        %721 = vmatprep.subr.bf16.mxu0 0
        %722 = vmatpush1.bf16.msra.mxu0 %v700
        %723 = vmatprep.subr.bf16.mxu0 0
        %724 = vmatpush1.bf16.msra.mxu0 %v701
        %725 = vmatprep.subr.bf16.mxu0 0
        %726 = vmatpush1.bf16.msra.mxu0 %v702
        %727 = vmatprep.subr.bf16.mxu0 0
        %728 = vmatpush1.bf16.msra.mxu0 0
        %729 = vmatprep.subr.bf16.mxu0 0
        %730 = vmatpush1.bf16.msra.mxu0 0
        %731 = vmatprep.subr.bf16.mxu0 0
        %732 = vmatpush1.bf16.msra.mxu0 0
        %733 = vmatprep.subr.bf16.mxu0 0
        %734 = vmatpush1.bf16.msra.mxu0 0
        %735 = vmatprep.subr.bf16.mxu0 0
        %736 = vmatpush1.bf16.msra.mxu0 0
        %737 = vmatprep.subr.bf16.mxu0 0
        %738 = vmatpush1.bf16.msra.mxu0 0
        %739 = vmatprep.subr.bf16.mxu0 0
        %740 = vmatpush1.bf16.msra.mxu0 0
        %741 = vmatprep.subr.bf16.mxu0 0
        %742 = vmatpush1.bf16.msra.mxu0 0
        %743 = vmatprep.mubr.bf16.mxu0 0
        %744 = vmatmul.mubr.bf16.gmra.mrb[0].mxu0 %v326
        %v745 = vpop.f32.mrb[0].mxu0
        %v746 = vadd.f32 0.0, %v745
        %v747 = vpop.f32.mrb[0].mxu0
        %v748 = vpop.f32.mrb[0].mxu0
        %v749 = vpop.f32.mrb[0].mxu0
        %750 = vdwg.mxu0
        %v767 = vunpack.c.l.b16 %v375
        %v768 = vunpack.c.l.b16 %v376
        %v769 = vunpack.c.l.b16 %v377
        %v770 = vunpack.c.l.b16 %v378
        %v771 = vunpack.c.l.b16 %v379
        %v772 = vunpack.c.l.b16 %v380
        %v773 = vunpack.c.l.b16 %v381
        %v774 = vunpack.c.l.b16 %v382
        %v775 = vunpack.c.l.b16 %v383
        %v776 = vunpack.c.l.b16 %v384
        %v777 = vunpack.c.l.b16 %v385
        %v778 = vunpack.c.l.b16 %v386
        %v779 = vunpack.c.l.b16 %v387
        %v780 = vunpack.c.l.b16 %v388
        %v781 = vunpack.c.l.b16 %v389
        %v782 = vunpack.c.l.b16 %v390
        %v783 = vpack.c.b16 %v768, %v767
        %v784 = vpack.c.b16 %v770, %v769
        %v785 = vpack.c.b16 %v772, %v771
        %v786 = vpack.c.b16 %v774, %v773
        %v787 = vpack.c.b16 %v776, %v775
        %v788 = vpack.c.b16 %v778, %v777
        %v789 = vpack.c.b16 %v780, %v779
        %v790 = vpack.c.b16 %v782, %v781
        %799 = vmatprep.subr.bf16.mxu0 0
        %800 = vmatpush1.bf16.msra.mxu0 %v783
        %801 = vmatprep.subr.bf16.mxu0 0
        %802 = vmatpush1.bf16.msra.mxu0 %v784
        %803 = vmatprep.subr.bf16.mxu0 0
        %804 = vmatpush1.bf16.msra.mxu0 %v785
        %805 = vmatprep.subr.bf16.mxu0 0
        %806 = vmatpush1.bf16.msra.mxu0 %v786
        %807 = vmatprep.subr.bf16.mxu0 0
        %808 = vmatpush1.bf16.msra.mxu0 %v787
        %809 = vmatprep.subr.bf16.mxu0 0
        %810 = vmatpush1.bf16.msra.mxu0 %v788
        %811 = vmatprep.subr.bf16.mxu0 0
        %812 = vmatpush1.bf16.msra.mxu0 %v789
        %813 = vmatprep.subr.bf16.mxu0 0
        %814 = vmatpush1.bf16.msra.mxu0 %v790
        %815 = vmatprep.subr.bf16.mxu0 0
        %816 = vmatpush1.bf16.msra.mxu0 0
        %817 = vmatprep.subr.bf16.mxu0 0
        %818 = vmatpush1.bf16.msra.mxu0 0
        %819 = vmatprep.subr.bf16.mxu0 0
        %820 = vmatpush1.bf16.msra.mxu0 0
        %821 = vmatprep.subr.bf16.mxu0 0
        %822 = vmatpush1.bf16.msra.mxu0 0
        %823 = vmatprep.subr.bf16.mxu0 0
        %824 = vmatpush1.bf16.msra.mxu0 0
        %825 = vmatprep.subr.bf16.mxu0 0
        %826 = vmatpush1.bf16.msra.mxu0 0
        %827 = vmatprep.subr.bf16.mxu0 0
        %828 = vmatpush1.bf16.msra.mxu0 0
        %829 = vmatprep.subr.bf16.mxu0 0
        %830 = vmatpush1.bf16.msra.mxu0 0
        %831 = vmatprep.mubr.bf16.mxu0 0
        %832 = vmatmul.mubr.bf16.gmra.mrb[0].mxu0 %v326
        %v833 = vpop.f32.mrb[0].mxu0
        %v834 = vadd.f32 0.0, %v833
        %v835 = vpop.f32.mrb[0].mxu0
        %v836 = vpop.f32.mrb[0].mxu0
        %v837 = vpop.f32.mrb[0].mxu0
        %838 = vdwg.mxu0
        %v855 = vunpack.c.l.b16 %v391
        %v856 = vunpack.c.l.b16 %v392
        %v857 = vunpack.c.l.b16 %v393
        %v858 = vunpack.c.l.b16 %v394
        %v859 = vunpack.c.l.b16 %v395
        %v860 = vunpack.c.l.b16 %v396
        %v861 = vunpack.c.l.b16 %v397
        %v862 = vunpack.c.l.b16 %v398
        %v863 = vunpack.c.l.b16 %v399
        %v864 = vunpack.c.l.b16 %v400
        %v865 = vunpack.c.l.b16 %v401
        %v866 = vunpack.c.l.b16 %v402
        %v867 = vunpack.c.l.b16 %v403
        %v868 = vunpack.c.l.b16 %v404
        %v869 = vunpack.c.l.b16 %v405
        %v870 = vunpack.c.l.b16 %v406
        %v871 = vpack.c.b16 %v856, %v855
        %v872 = vpack.c.b16 %v858, %v857
        %v873 = vpack.c.b16 %v860, %v859
        %v874 = vpack.c.b16 %v862, %v861
        %v875 = vpack.c.b16 %v864, %v863
        %v876 = vpack.c.b16 %v866, %v865
        %v877 = vpack.c.b16 %v868, %v867
        %v878 = vpack.c.b16 %v870, %v869
        %887 = vmatprep.subr.bf16.mxu0 0
        %888 = vmatpush1.bf16.msra.mxu0 %v871
        %889 = vmatprep.subr.bf16.mxu0 0
        %890 = vmatpush1.bf16.msra.mxu0 %v872
        %891 = vmatprep.subr.bf16.mxu0 0
        %892 = vmatpush1.bf16.msra.mxu0 %v873
        %893 = vmatprep.subr.bf16.mxu0 0
        %894 = vmatpush1.bf16.msra.mxu0 %v874
        %895 = vmatprep.subr.bf16.mxu0 0
        %896 = vmatpush1.bf16.msra.mxu0 %v875
        %897 = vmatprep.subr.bf16.mxu0 0
        %898 = vmatpush1.bf16.msra.mxu0 %v876
        %899 = vmatprep.subr.bf16.mxu0 0
        %900 = vmatpush1.bf16.msra.mxu0 %v877
        %901 = vmatprep.subr.bf16.mxu0 0
        %902 = vmatpush1.bf16.msra.mxu0 %v878
        %903 = vmatprep.subr.bf16.mxu0 0
        %904 = vmatpush1.bf16.msra.mxu0 0
        %905 = vmatprep.subr.bf16.mxu0 0
        %906 = vmatpush1.bf16.msra.mxu0 0
        %907 = vmatprep.subr.bf16.mxu0 0
        %908 = vmatpush1.bf16.msra.mxu0 0
        %909 = vmatprep.subr.bf16.mxu0 0
        %910 = vmatpush1.bf16.msra.mxu0 0
        %911 = vmatprep.subr.bf16.mxu0 0
        %912 = vmatpush1.bf16.msra.mxu0 0
        %913 = vmatprep.subr.bf16.mxu0 0
        %914 = vmatpush1.bf16.msra.mxu0 0
        %915 = vmatprep.subr.bf16.mxu0 0
        %916 = vmatpush1.bf16.msra.mxu0 0
        %917 = vmatprep.subr.bf16.mxu0 0
        %918 = vmatpush1.bf16.msra.mxu0 0
        %919 = vmatprep.mubr.bf16.mxu0 0
        %920 = vmatmul.mubr.bf16.gmra.mrb[0].mxu0 %v326
        %v921 = vpop.f32.mrb[0].mxu0
        %v922 = vadd.f32 0.0, %v921
        %v923 = vpop.f32.mrb[0].mxu0
        %v924 = vpop.f32.mrb[0].mxu0
        %v925 = vpop.f32.mrb[0].mxu0
        %926 = vdwg.mxu0
        %v943 = vunpack.c.l.b16 %v407
        %v944 = vunpack.c.l.b16 %v408
        %v945 = vunpack.c.l.b16 %v409
        %v946 = vunpack.c.l.b16 %v410
        %v947 = vunpack.c.l.b16 %v411
        %v948 = vunpack.c.l.b16 %v412
        %v949 = vunpack.c.l.b16 %v413
        %v950 = vunpack.c.l.b16 %v414
        %v951 = vunpack.c.l.b16 %v415
        %v952 = vunpack.c.l.b16 %v416
        %v953 = vunpack.c.l.b16 %v417
        %v954 = vunpack.c.l.b16 %v418
        %v955 = vunpack.c.l.b16 %v419
        %v956 = vunpack.c.l.b16 %v420
        %v957 = vunpack.c.l.b16 %v421
        %v958 = vunpack.c.l.b16 %v422
        %v959 = vpack.c.b16 %v944, %v943
        %v960 = vpack.c.b16 %v946, %v945
        %v961 = vpack.c.b16 %v948, %v947
        %v962 = vpack.c.b16 %v950, %v949
        %v963 = vpack.c.b16 %v952, %v951
        %v964 = vpack.c.b16 %v954, %v953
        %v965 = vpack.c.b16 %v956, %v955
        %v966 = vpack.c.b16 %v958, %v957
        %975 = vmatprep.subr.bf16.mxu0 0
        %976 = vmatpush1.bf16.msra.mxu0 %v959
        %977 = vmatprep.subr.bf16.mxu0 0
        %978 = vmatpush1.bf16.msra.mxu0 %v960
        %979 = vmatprep.subr.bf16.mxu0 0
        %980 = vmatpush1.bf16.msra.mxu0 %v961
        %981 = vmatprep.subr.bf16.mxu0 0
        %982 = vmatpush1.bf16.msra.mxu0 %v962
        %983 = vmatprep.subr.bf16.mxu0 0
        %984 = vmatpush1.bf16.msra.mxu0 %v963
        %985 = vmatprep.subr.bf16.mxu0 0
        %986 = vmatpush1.bf16.msra.mxu0 %v964
        %987 = vmatprep.subr.bf16.mxu0 0
        %988 = vmatpush1.bf16.msra.mxu0 %v965
        %989 = vmatprep.subr.bf16.mxu0 0
        %990 = vmatpush1.bf16.msra.mxu0 %v966
        %991 = vmatprep.subr.bf16.mxu0 0
        %992 = vmatpush1.bf16.msra.mxu0 0
        %993 = vmatprep.subr.bf16.mxu0 0
        %994 = vmatpush1.bf16.msra.mxu0 0
        %995 = vmatprep.subr.bf16.mxu0 0
        %996 = vmatpush1.bf16.msra.mxu0 0
        %997 = vmatprep.subr.bf16.mxu0 0
        %998 = vmatpush1.bf16.msra.mxu0 0
        %999 = vmatprep.subr.bf16.mxu0 0
        %1000 = vmatpush1.bf16.msra.mxu0 0
        %1001 = vmatprep.subr.bf16.mxu0 0
        %1002 = vmatpush1.bf16.msra.mxu0 0
        %1003 = vmatprep.subr.bf16.mxu0 0
        %1004 = vmatpush1.bf16.msra.mxu0 0
        %1005 = vmatprep.subr.bf16.mxu0 0
        %1006 = vmatpush1.bf16.msra.mxu0 0
        %1007 = vmatprep.mubr.bf16.mxu0 0
        %1008 = vmatmul.mubr.bf16.gmra.mrb[0].mxu0 %v326
        %v1009 = vpop.f32.mrb[0].mxu0
        %v1010 = vadd.f32 0.0, %v1009
        %v1011 = vpop.f32.mrb[0].mxu0
        %v1012 = vpop.f32.mrb[0].mxu0
        %v1013 = vpop.f32.mrb[0].mxu0
        %1014 = vdwg.mxu0
        %v1031 = vunpack.c.l.b16 %v423
        %v1032 = vunpack.c.l.b16 %v424
        %v1033 = vunpack.c.l.b16 %v425
        %v1034 = vunpack.c.l.b16 %v426
        %v1035 = vunpack.c.l.b16 %v427
        %v1036 = vunpack.c.l.b16 %v428
        %v1037 = vunpack.c.l.b16 %v429
        %v1038 = vunpack.c.l.b16 %v430
        %v1039 = vunpack.c.l.b16 %v431
        %v1040 = vunpack.c.l.b16 %v432
        %v1041 = vunpack.c.l.b16 %v433
        %v1042 = vunpack.c.l.b16 %v434
        %v1043 = vunpack.c.l.b16 %v435
        %v1044 = vunpack.c.l.b16 %v436
        %v1045 = vunpack.c.l.b16 %v437
        %v1046 = vunpack.c.l.b16 %v438
        %v1047 = vpack.c.b16 %v1032, %v1031
        %v1048 = vpack.c.b16 %v1034, %v1033
        %v1049 = vpack.c.b16 %v1036, %v1035
        %v1050 = vpack.c.b16 %v1038, %v1037
        %v1051 = vpack.c.b16 %v1040, %v1039
        %v1052 = vpack.c.b16 %v1042, %v1041
        %v1053 = vpack.c.b16 %v1044, %v1043
        %v1054 = vpack.c.b16 %v1046, %v1045
        %1063 = vmatprep.subr.bf16.mxu0 0
        %1064 = vmatpush1.bf16.msra.mxu0 %v1047
        %1065 = vmatprep.subr.bf16.mxu0 0
        %1066 = vmatpush1.bf16.msra.mxu0 %v1048
        %1067 = vmatprep.subr.bf16.mxu0 0
        %1068 = vmatpush1.bf16.msra.mxu0 %v1049
        %1069 = vmatprep.subr.bf16.mxu0 0
        %1070 = vmatpush1.bf16.msra.mxu0 %v1050
        %1071 = vmatprep.subr.bf16.mxu0 0
        %1072 = vmatpush1.bf16.msra.mxu0 %v1051
        %1073 = vmatprep.subr.bf16.mxu0 0
        %1074 = vmatpush1.bf16.msra.mxu0 %v1052
        %1075 = vmatprep.subr.bf16.mxu0 0
        %1076 = vmatpush1.bf16.msra.mxu0 %v1053
        %1077 = vmatprep.subr.bf16.mxu0 0
        %1078 = vmatpush1.bf16.msra.mxu0 %v1054
        %1079 = vmatprep.subr.bf16.mxu0 0
        %1080 = vmatpush1.bf16.msra.mxu0 0
        %1081 = vmatprep.subr.bf16.mxu0 0
        %1082 = vmatpush1.bf16.msra.mxu0 0
        %1083 = vmatprep.subr.bf16.mxu0 0
        %1084 = vmatpush1.bf16.msra.mxu0 0
        %1085 = vmatprep.subr.bf16.mxu0 0
        %1086 = vmatpush1.bf16.msra.mxu0 0
        %1087 = vmatprep.subr.bf16.mxu0 0
        %1088 = vmatpush1.bf16.msra.mxu0 0
        %1089 = vmatprep.subr.bf16.mxu0 0
        %1090 = vmatpush1.bf16.msra.mxu0 0
        %1091 = vmatprep.subr.bf16.mxu0 0
        %1092 = vmatpush1.bf16.msra.mxu0 0
        %1093 = vmatprep.subr.bf16.mxu0 0
        %1094 = vmatpush1.bf16.msra.mxu0 0
        %1095 = vmatprep.mubr.bf16.mxu0 0
        %1096 = vmatmul.mubr.bf16.gmra.mrb[0].mxu0 %v326
        %v1097 = vpop.f32.mrb[0].mxu0
        %v1098 = vadd.f32 0.0, %v1097
        %v1099 = vpop.f32.mrb[0].mxu0
        %v1100 = vpop.f32.mrb[0].mxu0
        %v1101 = vpop.f32.mrb[0].mxu0
        %1102 = vdwg.mxu0
        %v1119 = vunpack.c.l.b16 %v439
        %v1120 = vunpack.c.l.b16 %v440
        %v1121 = vunpack.c.l.b16 %v441
        %v1122 = vunpack.c.l.b16 %v442
        %v1123 = vunpack.c.l.b16 %v443
        %v1124 = vunpack.c.l.b16 %v444
        %v1125 = vunpack.c.l.b16 %v445
        %v1126 = vunpack.c.l.b16 %v446
        %v1127 = vunpack.c.l.b16 %v447
        %v1128 = vunpack.c.l.b16 %v448
        %v1129 = vunpack.c.l.b16 %v449
        %v1130 = vunpack.c.l.b16 %v450
        %v1131 = vunpack.c.l.b16 %v451
        %v1132 = vunpack.c.l.b16 %v452
        %v1133 = vunpack.c.l.b16 %v453
        %v1134 = vunpack.c.l.b16 %v454
        %v1135 = vpack.c.b16 %v1120, %v1119
        %v1136 = vpack.c.b16 %v1122, %v1121
        %v1137 = vpack.c.b16 %v1124, %v1123
        %v1138 = vpack.c.b16 %v1126, %v1125
        %v1139 = vpack.c.b16 %v1128, %v1127
        %v1140 = vpack.c.b16 %v1130, %v1129
        %v1141 = vpack.c.b16 %v1132, %v1131
        %v1142 = vpack.c.b16 %v1134, %v1133
        %1151 = vmatprep.subr.bf16.mxu0 0
        %1152 = vmatpush1.bf16.msra.mxu0 %v1135
        %1153 = vmatprep.subr.bf16.mxu0 0
        %1154 = vmatpush1.bf16.msra.mxu0 %v1136
        %1155 = vmatprep.subr.bf16.mxu0 0
        %1156 = vmatpush1.bf16.msra.mxu0 %v1137
        %1157 = vmatprep.subr.bf16.mxu0 0
        %1158 = vmatpush1.bf16.msra.mxu0 %v1138
        %1159 = vmatprep.subr.bf16.mxu0 0
        %1160 = vmatpush1.bf16.msra.mxu0 %v1139
        %1161 = vmatprep.subr.bf16.mxu0 0
        %1162 = vmatpush1.bf16.msra.mxu0 %v1140
        %1163 = vmatprep.subr.bf16.mxu0 0
        %1164 = vmatpush1.bf16.msra.mxu0 %v1141
        %1165 = vmatprep.subr.bf16.mxu0 0
        %1166 = vmatpush1.bf16.msra.mxu0 %v1142
        %1167 = vmatprep.subr.bf16.mxu0 0
        %1168 = vmatpush1.bf16.msra.mxu0 0
        %1169 = vmatprep.subr.bf16.mxu0 0
        %1170 = vmatpush1.bf16.msra.mxu0 0
        %1171 = vmatprep.subr.bf16.mxu0 0
        %1172 = vmatpush1.bf16.msra.mxu0 0
        %1173 = vmatprep.subr.bf16.mxu0 0
        %1174 = vmatpush1.bf16.msra.mxu0 0
        %1175 = vmatprep.subr.bf16.mxu0 0
        %1176 = vmatpush1.bf16.msra.mxu0 0
        %1177 = vmatprep.subr.bf16.mxu0 0
        %1178 = vmatpush1.bf16.msra.mxu0 0
        %1179 = vmatprep.subr.bf16.mxu0 0
        %1180 = vmatpush1.bf16.msra.mxu0 0
        %1181 = vmatprep.subr.bf16.mxu0 0
        %1182 = vmatpush1.bf16.msra.mxu0 0
        %1183 = vmatprep.mubr.bf16.mxu0 0
        %1184 = vmatmul.mubr.bf16.gmra.mrb[0].mxu0 %v326
        %v1185 = vpop.f32.mrb[0].mxu0
        %v1186 = vadd.f32 0.0, %v1185
        %v1187 = vpop.f32.mrb[0].mxu0
        %v1188 = vpop.f32.mrb[0].mxu0
        %v1189 = vpop.f32.mrb[0].mxu0
        %1190 = vdwg.mxu0
        %v1207 = vunpack.c.l.b16 %v455
        %v1208 = vunpack.c.l.b16 %v456
        %v1209 = vunpack.c.l.b16 %v457
        %v1210 = vunpack.c.l.b16 %v458
        %v1211 = vunpack.c.l.b16 %v459
        %v1212 = vunpack.c.l.b16 %v460
        %v1213 = vunpack.c.l.b16 %v461
        %v1214 = vunpack.c.l.b16 %v462
        %v1215 = vunpack.c.l.b16 %v463
        %v1216 = vunpack.c.l.b16 %v464
        %v1217 = vunpack.c.l.b16 %v465
        %v1218 = vunpack.c.l.b16 %v466
        %v1219 = vunpack.c.l.b16 %v467
        %v1220 = vunpack.c.l.b16 %v468
        %v1221 = vunpack.c.l.b16 %v469
        %v1222 = vunpack.c.l.b16 %v470
        %v1223 = vpack.c.b16 %v1208, %v1207
        %v1224 = vpack.c.b16 %v1210, %v1209
        %v1225 = vpack.c.b16 %v1212, %v1211
        %v1226 = vpack.c.b16 %v1214, %v1213
        %v1227 = vpack.c.b16 %v1216, %v1215
        %v1228 = vpack.c.b16 %v1218, %v1217
        %v1229 = vpack.c.b16 %v1220, %v1219
        %v1230 = vpack.c.b16 %v1222, %v1221
        %1239 = vmatprep.subr.bf16.mxu0 0
        %1240 = vmatpush1.bf16.msra.mxu0 %v1223
        %1241 = vmatprep.subr.bf16.mxu0 0
        %1242 = vmatpush1.bf16.msra.mxu0 %v1224
        %1243 = vmatprep.subr.bf16.mxu0 0
        %1244 = vmatpush1.bf16.msra.mxu0 %v1225
        %1245 = vmatprep.subr.bf16.mxu0 0
        %1246 = vmatpush1.bf16.msra.mxu0 %v1226
        %1247 = vmatprep.subr.bf16.mxu0 0
        %1248 = vmatpush1.bf16.msra.mxu0 %v1227
        %1249 = vmatprep.subr.bf16.mxu0 0
        %1250 = vmatpush1.bf16.msra.mxu0 %v1228
        %1251 = vmatprep.subr.bf16.mxu0 0
        %1252 = vmatpush1.bf16.msra.mxu0 %v1229
        %1253 = vmatprep.subr.bf16.mxu0 0
        %1254 = vmatpush1.bf16.msra.mxu0 %v1230
        %1255 = vmatprep.subr.bf16.mxu0 0
        %1256 = vmatpush1.bf16.msra.mxu0 0
        %1257 = vmatprep.subr.bf16.mxu0 0
        %1258 = vmatpush1.bf16.msra.mxu0 0
        %1259 = vmatprep.subr.bf16.mxu0 0
        %1260 = vmatpush1.bf16.msra.mxu0 0
        %1261 = vmatprep.subr.bf16.mxu0 0
        %1262 = vmatpush1.bf16.msra.mxu0 0
        %1263 = vmatprep.subr.bf16.mxu0 0
        %1264 = vmatpush1.bf16.msra.mxu0 0
        %1265 = vmatprep.subr.bf16.mxu0 0
        %1266 = vmatpush1.bf16.msra.mxu0 0
        %1267 = vmatprep.subr.bf16.mxu0 0
        %1268 = vmatpush1.bf16.msra.mxu0 0
        %1269 = vmatprep.subr.bf16.mxu0 0
        %1270 = vmatpush1.bf16.msra.mxu0 0
        %1271 = vmatprep.mubr.bf16.mxu0 0
        %1272 = vmatmul.mubr.bf16.gmra.mrb[0].mxu0 %v326
        %v1273 = vpop.f32.mrb[0].mxu0
        %v1274 = vadd.f32 0.0, %v1273
        %v1275 = vpop.f32.mrb[0].mxu0
        %v1276 = vpop.f32.mrb[0].mxu0
        %v1277 = vpop.f32.mrb[0].mxu0
        %1278 = vdwg.mxu0
        %v1295 = vunpack.c.l.b16 %v471
        %v1296 = vunpack.c.l.b16 %v472
        %v1297 = vunpack.c.l.b16 %v473
        %v1298 = vunpack.c.l.b16 %v474
        %v1299 = vunpack.c.l.b16 %v475
        %v1300 = vunpack.c.l.b16 %v476
        %v1301 = vunpack.c.l.b16 %v477
        %v1302 = vunpack.c.l.b16 %v478
        %v1303 = vunpack.c.l.b16 %v479
        %v1304 = vunpack.c.l.b16 %v480
        %v1305 = vunpack.c.l.b16 %v481
        %v1306 = vunpack.c.l.b16 %v482
        %v1307 = vunpack.c.l.b16 %v483
        %v1308 = vunpack.c.l.b16 %v484
        %v1309 = vunpack.c.l.b16 %v485
        %v1310 = vunpack.c.l.b16 %v486
        %v1311 = vpack.c.b16 %v1296, %v1295
        %v1312 = vpack.c.b16 %v1298, %v1297
        %v1313 = vpack.c.b16 %v1300, %v1299
        %v1314 = vpack.c.b16 %v1302, %v1301
        %v1315 = vpack.c.b16 %v1304, %v1303
        %v1316 = vpack.c.b16 %v1306, %v1305
        %v1317 = vpack.c.b16 %v1308, %v1307
        %v1318 = vpack.c.b16 %v1310, %v1309
        %1327 = vmatprep.subr.bf16.mxu0 0
        %1328 = vmatpush1.bf16.msra.mxu0 %v1311
        %1329 = vmatprep.subr.bf16.mxu0 0
        %1330 = vmatpush1.bf16.msra.mxu0 %v1312
        %1331 = vmatprep.subr.bf16.mxu0 0
        %1332 = vmatpush1.bf16.msra.mxu0 %v1313
        %1333 = vmatprep.subr.bf16.mxu0 0
        %1334 = vmatpush1.bf16.msra.mxu0 %v1314
        %1335 = vmatprep.subr.bf16.mxu0 0
        %1336 = vmatpush1.bf16.msra.mxu0 %v1315
        %1337 = vmatprep.subr.bf16.mxu0 0
        %1338 = vmatpush1.bf16.msra.mxu0 %v1316
        %1339 = vmatprep.subr.bf16.mxu0 0
        %1340 = vmatpush1.bf16.msra.mxu0 %v1317
        %1341 = vmatprep.subr.bf16.mxu0 0
        %1342 = vmatpush1.bf16.msra.mxu0 %v1318
        %1343 = vmatprep.subr.bf16.mxu0 0
        %1344 = vmatpush1.bf16.msra.mxu0 0
        %1345 = vmatprep.subr.bf16.mxu0 0
        %1346 = vmatpush1.bf16.msra.mxu0 0
        %1347 = vmatprep.subr.bf16.mxu0 0
        %1348 = vmatpush1.bf16.msra.mxu0 0
        %1349 = vmatprep.subr.bf16.mxu0 0
        %1350 = vmatpush1.bf16.msra.mxu0 0
        %1351 = vmatprep.subr.bf16.mxu0 0
        %1352 = vmatpush1.bf16.msra.mxu0 0
        %1353 = vmatprep.subr.bf16.mxu0 0
        %1354 = vmatpush1.bf16.msra.mxu0 0
        %1355 = vmatprep.subr.bf16.mxu0 0
        %1356 = vmatpush1.bf16.msra.mxu0 0
        %1357 = vmatprep.subr.bf16.mxu0 0
        %1358 = vmatpush1.bf16.msra.mxu0 0
        %1359 = vmatprep.mubr.bf16.mxu0 0
        %1360 = vmatmul.mubr.bf16.gmra.mrb[0].mxu0 %v326
        %v1361 = vpop.f32.mrb[0].mxu0
        %v1362 = vadd.f32 0.0, %v1361
        %v1363 = vpop.f32.mrb[0].mxu0
        %v1364 = vpop.f32.mrb[0].mxu0
        %v1365 = vpop.f32.mrb[0].mxu0
        %1366 = vdwg.mxu0
        %v1367 = vld [vmem:[#allocation7] sm:$0xf]
        %v1368 = vld [vmem:[#allocation7 + $0x4] sm:$0xf]
        %v1369 = vld [vmem:[#allocation7 + $0x8] sm:$0xf]
        %v1370 = vld [vmem:[#allocation7 + $0xc] sm:$0xf]
        %v1371 = vld [vmem:[#allocation7 + $0x10] sm:$0xf]
        %v1372 = vld [vmem:[#allocation7 + $0x14] sm:$0xf]
        %v1373 = vld [vmem:[#allocation7 + $0x18] sm:$0xf]
        %v1374 = vld [vmem:[#allocation7 + $0x1c] sm:$0xf]
        %v1375 = vld [vmem:[#allocation7 + $0x20] sm:$0xf]
        %v1376 = vld [vmem:[#allocation7 + $0x24] sm:$0xf]
        %v1377 = vld [vmem:[#allocation7 + $0x28] sm:$0xf]
        %v1378 = vld [vmem:[#allocation7 + $0x2c] sm:$0xf]
        %v1379 = vld [vmem:[#allocation7 + $0x30] sm:$0xf]
        %v1380 = vld [vmem:[#allocation7 + $0x34] sm:$0xf]
        %v1381 = vld [vmem:[#allocation7 + $0x38] sm:$0xf]
        %v1382 = vld [vmem:[#allocation7 + $0x3c] sm:$0xf]
        %v1383 = vld [vmem:[#allocation7 + $0x40] sm:$0xf]
        %v1384 = vld [vmem:[#allocation7 + $0x44] sm:$0xf]
        %v1385 = vld [vmem:[#allocation7 + $0x48] sm:$0xf]
        %v1386 = vld [vmem:[#allocation7 + $0x4c] sm:$0xf]
        %v1387 = vld [vmem:[#allocation7 + $0x50] sm:$0xf]
        %v1388 = vld [vmem:[#allocation7 + $0x54] sm:$0xf]
        %v1389 = vld [vmem:[#allocation7 + $0x58] sm:$0xf]
        %v1390 = vld [vmem:[#allocation7 + $0x5c] sm:$0xf]
        %v1391 = vld [vmem:[#allocation7 + $0x60] sm:$0xf]
        %v1392 = vld [vmem:[#allocation7 + $0x64] sm:$0xf]
        %v1393 = vld [vmem:[#allocation7 + $0x68] sm:$0xf]
        %v1394 = vld [vmem:[#allocation7 + $0x6c] sm:$0xf]
        %v1395 = vld [vmem:[#allocation7 + $0x70] sm:$0xf]
        %v1396 = vld [vmem:[#allocation7 + $0x74] sm:$0xf]
        %v1397 = vld [vmem:[#allocation7 + $0x78] sm:$0xf]
        %v1398 = vld [vmem:[#allocation7 + $0x7c] sm:$0xf]
        %v1399 = vld [vmem:[#allocation7 + $0x80] sm:$0xf]
        %v1400 = vld [vmem:[#allocation7 + $0x84] sm:$0xf]
        %v1401 = vld [vmem:[#allocation7 + $0x88] sm:$0xf]
        %v1402 = vld [vmem:[#allocation7 + $0x8c] sm:$0xf]
        %v1403 = vld [vmem:[#allocation7 + $0x90] sm:$0xf]
        %v1404 = vld [vmem:[#allocation7 + $0x94] sm:$0xf]
        %v1405 = vld [vmem:[#allocation7 + $0x98] sm:$0xf]
        %v1406 = vld [vmem:[#allocation7 + $0x9c] sm:$0xf]
        %v1407 = vld [vmem:[#allocation7 + $0xa0] sm:$0xf]
        %v1408 = vld [vmem:[#allocation7 + $0xa4] sm:$0xf]
        %v1409 = vld [vmem:[#allocation7 + $0xa8] sm:$0xf]
        %v1410 = vld [vmem:[#allocation7 + $0xac] sm:$0xf]
        %v1411 = vld [vmem:[#allocation7 + $0xb0] sm:$0xf]
        %v1412 = vld [vmem:[#allocation7 + $0xb4] sm:$0xf]
        %v1413 = vld [vmem:[#allocation7 + $0xb8] sm:$0xf]
        %v1414 = vld [vmem:[#allocation7 + $0xbc] sm:$0xf]
        %v1415 = vld [vmem:[#allocation7 + $0xc0] sm:$0xf]
        %v1416 = vld [vmem:[#allocation7 + $0xc4] sm:$0xf]
        %v1417 = vld [vmem:[#allocation7 + $0xc8] sm:$0xf]
        %v1418 = vld [vmem:[#allocation7 + $0xcc] sm:$0xf]
        %v1419 = vld [vmem:[#allocation7 + $0xd0] sm:$0xf]
        %v1420 = vld [vmem:[#allocation7 + $0xd4] sm:$0xf]
        %v1421 = vld [vmem:[#allocation7 + $0xd8] sm:$0xf]
        %v1422 = vld [vmem:[#allocation7 + $0xdc] sm:$0xf]
        %v1423 = vld [vmem:[#allocation7 + $0xe0] sm:$0xf]
        %v1424 = vld [vmem:[#allocation7 + $0xe4] sm:$0xf]
        %v1425 = vld [vmem:[#allocation7 + $0xe8] sm:$0xf]
        %v1426 = vld [vmem:[#allocation7 + $0xec] sm:$0xf]
        %v1427 = vld [vmem:[#allocation7 + $0xf0] sm:$0xf]
        %v1428 = vld [vmem:[#allocation7 + $0xf4] sm:$0xf]
        %v1429 = vld [vmem:[#allocation7 + $0xf8] sm:$0xf]
        %v1430 = vld [vmem:[#allocation7 + $0xfc] sm:$0xf]
        %v1431 = vld [vmem:[#allocation7 + $0x100] sm:$0xf]
        %v1432 = vld [vmem:[#allocation7 + $0x104] sm:$0xf]
        %v1433 = vld [vmem:[#allocation7 + $0x108] sm:$0xf]
        %v1434 = vld [vmem:[#allocation7 + $0x10c] sm:$0xf]
        %v1435 = vld [vmem:[#allocation7 + $0x110] sm:$0xf]
        %v1436 = vld [vmem:[#allocation7 + $0x114] sm:$0xf]
        %v1437 = vld [vmem:[#allocation7 + $0x118] sm:$0xf]
        %v1438 = vld [vmem:[#allocation7 + $0x11c] sm:$0xf]
        %v1439 = vld [vmem:[#allocation7 + $0x120] sm:$0xf]
        %v1440 = vld [vmem:[#allocation7 + $0x124] sm:$0xf]
        %v1441 = vld [vmem:[#allocation7 + $0x128] sm:$0xf]
        %v1442 = vld [vmem:[#allocation7 + $0x12c] sm:$0xf]
        %v1443 = vld [vmem:[#allocation7 + $0x130] sm:$0xf]
        %v1444 = vld [vmem:[#allocation7 + $0x134] sm:$0xf]
        %v1445 = vld [vmem:[#allocation7 + $0x138] sm:$0xf]
        %v1446 = vld [vmem:[#allocation7 + $0x13c] sm:$0xf]
        %v1447 = vld [vmem:[#allocation7 + $0x140] sm:$0xf]
        %v1448 = vld [vmem:[#allocation7 + $0x144] sm:$0xf]
        %v1449 = vld [vmem:[#allocation7 + $0x148] sm:$0xf]
        %v1450 = vld [vmem:[#allocation7 + $0x14c] sm:$0xf]
        %v1451 = vld [vmem:[#allocation7 + $0x150] sm:$0xf]
        %v1452 = vld [vmem:[#allocation7 + $0x154] sm:$0xf]
        %v1453 = vld [vmem:[#allocation7 + $0x158] sm:$0xf]
        %v1454 = vld [vmem:[#allocation7 + $0x15c] sm:$0xf]
        %v1455 = vld [vmem:[#allocation7 + $0x160] sm:$0xf]
        %v1456 = vld [vmem:[#allocation7 + $0x164] sm:$0xf]
        %v1457 = vld [vmem:[#allocation7 + $0x168] sm:$0xf]
        %v1458 = vld [vmem:[#allocation7 + $0x16c] sm:$0xf]
        %v1459 = vld [vmem:[#allocation7 + $0x170] sm:$0xf]
        %v1460 = vld [vmem:[#allocation7 + $0x174] sm:$0xf]
        %v1461 = vld [vmem:[#allocation7 + $0x178] sm:$0xf]
        %v1462 = vld [vmem:[#allocation7 + $0x17c] sm:$0xf]
        %v1463 = vld [vmem:[#allocation7 + $0x180] sm:$0xf]
        %v1464 = vld [vmem:[#allocation7 + $0x184] sm:$0xf]
        %v1465 = vld [vmem:[#allocation7 + $0x188] sm:$0xf]
        %v1466 = vld [vmem:[#allocation7 + $0x18c] sm:$0xf]
        %v1467 = vld [vmem:[#allocation7 + $0x190] sm:$0xf]
        %v1468 = vld [vmem:[#allocation7 + $0x194] sm:$0xf]
        %v1469 = vld [vmem:[#allocation7 + $0x198] sm:$0xf]
        %v1470 = vld [vmem:[#allocation7 + $0x19c] sm:$0xf]
        %v1471 = vld [vmem:[#allocation7 + $0x1a0] sm:$0xf]
        %v1472 = vld [vmem:[#allocation7 + $0x1a4] sm:$0xf]
        %v1473 = vld [vmem:[#allocation7 + $0x1a8] sm:$0xf]
        %v1474 = vld [vmem:[#allocation7 + $0x1ac] sm:$0xf]
        %v1475 = vld [vmem:[#allocation7 + $0x1b0] sm:$0xf]
        %v1476 = vld [vmem:[#allocation7 + $0x1b4] sm:$0xf]
        %v1477 = vld [vmem:[#allocation7 + $0x1b8] sm:$0xf]
        %v1478 = vld [vmem:[#allocation7 + $0x1bc] sm:$0xf]
        %v1479 = vld [vmem:[#allocation7 + $0x1c0] sm:$0xf]
        %v1480 = vld [vmem:[#allocation7 + $0x1c4] sm:$0xf]
        %v1481 = vld [vmem:[#allocation7 + $0x1c8] sm:$0xf]
        %v1482 = vld [vmem:[#allocation7 + $0x1cc] sm:$0xf]
        %v1483 = vld [vmem:[#allocation7 + $0x1d0] sm:$0xf]
        %v1484 = vld [vmem:[#allocation7 + $0x1d4] sm:$0xf]
        %v1485 = vld [vmem:[#allocation7 + $0x1d8] sm:$0xf]
        %v1486 = vld [vmem:[#allocation7 + $0x1dc] sm:$0xf]
        %v1487 = vld [vmem:[#allocation7 + $0x1e0] sm:$0xf]
        %v1488 = vld [vmem:[#allocation7 + $0x1e4] sm:$0xf]
        %v1489 = vld [vmem:[#allocation7 + $0x1e8] sm:$0xf]
        %v1490 = vld [vmem:[#allocation7 + $0x1ec] sm:$0xf]
        %v1491 = vld [vmem:[#allocation7 + $0x1f0] sm:$0xf]
        %v1492 = vld [vmem:[#allocation7 + $0x1f4] sm:$0xf]
        %v1493 = vld [vmem:[#allocation7 + $0x1f8] sm:$0xf]
        %v1494 = vld [vmem:[#allocation7 + $0x1fc] sm:$0xf]
        %v1495 = vld [vmem:[#allocation7 + $0x200] sm:$0xf]
        %v1496 = vld [vmem:[#allocation7 + $0x204] sm:$0xf]
        %v1497 = vld [vmem:[#allocation7 + $0x208] sm:$0xf]
        %v1498 = vld [vmem:[#allocation7 + $0x20c] sm:$0xf]
        %v1499 = vld [vmem:[#allocation7 + $0x210] sm:$0xf]
        %v1500 = vld [vmem:[#allocation7 + $0x214] sm:$0xf]
        %v1501 = vld [vmem:[#allocation7 + $0x218] sm:$0xf]
        %v1502 = vld [vmem:[#allocation7 + $0x21c] sm:$0xf]
        %v1503 = vld [vmem:[#allocation7 + $0x220] sm:$0xf]
        %v1504 = vld [vmem:[#allocation7 + $0x224] sm:$0xf]
        %v1505 = vld [vmem:[#allocation7 + $0x228] sm:$0xf]
        %v1506 = vld [vmem:[#allocation7 + $0x22c] sm:$0xf]
        %v1507 = vld [vmem:[#allocation7 + $0x230] sm:$0xf]
        %v1508 = vld [vmem:[#allocation7 + $0x234] sm:$0xf]
        %v1509 = vld [vmem:[#allocation7 + $0x238] sm:$0xf]
        %v1510 = vld [vmem:[#allocation7 + $0x23c] sm:$0xf]
        %v1511 = vld [vmem:[#allocation7 + $0x240] sm:$0xf]
        %v1512 = vld [vmem:[#allocation7 + $0x244] sm:$0xf]
        %v1513 = vld [vmem:[#allocation7 + $0x248] sm:$0xf]
        %v1514 = vld [vmem:[#allocation7 + $0x24c] sm:$0xf]
        %v1515 = vld [vmem:[#allocation7 + $0x250] sm:$0xf]
        %v1516 = vld [vmem:[#allocation7 + $0x254] sm:$0xf]
        %v1517 = vld [vmem:[#allocation7 + $0x258] sm:$0xf]
        %v1518 = vld [vmem:[#allocation7 + $0x25c] sm:$0xf]
        %v1519 = vld [vmem:[#allocation7 + $0x260] sm:$0xf]
        %v1520 = vld [vmem:[#allocation7 + $0x264] sm:$0xf]
        %v1521 = vld [vmem:[#allocation7 + $0x268] sm:$0xf]
        %v1522 = vld [vmem:[#allocation7 + $0x26c] sm:$0xf]
        %v1523 = vld [vmem:[#allocation7 + $0x270] sm:$0xf]
        %v1524 = vld [vmem:[#allocation7 + $0x274] sm:$0xf]
        %v1525 = vld [vmem:[#allocation7 + $0x278] sm:$0xf]
        %v1526 = vld [vmem:[#allocation7 + $0x27c] sm:$0xf]
        %v1543 = vunpack.c.l.b16 %v1367
        %v1544 = vunpack.c.l.b16 %v1368
        %v1545 = vunpack.c.l.b16 %v1369
        %v1546 = vunpack.c.l.b16 %v1370
        %v1547 = vunpack.c.l.b16 %v1371
        %v1548 = vunpack.c.l.b16 %v1372
        %v1549 = vunpack.c.l.b16 %v1373
        %v1550 = vunpack.c.l.b16 %v1374
        %v1551 = vunpack.c.l.b16 %v1375
        %v1552 = vunpack.c.l.b16 %v1376
        %v1553 = vunpack.c.l.b16 %v1377
        %v1554 = vunpack.c.l.b16 %v1378
        %v1555 = vunpack.c.l.b16 %v1379
        %v1556 = vunpack.c.l.b16 %v1380
        %v1557 = vunpack.c.l.b16 %v1381
        %v1558 = vunpack.c.l.b16 %v1382
        %v1559 = vpack.c.b16 %v1544, %v1543
        %v1560 = vpack.c.b16 %v1546, %v1545
        %v1561 = vpack.c.b16 %v1548, %v1547
        %v1562 = vpack.c.b16 %v1550, %v1549
        %v1563 = vpack.c.b16 %v1552, %v1551
        %v1564 = vpack.c.b16 %v1554, %v1553
        %v1565 = vpack.c.b16 %v1556, %v1555
        %v1566 = vpack.c.b16 %v1558, %v1557
        %1575 = vmatprep.subr.bf16.mxu0 0
        %1576 = vmatpush1.bf16.msra.mxu0 %v1559
        %1577 = vmatprep.subr.bf16.mxu0 0
        %1578 = vmatpush1.bf16.msra.mxu0 %v1560
        %1579 = vmatprep.subr.bf16.mxu0 0
        %1580 = vmatpush1.bf16.msra.mxu0 %v1561
        %1581 = vmatprep.subr.bf16.mxu0 0
        %1582 = vmatpush1.bf16.msra.mxu0 %v1562
        %1583 = vmatprep.subr.bf16.mxu0 0
        %1584 = vmatpush1.bf16.msra.mxu0 %v1563
        %1585 = vmatprep.subr.bf16.mxu0 0
        %1586 = vmatpush1.bf16.msra.mxu0 %v1564
        %1587 = vmatprep.subr.bf16.mxu0 0
        %1588 = vmatpush1.bf16.msra.mxu0 %v1565
        %1589 = vmatprep.subr.bf16.mxu0 0
        %1590 = vmatpush1.bf16.msra.mxu0 %v1566
        %1591 = vmatprep.subr.bf16.mxu0 0
        %1592 = vmatpush1.bf16.msra.mxu0 0
        %1593 = vmatprep.subr.bf16.mxu0 0
        %1594 = vmatpush1.bf16.msra.mxu0 0
        %1595 = vmatprep.subr.bf16.mxu0 0
        %1596 = vmatpush1.bf16.msra.mxu0 0
        %1597 = vmatprep.subr.bf16.mxu0 0
        %1598 = vmatpush1.bf16.msra.mxu0 0
        %1599 = vmatprep.subr.bf16.mxu0 0
        %1600 = vmatpush1.bf16.msra.mxu0 0
        %1601 = vmatprep.subr.bf16.mxu0 0
        %1602 = vmatpush1.bf16.msra.mxu0 0
        %1603 = vmatprep.subr.bf16.mxu0 0
        %1604 = vmatpush1.bf16.msra.mxu0 0
        %1605 = vmatprep.subr.bf16.mxu0 0
        %1606 = vmatpush1.bf16.msra.mxu0 0
        %1607 = vmatprep.mubr.bf16.mxu0 0
        %1608 = vmatmul.mubr.bf16.gmra.mrb[0].mxu0 %v326
        %v1609 = vpop.f32.mrb[0].mxu0
        %v1610 = vadd.f32 0.0, %v1609
        %v1611 = vpop.f32.mrb[0].mxu0
        %v1612 = vpop.f32.mrb[0].mxu0
        %v1613 = vpop.f32.mrb[0].mxu0
        %1614 = vdwg.mxu0
        %v1631 = vunpack.c.l.b16 %v1383
        %v1632 = vunpack.c.l.b16 %v1384
        %v1633 = vunpack.c.l.b16 %v1385
        %v1634 = vunpack.c.l.b16 %v1386
        %v1635 = vunpack.c.l.b16 %v1387
        %v1636 = vunpack.c.l.b16 %v1388
        %v1637 = vunpack.c.l.b16 %v1389
        %v1638 = vunpack.c.l.b16 %v1390
        %v1639 = vunpack.c.l.b16 %v1391
        %v1640 = vunpack.c.l.b16 %v1392
        %v1641 = vunpack.c.l.b16 %v1393
        %v1642 = vunpack.c.l.b16 %v1394
        %v1643 = vunpack.c.l.b16 %v1395
        %v1644 = vunpack.c.l.b16 %v1396
        %v1645 = vunpack.c.l.b16 %v1397
        %v1646 = vunpack.c.l.b16 %v1398
        %v1647 = vpack.c.b16 %v1632, %v1631
        %v1648 = vpack.c.b16 %v1634, %v1633
        %v1649 = vpack.c.b16 %v1636, %v1635
        %v1650 = vpack.c.b16 %v1638, %v1637
        %v1651 = vpack.c.b16 %v1640, %v1639
        %v1652 = vpack.c.b16 %v1642, %v1641
        %v1653 = vpack.c.b16 %v1644, %v1643
        %v1654 = vpack.c.b16 %v1646, %v1645
        %1663 = vmatprep.subr.bf16.mxu0 0
        %1664 = vmatpush1.bf16.msra.mxu0 %v1647
        %1665 = vmatprep.subr.bf16.mxu0 0
        %1666 = vmatpush1.bf16.msra.mxu0 %v1648
        %1667 = vmatprep.subr.bf16.mxu0 0
        %1668 = vmatpush1.bf16.msra.mxu0 %v1649
        %1669 = vmatprep.subr.bf16.mxu0 0
        %1670 = vmatpush1.bf16.msra.mxu0 %v1650
        %1671 = vmatprep.subr.bf16.mxu0 0
        %1672 = vmatpush1.bf16.msra.mxu0 %v1651
        %1673 = vmatprep.subr.bf16.mxu0 0
        %1674 = vmatpush1.bf16.msra.mxu0 %v1652
        %1675 = vmatprep.subr.bf16.mxu0 0
        %1676 = vmatpush1.bf16.msra.mxu0 %v1653
        %1677 = vmatprep.subr.bf16.mxu0 0
        %1678 = vmatpush1.bf16.msra.mxu0 %v1654
        %1679 = vmatprep.subr.bf16.mxu0 0
        %1680 = vmatpush1.bf16.msra.mxu0 0
        %1681 = vmatprep.subr.bf16.mxu0 0
        %1682 = vmatpush1.bf16.msra.mxu0 0
        %1683 = vmatprep.subr.bf16.mxu0 0
        %1684 = vmatpush1.bf16.msra.mxu0 0
        %1685 = vmatprep.subr.bf16.mxu0 0
        %1686 = vmatpush1.bf16.msra.mxu0 0
        %1687 = vmatprep.subr.bf16.mxu0 0
        %1688 = vmatpush1.bf16.msra.mxu0 0
        %1689 = vmatprep.subr.bf16.mxu0 0
        %1690 = vmatpush1.bf16.msra.mxu0 0
        %1691 = vmatprep.subr.bf16.mxu0 0
        %1692 = vmatpush1.bf16.msra.mxu0 0
        %1693 = vmatprep.subr.bf16.mxu0 0
        %1694 = vmatpush1.bf16.msra.mxu0 0
        %1695 = vmatprep.mubr.bf16.mxu0 0
        %1696 = vmatmul.mubr.bf16.gmra.mrb[0].mxu0 %v326
        %v1697 = vpop.f32.mrb[0].mxu0
        %v1698 = vadd.f32 0.0, %v1697
        %v1699 = vpop.f32.mrb[0].mxu0
        %v1700 = vpop.f32.mrb[0].mxu0
        %v1701 = vpop.f32.mrb[0].mxu0
        %1702 = vdwg.mxu0
        %v1719 = vunpack.c.l.b16 %v1399
        %v1720 = vunpack.c.l.b16 %v1400
        %v1721 = vunpack.c.l.b16 %v1401
        %v1722 = vunpack.c.l.b16 %v1402
        %v1723 = vunpack.c.l.b16 %v1403
        %v1724 = vunpack.c.l.b16 %v1404
        %v1725 = vunpack.c.l.b16 %v1405
        %v1726 = vunpack.c.l.b16 %v1406
        %v1727 = vunpack.c.l.b16 %v1407
        %v1728 = vunpack.c.l.b16 %v1408
        %v1729 = vunpack.c.l.b16 %v1409
        %v1730 = vunpack.c.l.b16 %v1410
        %v1731 = vunpack.c.l.b16 %v1411
        %v1732 = vunpack.c.l.b16 %v1412
        %v1733 = vunpack.c.l.b16 %v1413
        %v1734 = vunpack.c.l.b16 %v1414
        %v1735 = vpack.c.b16 %v1720, %v1719
        %v1736 = vpack.c.b16 %v1722, %v1721
        %v1737 = vpack.c.b16 %v1724, %v1723
        %v1738 = vpack.c.b16 %v1726, %v1725
        %v1739 = vpack.c.b16 %v1728, %v1727
        %v1740 = vpack.c.b16 %v1730, %v1729
        %v1741 = vpack.c.b16 %v1732, %v1731
        %v1742 = vpack.c.b16 %v1734, %v1733
        %1751 = vmatprep.subr.bf16.mxu0 0
        %1752 = vmatpush1.bf16.msra.mxu0 %v1735
        %1753 = vmatprep.subr.bf16.mxu0 0
        %1754 = vmatpush1.bf16.msra.mxu0 %v1736
        %1755 = vmatprep.subr.bf16.mxu0 0
        %1756 = vmatpush1.bf16.msra.mxu0 %v1737
        %1757 = vmatprep.subr.bf16.mxu0 0
        %1758 = vmatpush1.bf16.msra.mxu0 %v1738
        %1759 = vmatprep.subr.bf16.mxu0 0
        %1760 = vmatpush1.bf16.msra.mxu0 %v1739
        %1761 = vmatprep.subr.bf16.mxu0 0
        %1762 = vmatpush1.bf16.msra.mxu0 %v1740
        %1763 = vmatprep.subr.bf16.mxu0 0
        %1764 = vmatpush1.bf16.msra.mxu0 %v1741
        %1765 = vmatprep.subr.bf16.mxu0 0
        %1766 = vmatpush1.bf16.msra.mxu0 %v1742
        %1767 = vmatprep.subr.bf16.mxu0 0
        %1768 = vmatpush1.bf16.msra.mxu0 0
        %1769 = vmatprep.subr.bf16.mxu0 0
        %1770 = vmatpush1.bf16.msra.mxu0 0
        %1771 = vmatprep.subr.bf16.mxu0 0
        %1772 = vmatpush1.bf16.msra.mxu0 0
        %1773 = vmatprep.subr.bf16.mxu0 0
        %1774 = vmatpush1.bf16.msra.mxu0 0
        %1775 = vmatprep.subr.bf16.mxu0 0
        %1776 = vmatpush1.bf16.msra.mxu0 0
        %1777 = vmatprep.subr.bf16.mxu0 0
        %1778 = vmatpush1.bf16.msra.mxu0 0
        %1779 = vmatprep.subr.bf16.mxu0 0
        %1780 = vmatpush1.bf16.msra.mxu0 0
        %1781 = vmatprep.subr.bf16.mxu0 0
        %1782 = vmatpush1.bf16.msra.mxu0 0
        %1783 = vmatprep.mubr.bf16.mxu0 0
        %1784 = vmatmul.mubr.bf16.gmra.mrb[0].mxu0 %v326
        %v1785 = vpop.f32.mrb[0].mxu0
        %v1786 = vadd.f32 0.0, %v1785
        %v1787 = vpop.f32.mrb[0].mxu0
        %v1788 = vpop.f32.mrb[0].mxu0
        %v1789 = vpop.f32.mrb[0].mxu0
        %1790 = vdwg.mxu0
        %v1807 = vunpack.c.l.b16 %v1415
        %v1808 = vunpack.c.l.b16 %v1416
        %v1809 = vunpack.c.l.b16 %v1417
        %v1810 = vunpack.c.l.b16 %v1418
        %v1811 = vunpack.c.l.b16 %v1419
        %v1812 = vunpack.c.l.b16 %v1420
        %v1813 = vunpack.c.l.b16 %v1421
        %v1814 = vunpack.c.l.b16 %v1422
        %v1815 = vunpack.c.l.b16 %v1423
        %v1816 = vunpack.c.l.b16 %v1424
        %v1817 = vunpack.c.l.b16 %v1425
        %v1818 = vunpack.c.l.b16 %v1426
        %v1819 = vunpack.c.l.b16 %v1427
        %v1820 = vunpack.c.l.b16 %v1428
        %v1821 = vunpack.c.l.b16 %v1429
        %v1822 = vunpack.c.l.b16 %v1430
        %v1823 = vpack.c.b16 %v1808, %v1807
        %v1824 = vpack.c.b16 %v1810, %v1809
        %v1825 = vpack.c.b16 %v1812, %v1811
        %v1826 = vpack.c.b16 %v1814, %v1813
        %v1827 = vpack.c.b16 %v1816, %v1815
        %v1828 = vpack.c.b16 %v1818, %v1817
        %v1829 = vpack.c.b16 %v1820, %v1819
        %v1830 = vpack.c.b16 %v1822, %v1821
        %1839 = vmatprep.subr.bf16.mxu0 0
        %1840 = vmatpush1.bf16.msra.mxu0 %v1823
        %1841 = vmatprep.subr.bf16.mxu0 0
        %1842 = vmatpush1.bf16.msra.mxu0 %v1824
        %1843 = vmatprep.subr.bf16.mxu0 0
        %1844 = vmatpush1.bf16.msra.mxu0 %v1825
        %1845 = vmatprep.subr.bf16.mxu0 0
        %1846 = vmatpush1.bf16.msra.mxu0 %v1826
        %1847 = vmatprep.subr.bf16.mxu0 0
        %1848 = vmatpush1.bf16.msra.mxu0 %v1827
        %1849 = vmatprep.subr.bf16.mxu0 0
        %1850 = vmatpush1.bf16.msra.mxu0 %v1828
        %1851 = vmatprep.subr.bf16.mxu0 0
        %1852 = vmatpush1.bf16.msra.mxu0 %v1829
        %1853 = vmatprep.subr.bf16.mxu0 0
        %1854 = vmatpush1.bf16.msra.mxu0 %v1830
        %1855 = vmatprep.subr.bf16.mxu0 0
        %1856 = vmatpush1.bf16.msra.mxu0 0
        %1857 = vmatprep.subr.bf16.mxu0 0
        %1858 = vmatpush1.bf16.msra.mxu0 0
        %1859 = vmatprep.subr.bf16.mxu0 0
        %1860 = vmatpush1.bf16.msra.mxu0 0
        %1861 = vmatprep.subr.bf16.mxu0 0
        %1862 = vmatpush1.bf16.msra.mxu0 0
        %1863 = vmatprep.subr.bf16.mxu0 0
        %1864 = vmatpush1.bf16.msra.mxu0 0
        %1865 = vmatprep.subr.bf16.mxu0 0
        %1866 = vmatpush1.bf16.msra.mxu0 0
        %1867 = vmatprep.subr.bf16.mxu0 0
        %1868 = vmatpush1.bf16.msra.mxu0 0
        %1869 = vmatprep.subr.bf16.mxu0 0
        %1870 = vmatpush1.bf16.msra.mxu0 0
        %1871 = vmatprep.mubr.bf16.mxu0 0
        %1872 = vmatmul.mubr.bf16.gmra.mrb[0].mxu0 %v326
        %v1873 = vpop.f32.mrb[0].mxu0
        %v1874 = vadd.f32 0.0, %v1873
        %v1875 = vpop.f32.mrb[0].mxu0
        %v1876 = vpop.f32.mrb[0].mxu0
        %v1877 = vpop.f32.mrb[0].mxu0
        %1878 = vdwg.mxu0
        %v1895 = vunpack.c.l.b16 %v1431
        %v1896 = vunpack.c.l.b16 %v1432
        %v1897 = vunpack.c.l.b16 %v1433
        %v1898 = vunpack.c.l.b16 %v1434
        %v1899 = vunpack.c.l.b16 %v1435
        %v1900 = vunpack.c.l.b16 %v1436
        %v1901 = vunpack.c.l.b16 %v1437
        %v1902 = vunpack.c.l.b16 %v1438
        %v1903 = vunpack.c.l.b16 %v1439
        %v1904 = vunpack.c.l.b16 %v1440
        %v1905 = vunpack.c.l.b16 %v1441
        %v1906 = vunpack.c.l.b16 %v1442
        %v1907 = vunpack.c.l.b16 %v1443
        %v1908 = vunpack.c.l.b16 %v1444
        %v1909 = vunpack.c.l.b16 %v1445
        %v1910 = vunpack.c.l.b16 %v1446
        %v1911 = vpack.c.b16 %v1896, %v1895
        %v1912 = vpack.c.b16 %v1898, %v1897
        %v1913 = vpack.c.b16 %v1900, %v1899
        %v1914 = vpack.c.b16 %v1902, %v1901
        %v1915 = vpack.c.b16 %v1904, %v1903
        %v1916 = vpack.c.b16 %v1906, %v1905
        %v1917 = vpack.c.b16 %v1908, %v1907
        %v1918 = vpack.c.b16 %v1910, %v1909
        %1927 = vmatprep.subr.bf16.mxu0 0
        %1928 = vmatpush1.bf16.msra.mxu0 %v1911
        %1929 = vmatprep.subr.bf16.mxu0 0
        %1930 = vmatpush1.bf16.msra.mxu0 %v1912
        %1931 = vmatprep.subr.bf16.mxu0 0
        %1932 = vmatpush1.bf16.msra.mxu0 %v1913
        %1933 = vmatprep.subr.bf16.mxu0 0
        %1934 = vmatpush1.bf16.msra.mxu0 %v1914
        %1935 = vmatprep.subr.bf16.mxu0 0
        %1936 = vmatpush1.bf16.msra.mxu0 %v1915
        %1937 = vmatprep.subr.bf16.mxu0 0
        %1938 = vmatpush1.bf16.msra.mxu0 %v1916
        %1939 = vmatprep.subr.bf16.mxu0 0
        %1940 = vmatpush1.bf16.msra.mxu0 %v1917
        %1941 = vmatprep.subr.bf16.mxu0 0
        %1942 = vmatpush1.bf16.msra.mxu0 %v1918
        %1943 = vmatprep.subr.bf16.mxu0 0
        %1944 = vmatpush1.bf16.msra.mxu0 0
        %1945 = vmatprep.subr.bf16.mxu0 0
        %1946 = vmatpush1.bf16.msra.mxu0 0
        %1947 = vmatprep.subr.bf16.mxu0 0
        %1948 = vmatpush1.bf16.msra.mxu0 0
        %1949 = vmatprep.subr.bf16.mxu0 0
        %1950 = vmatpush1.bf16.msra.mxu0 0
        %1951 = vmatprep.subr.bf16.mxu0 0
        %1952 = vmatpush1.bf16.msra.mxu0 0
        %1953 = vmatprep.subr.bf16.mxu0 0
        %1954 = vmatpush1.bf16.msra.mxu0 0
        %1955 = vmatprep.subr.bf16.mxu0 0
        %1956 = vmatpush1.bf16.msra.mxu0 0
        %1957 = vmatprep.subr.bf16.mxu0 0
        %1958 = vmatpush1.bf16.msra.mxu0 0
        %1959 = vmatprep.mubr.bf16.mxu0 0
        %1960 = vmatmul.mubr.bf16.gmra.mrb[0].mxu0 %v326
        %v1961 = vpop.f32.mrb[0].mxu0
        %v1962 = vadd.f32 0.0, %v1961
        %v1963 = vpop.f32.mrb[0].mxu0
        %v1964 = vpop.f32.mrb[0].mxu0
        %v1965 = vpop.f32.mrb[0].mxu0
        %1966 = vdwg.mxu0
        %v1983 = vunpack.c.l.b16 %v1447
        %v1984 = vunpack.c.l.b16 %v1448
        %v1985 = vunpack.c.l.b16 %v1449
        %v1986 = vunpack.c.l.b16 %v1450
        %v1987 = vunpack.c.l.b16 %v1451
        %v1988 = vunpack.c.l.b16 %v1452
        %v1989 = vunpack.c.l.b16 %v1453
        %v1990 = vunpack.c.l.b16 %v1454
        %v1991 = vunpack.c.l.b16 %v1455
        %v1992 = vunpack.c.l.b16 %v1456
        %v1993 = vunpack.c.l.b16 %v1457
        %v1994 = vunpack.c.l.b16 %v1458
        %v1995 = vunpack.c.l.b16 %v1459
        %v1996 = vunpack.c.l.b16 %v1460
        %v1997 = vunpack.c.l.b16 %v1461
        %v1998 = vunpack.c.l.b16 %v1462
        %v1999 = vpack.c.b16 %v1984, %v1983
        %v2000 = vpack.c.b16 %v1986, %v1985
        %v2001 = vpack.c.b16 %v1988, %v1987
        %v2002 = vpack.c.b16 %v1990, %v1989
        %v2003 = vpack.c.b16 %v1992, %v1991
        %v2004 = vpack.c.b16 %v1994, %v1993
        %v2005 = vpack.c.b16 %v1996, %v1995
        %v2006 = vpack.c.b16 %v1998, %v1997
        %2015 = vmatprep.subr.bf16.mxu0 0
        %2016 = vmatpush1.bf16.msra.mxu0 %v1999
        %2017 = vmatprep.subr.bf16.mxu0 0
        %2018 = vmatpush1.bf16.msra.mxu0 %v2000
        %2019 = vmatprep.subr.bf16.mxu0 0
        %2020 = vmatpush1.bf16.msra.mxu0 %v2001
        %2021 = vmatprep.subr.bf16.mxu0 0
        %2022 = vmatpush1.bf16.msra.mxu0 %v2002
        %2023 = vmatprep.subr.bf16.mxu0 0
        %2024 = vmatpush1.bf16.msra.mxu0 %v2003
        %2025 = vmatprep.subr.bf16.mxu0 0
        %2026 = vmatpush1.bf16.msra.mxu0 %v2004
        %2027 = vmatprep.subr.bf16.mxu0 0
        %2028 = vmatpush1.bf16.msra.mxu0 %v2005
        %2029 = vmatprep.subr.bf16.mxu0 0
        %2030 = vmatpush1.bf16.msra.mxu0 %v2006
        %2031 = vmatprep.subr.bf16.mxu0 0
        %2032 = vmatpush1.bf16.msra.mxu0 0
        %2033 = vmatprep.subr.bf16.mxu0 0
        %2034 = vmatpush1.bf16.msra.mxu0 0
        %2035 = vmatprep.subr.bf16.mxu0 0
        %2036 = vmatpush1.bf16.msra.mxu0 0
        %2037 = vmatprep.subr.bf16.mxu0 0
        %2038 = vmatpush1.bf16.msra.mxu0 0
        %2039 = vmatprep.subr.bf16.mxu0 0
        %2040 = vmatpush1.bf16.msra.mxu0 0
        %2041 = vmatprep.subr.bf16.mxu0 0
        %2042 = vmatpush1.bf16.msra.mxu0 0
        %2043 = vmatprep.subr.bf16.mxu0 0
        %2044 = vmatpush1.bf16.msra.mxu0 0
        %2045 = vmatprep.subr.bf16.mxu0 0
        %2046 = vmatpush1.bf16.msra.mxu0 0
        %2047 = vmatprep.mubr.bf16.mxu0 0
        %2048 = vmatmul.mubr.bf16.gmra.mrb[0].mxu0 %v326
        %v2049 = vpop.f32.mrb[0].mxu0
        %v2050 = vadd.f32 0.0, %v2049
        %v2051 = vpop.f32.mrb[0].mxu0
        %v2052 = vpop.f32.mrb[0].mxu0
        %v2053 = vpop.f32.mrb[0].mxu0
        %2054 = vdwg.mxu0
        %v2071 = vunpack.c.l.b16 %v1463
        %v2072 = vunpack.c.l.b16 %v1464
        %v2073 = vunpack.c.l.b16 %v1465
        %v2074 = vunpack.c.l.b16 %v1466
        %v2075 = vunpack.c.l.b16 %v1467
        %v2076 = vunpack.c.l.b16 %v1468
        %v2077 = vunpack.c.l.b16 %v1469
        %v2078 = vunpack.c.l.b16 %v1470
        %v2079 = vunpack.c.l.b16 %v1471
        %v2080 = vunpack.c.l.b16 %v1472
        %v2081 = vunpack.c.l.b16 %v1473
        %v2082 = vunpack.c.l.b16 %v1474
        %v2083 = vunpack.c.l.b16 %v1475
        %v2084 = vunpack.c.l.b16 %v1476
        %v2085 = vunpack.c.l.b16 %v1477
        %v2086 = vunpack.c.l.b16 %v1478
        %v2087 = vpack.c.b16 %v2072, %v2071
        %v2088 = vpack.c.b16 %v2074, %v2073
        %v2089 = vpack.c.b16 %v2076, %v2075
        %v2090 = vpack.c.b16 %v2078, %v2077
        %v2091 = vpack.c.b16 %v2080, %v2079
        %v2092 = vpack.c.b16 %v2082, %v2081
        %v2093 = vpack.c.b16 %v2084, %v2083
        %v2094 = vpack.c.b16 %v2086, %v2085
        %2103 = vmatprep.subr.bf16.mxu0 0
        %2104 = vmatpush1.bf16.msra.mxu0 %v2087
        %2105 = vmatprep.subr.bf16.mxu0 0
        %2106 = vmatpush1.bf16.msra.mxu0 %v2088
        %2107 = vmatprep.subr.bf16.mxu0 0
        %2108 = vmatpush1.bf16.msra.mxu0 %v2089
        %2109 = vmatprep.subr.bf16.mxu0 0
        %2110 = vmatpush1.bf16.msra.mxu0 %v2090
        %2111 = vmatprep.subr.bf16.mxu0 0
        %2112 = vmatpush1.bf16.msra.mxu0 %v2091
        %2113 = vmatprep.subr.bf16.mxu0 0
        %2114 = vmatpush1.bf16.msra.mxu0 %v2092
        %2115 = vmatprep.subr.bf16.mxu0 0
        %2116 = vmatpush1.bf16.msra.mxu0 %v2093
        %2117 = vmatprep.subr.bf16.mxu0 0
        %2118 = vmatpush1.bf16.msra.mxu0 %v2094
        %2119 = vmatprep.subr.bf16.mxu0 0
        %2120 = vmatpush1.bf16.msra.mxu0 0
        %2121 = vmatprep.subr.bf16.mxu0 0
        %2122 = vmatpush1.bf16.msra.mxu0 0
        %2123 = vmatprep.subr.bf16.mxu0 0
        %2124 = vmatpush1.bf16.msra.mxu0 0
        %2125 = vmatprep.subr.bf16.mxu0 0
        %2126 = vmatpush1.bf16.msra.mxu0 0
        %2127 = vmatprep.subr.bf16.mxu0 0
        %2128 = vmatpush1.bf16.msra.mxu0 0
        %2129 = vmatprep.subr.bf16.mxu0 0
        %2130 = vmatpush1.bf16.msra.mxu0 0
        %2131 = vmatprep.subr.bf16.mxu0 0
        %2132 = vmatpush1.bf16.msra.mxu0 0
        %2133 = vmatprep.subr.bf16.mxu0 0
        %2134 = vmatpush1.bf16.msra.mxu0 0
        %2135 = vmatprep.mubr.bf16.mxu0 0
        %2136 = vmatmul.mubr.bf16.gmra.mrb[0].mxu0 %v326
        %v2137 = vpop.f32.mrb[0].mxu0
        %v2138 = vadd.f32 0.0, %v2137
        %v2139 = vpop.f32.mrb[0].mxu0
        %v2140 = vpop.f32.mrb[0].mxu0
        %v2141 = vpop.f32.mrb[0].mxu0
        %2142 = vdwg.mxu0
        %v2159 = vunpack.c.l.b16 %v1479
        %v2160 = vunpack.c.l.b16 %v1480
        %v2161 = vunpack.c.l.b16 %v1481
        %v2162 = vunpack.c.l.b16 %v1482
        %v2163 = vunpack.c.l.b16 %v1483
        %v2164 = vunpack.c.l.b16 %v1484
        %v2165 = vunpack.c.l.b16 %v1485
        %v2166 = vunpack.c.l.b16 %v1486
        %v2167 = vunpack.c.l.b16 %v1487
        %v2168 = vunpack.c.l.b16 %v1488
        %v2169 = vunpack.c.l.b16 %v1489
        %v2170 = vunpack.c.l.b16 %v1490
        %v2171 = vunpack.c.l.b16 %v1491
        %v2172 = vunpack.c.l.b16 %v1492
        %v2173 = vunpack.c.l.b16 %v1493
        %v2174 = vunpack.c.l.b16 %v1494
        %v2175 = vpack.c.b16 %v2160, %v2159
        %v2176 = vpack.c.b16 %v2162, %v2161
        %v2177 = vpack.c.b16 %v2164, %v2163
        %v2178 = vpack.c.b16 %v2166, %v2165
        %v2179 = vpack.c.b16 %v2168, %v2167
        %v2180 = vpack.c.b16 %v2170, %v2169
        %v2181 = vpack.c.b16 %v2172, %v2171
        %v2182 = vpack.c.b16 %v2174, %v2173
        %2191 = vmatprep.subr.bf16.mxu0 0
        %2192 = vmatpush1.bf16.msra.mxu0 %v2175
        %2193 = vmatprep.subr.bf16.mxu0 0
        %2194 = vmatpush1.bf16.msra.mxu0 %v2176
        %2195 = vmatprep.subr.bf16.mxu0 0
        %2196 = vmatpush1.bf16.msra.mxu0 %v2177
        %2197 = vmatprep.subr.bf16.mxu0 0
        %2198 = vmatpush1.bf16.msra.mxu0 %v2178
        %2199 = vmatprep.subr.bf16.mxu0 0
        %2200 = vmatpush1.bf16.msra.mxu0 %v2179
        %2201 = vmatprep.subr.bf16.mxu0 0
        %2202 = vmatpush1.bf16.msra.mxu0 %v2180
        %2203 = vmatprep.subr.bf16.mxu0 0
        %2204 = vmatpush1.bf16.msra.mxu0 %v2181
        %2205 = vmatprep.subr.bf16.mxu0 0
        %2206 = vmatpush1.bf16.msra.mxu0 %v2182
        %2207 = vmatprep.subr.bf16.mxu0 0
        %2208 = vmatpush1.bf16.msra.mxu0 0
        %2209 = vmatprep.subr.bf16.mxu0 0
        %2210 = vmatpush1.bf16.msra.mxu0 0
        %2211 = vmatprep.subr.bf16.mxu0 0
        %2212 = vmatpush1.bf16.msra.mxu0 0
        %2213 = vmatprep.subr.bf16.mxu0 0
        %2214 = vmatpush1.bf16.msra.mxu0 0
        %2215 = vmatprep.subr.bf16.mxu0 0
        %2216 = vmatpush1.bf16.msra.mxu0 0
        %2217 = vmatprep.subr.bf16.mxu0 0
        %2218 = vmatpush1.bf16.msra.mxu0 0
        %2219 = vmatprep.subr.bf16.mxu0 0
        %2220 = vmatpush1.bf16.msra.mxu0 0
        %2221 = vmatprep.subr.bf16.mxu0 0
        %2222 = vmatpush1.bf16.msra.mxu0 0
        %2223 = vmatprep.mubr.bf16.mxu0 0
        %2224 = vmatmul.mubr.bf16.gmra.mrb[0].mxu0 %v326
        %v2225 = vpop.f32.mrb[0].mxu0
        %v2226 = vadd.f32 0.0, %v2225
        %v2227 = vpop.f32.mrb[0].mxu0
        %v2228 = vpop.f32.mrb[0].mxu0
        %v2229 = vpop.f32.mrb[0].mxu0
        %2230 = vdwg.mxu0
        %v2247 = vunpack.c.l.b16 %v1495
        %v2248 = vunpack.c.l.b16 %v1496
        %v2249 = vunpack.c.l.b16 %v1497
        %v2250 = vunpack.c.l.b16 %v1498
        %v2251 = vunpack.c.l.b16 %v1499
        %v2252 = vunpack.c.l.b16 %v1500
        %v2253 = vunpack.c.l.b16 %v1501
        %v2254 = vunpack.c.l.b16 %v1502
        %v2255 = vunpack.c.l.b16 %v1503
        %v2256 = vunpack.c.l.b16 %v1504
        %v2257 = vunpack.c.l.b16 %v1505
        %v2258 = vunpack.c.l.b16 %v1506
        %v2259 = vunpack.c.l.b16 %v1507
        %v2260 = vunpack.c.l.b16 %v1508
        %v2261 = vunpack.c.l.b16 %v1509
        %v2262 = vunpack.c.l.b16 %v1510
        %v2263 = vpack.c.b16 %v2248, %v2247
        %v2264 = vpack.c.b16 %v2250, %v2249
        %v2265 = vpack.c.b16 %v2252, %v2251
        %v2266 = vpack.c.b16 %v2254, %v2253
        %v2267 = vpack.c.b16 %v2256, %v2255
        %v2268 = vpack.c.b16 %v2258, %v2257
        %v2269 = vpack.c.b16 %v2260, %v2259
        %v2270 = vpack.c.b16 %v2262, %v2261
        %2279 = vmatprep.subr.bf16.mxu0 0
        %2280 = vmatpush1.bf16.msra.mxu0 %v2263
        %2281 = vmatprep.subr.bf16.mxu0 0
        %2282 = vmatpush1.bf16.msra.mxu0 %v2264
        %2283 = vmatprep.subr.bf16.mxu0 0
        %2284 = vmatpush1.bf16.msra.mxu0 %v2265
        %2285 = vmatprep.subr.bf16.mxu0 0
        %2286 = vmatpush1.bf16.msra.mxu0 %v2266
        %2287 = vmatprep.subr.bf16.mxu0 0
        %2288 = vmatpush1.bf16.msra.mxu0 %v2267
        %2289 = vmatprep.subr.bf16.mxu0 0
        %2290 = vmatpush1.bf16.msra.mxu0 %v2268
        %2291 = vmatprep.subr.bf16.mxu0 0
        %2292 = vmatpush1.bf16.msra.mxu0 %v2269
        %2293 = vmatprep.subr.bf16.mxu0 0
        %2294 = vmatpush1.bf16.msra.mxu0 %v2270
        %2295 = vmatprep.subr.bf16.mxu0 0
        %2296 = vmatpush1.bf16.msra.mxu0 0
        %2297 = vmatprep.subr.bf16.mxu0 0
        %2298 = vmatpush1.bf16.msra.mxu0 0
        %2299 = vmatprep.subr.bf16.mxu0 0
        %2300 = vmatpush1.bf16.msra.mxu0 0
        %2301 = vmatprep.subr.bf16.mxu0 0
        %2302 = vmatpush1.bf16.msra.mxu0 0
        %2303 = vmatprep.subr.bf16.mxu0 0
        %2304 = vmatpush1.bf16.msra.mxu0 0
        %2305 = vmatprep.subr.bf16.mxu0 0
        %2306 = vmatpush1.bf16.msra.mxu0 0
        %2307 = vmatprep.subr.bf16.mxu0 0
        %2308 = vmatpush1.bf16.msra.mxu0 0
        %2309 = vmatprep.subr.bf16.mxu0 0
        %2310 = vmatpush1.bf16.msra.mxu0 0
        %2311 = vmatprep.mubr.bf16.mxu0 0
        %2312 = vmatmul.mubr.bf16.gmra.mrb[0].mxu0 %v326
        %v2313 = vpop.f32.mrb[0].mxu0
        %v2314 = vadd.f32 0.0, %v2313
        %v2315 = vpop.f32.mrb[0].mxu0
        %v2316 = vpop.f32.mrb[0].mxu0
        %v2317 = vpop.f32.mrb[0].mxu0
        %2318 = vdwg.mxu0
        %v2335 = vunpack.c.l.b16 %v1511
        %v2336 = vunpack.c.l.b16 %v1512
        %v2337 = vunpack.c.l.b16 %v1513
        %v2338 = vunpack.c.l.b16 %v1514
        %v2339 = vunpack.c.l.b16 %v1515
        %v2340 = vunpack.c.l.b16 %v1516
        %v2341 = vunpack.c.l.b16 %v1517
        %v2342 = vunpack.c.l.b16 %v1518
        %v2343 = vunpack.c.l.b16 %v1519
        %v2344 = vunpack.c.l.b16 %v1520
        %v2345 = vunpack.c.l.b16 %v1521
        %v2346 = vunpack.c.l.b16 %v1522
        %v2347 = vunpack.c.l.b16 %v1523
        %v2348 = vunpack.c.l.b16 %v1524
        %v2349 = vunpack.c.l.b16 %v1525
        %v2350 = vunpack.c.l.b16 %v1526
        %v2351 = vpack.c.b16 %v2336, %v2335
        %v2352 = vpack.c.b16 %v2338, %v2337
        %v2353 = vpack.c.b16 %v2340, %v2339
        %v2354 = vpack.c.b16 %v2342, %v2341
        %v2355 = vpack.c.b16 %v2344, %v2343
        %v2356 = vpack.c.b16 %v2346, %v2345
        %v2357 = vpack.c.b16 %v2348, %v2347
        %v2358 = vpack.c.b16 %v2350, %v2349
        %2367 = vmatprep.subr.bf16.mxu0 0
        %2368 = vmatpush1.bf16.msra.mxu0 %v2351
        %2369 = vmatprep.subr.bf16.mxu0 0
        %2370 = vmatpush1.bf16.msra.mxu0 %v2352
        %2371 = vmatprep.subr.bf16.mxu0 0
        %2372 = vmatpush1.bf16.msra.mxu0 %v2353
        %2373 = vmatprep.subr.bf16.mxu0 0
        %2374 = vmatpush1.bf16.msra.mxu0 %v2354
        %2375 = vmatprep.subr.bf16.mxu0 0
        %2376 = vmatpush1.bf16.msra.mxu0 %v2355
        %2377 = vmatprep.subr.bf16.mxu0 0
        %2378 = vmatpush1.bf16.msra.mxu0 %v2356
        %2379 = vmatprep.subr.bf16.mxu0 0
        %2380 = vmatpush1.bf16.msra.mxu0 %v2357
        %2381 = vmatprep.subr.bf16.mxu0 0
        %2382 = vmatpush1.bf16.msra.mxu0 %v2358
        %2383 = vmatprep.subr.bf16.mxu0 0
        %2384 = vmatpush1.bf16.msra.mxu0 0
        %2385 = vmatprep.subr.bf16.mxu0 0
        %2386 = vmatpush1.bf16.msra.mxu0 0
        %2387 = vmatprep.subr.bf16.mxu0 0
        %2388 = vmatpush1.bf16.msra.mxu0 0
        %2389 = vmatprep.subr.bf16.mxu0 0
        %2390 = vmatpush1.bf16.msra.mxu0 0
        %2391 = vmatprep.subr.bf16.mxu0 0
        %2392 = vmatpush1.bf16.msra.mxu0 0
        %2393 = vmatprep.subr.bf16.mxu0 0
        %2394 = vmatpush1.bf16.msra.mxu0 0
        %2395 = vmatprep.subr.bf16.mxu0 0
        %2396 = vmatpush1.bf16.msra.mxu0 0
        %2397 = vmatprep.subr.bf16.mxu0 0
        %2398 = vmatpush1.bf16.msra.mxu0 0
        %2399 = vmatprep.mubr.bf16.mxu0 0
        %2400 = vmatmul.mubr.bf16.gmra.mrb[0].mxu0 %v326
        %v2401 = vpop.f32.mrb[0].mxu0
        %v2402 = vadd.f32 0.0, %v2401
        %v2403 = vpop.f32.mrb[0].mxu0
        %v2404 = vpop.f32.mrb[0].mxu0
        %v2405 = vpop.f32.mrb[0].mxu0
        %2406 = vdwg.mxu0
        %v2407 = vld [vmem:[#allocation8] sm:$0xf]
        %v2408 = vld [vmem:[#allocation8 + $0x4] sm:$0xf]
        %v2409 = vld [vmem:[#allocation8 + $0x8] sm:$0xf]
        %v2410 = vld [vmem:[#allocation8 + $0xc] sm:$0xf]
        %v2411 = vld [vmem:[#allocation8 + $0x10] sm:$0xf]
        %v2412 = vld [vmem:[#allocation8 + $0x14] sm:$0xf]
        %v2413 = vld [vmem:[#allocation8 + $0x18] sm:$0xf]
        %v2414 = vld [vmem:[#allocation8 + $0x1c] sm:$0xf]
        %v2415 = vld [vmem:[#allocation8 + $0x20] sm:$0xf]
        %v2416 = vld [vmem:[#allocation8 + $0x24] sm:$0xf]
        %v2417 = vld [vmem:[#allocation8 + $0x28] sm:$0xf]
        %v2418 = vld [vmem:[#allocation8 + $0x2c] sm:$0xf]
        %v2419 = vld [vmem:[#allocation8 + $0x30] sm:$0xf]
        %v2420 = vld [vmem:[#allocation8 + $0x34] sm:$0xf]
        %v2421 = vld [vmem:[#allocation8 + $0x38] sm:$0xf]
        %v2422 = vld [vmem:[#allocation8 + $0x3c] sm:$0xf]
        %v2423 = vld [vmem:[#allocation8 + $0x40] sm:$0xf]
        %v2424 = vld [vmem:[#allocation8 + $0x44] sm:$0xf]
        %v2425 = vld [vmem:[#allocation8 + $0x48] sm:$0xf]
        %v2426 = vld [vmem:[#allocation8 + $0x4c] sm:$0xf]
        %v2427 = vld [vmem:[#allocation8 + $0x50] sm:$0xf]
        %v2428 = vld [vmem:[#allocation8 + $0x54] sm:$0xf]
        %v2429 = vld [vmem:[#allocation8 + $0x58] sm:$0xf]
        %v2430 = vld [vmem:[#allocation8 + $0x5c] sm:$0xf]
        %v2431 = vld [vmem:[#allocation8 + $0x60] sm:$0xf]
        %v2432 = vld [vmem:[#allocation8 + $0x64] sm:$0xf]
        %v2433 = vld [vmem:[#allocation8 + $0x68] sm:$0xf]
        %v2434 = vld [vmem:[#allocation8 + $0x6c] sm:$0xf]
        %v2435 = vld [vmem:[#allocation8 + $0x70] sm:$0xf]
        %v2436 = vld [vmem:[#allocation8 + $0x74] sm:$0xf]
        %v2437 = vld [vmem:[#allocation8 + $0x78] sm:$0xf]
        %v2438 = vld [vmem:[#allocation8 + $0x7c] sm:$0xf]
        %v2439 = vld [vmem:[#allocation8 + $0x80] sm:$0xf]
        %v2440 = vld [vmem:[#allocation8 + $0x84] sm:$0xf]
        %v2441 = vld [vmem:[#allocation8 + $0x88] sm:$0xf]
        %v2442 = vld [vmem:[#allocation8 + $0x8c] sm:$0xf]
        %v2443 = vld [vmem:[#allocation8 + $0x90] sm:$0xf]
        %v2444 = vld [vmem:[#allocation8 + $0x94] sm:$0xf]
        %v2445 = vld [vmem:[#allocation8 + $0x98] sm:$0xf]
        %v2446 = vld [vmem:[#allocation8 + $0x9c] sm:$0xf]
        %v2447 = vld [vmem:[#allocation8 + $0xa0] sm:$0xf]
        %v2448 = vld [vmem:[#allocation8 + $0xa4] sm:$0xf]
        %v2449 = vld [vmem:[#allocation8 + $0xa8] sm:$0xf]
        %v2450 = vld [vmem:[#allocation8 + $0xac] sm:$0xf]
        %v2451 = vld [vmem:[#allocation8 + $0xb0] sm:$0xf]
        %v2452 = vld [vmem:[#allocation8 + $0xb4] sm:$0xf]
        %v2453 = vld [vmem:[#allocation8 + $0xb8] sm:$0xf]
        %v2454 = vld [vmem:[#allocation8 + $0xbc] sm:$0xf]
        %v2455 = vld [vmem:[#allocation8 + $0xc0] sm:$0xf]
        %v2456 = vld [vmem:[#allocation8 + $0xc4] sm:$0xf]
        %v2457 = vld [vmem:[#allocation8 + $0xc8] sm:$0xf]
        %v2458 = vld [vmem:[#allocation8 + $0xcc] sm:$0xf]
        %v2459 = vld [vmem:[#allocation8 + $0xd0] sm:$0xf]
        %v2460 = vld [vmem:[#allocation8 + $0xd4] sm:$0xf]
        %v2461 = vld [vmem:[#allocation8 + $0xd8] sm:$0xf]
        %v2462 = vld [vmem:[#allocation8 + $0xdc] sm:$0xf]
        %v2463 = vld [vmem:[#allocation8 + $0xe0] sm:$0xf]
        %v2464 = vld [vmem:[#allocation8 + $0xe4] sm:$0xf]
        %v2465 = vld [vmem:[#allocation8 + $0xe8] sm:$0xf]
        %v2466 = vld [vmem:[#allocation8 + $0xec] sm:$0xf]
        %v2467 = vld [vmem:[#allocation8 + $0xf0] sm:$0xf]
        %v2468 = vld [vmem:[#allocation8 + $0xf4] sm:$0xf]
        %v2469 = vld [vmem:[#allocation8 + $0xf8] sm:$0xf]
        %v2470 = vld [vmem:[#allocation8 + $0xfc] sm:$0xf]
        %v2471 = vld [vmem:[#allocation8 + $0x100] sm:$0xf]
        %v2472 = vld [vmem:[#allocation8 + $0x104] sm:$0xf]
        %v2473 = vld [vmem:[#allocation8 + $0x108] sm:$0xf]
        %v2474 = vld [vmem:[#allocation8 + $0x10c] sm:$0xf]
        %v2475 = vld [vmem:[#allocation8 + $0x110] sm:$0xf]
        %v2476 = vld [vmem:[#allocation8 + $0x114] sm:$0xf]
        %v2477 = vld [vmem:[#allocation8 + $0x118] sm:$0xf]
        %v2478 = vld [vmem:[#allocation8 + $0x11c] sm:$0xf]
        %v2479 = vld [vmem:[#allocation8 + $0x120] sm:$0xf]
        %v2480 = vld [vmem:[#allocation8 + $0x124] sm:$0xf]
        %v2481 = vld [vmem:[#allocation8 + $0x128] sm:$0xf]
        %v2482 = vld [vmem:[#allocation8 + $0x12c] sm:$0xf]
        %v2483 = vld [vmem:[#allocation8 + $0x130] sm:$0xf]
        %v2484 = vld [vmem:[#allocation8 + $0x134] sm:$0xf]
        %v2485 = vld [vmem:[#allocation8 + $0x138] sm:$0xf]
        %v2486 = vld [vmem:[#allocation8 + $0x13c] sm:$0xf]
        %v2487 = vld [vmem:[#allocation8 + $0x140] sm:$0xf]
        %v2488 = vld [vmem:[#allocation8 + $0x144] sm:$0xf]
        %v2489 = vld [vmem:[#allocation8 + $0x148] sm:$0xf]
        %v2490 = vld [vmem:[#allocation8 + $0x14c] sm:$0xf]
        %v2491 = vld [vmem:[#allocation8 + $0x150] sm:$0xf]
        %v2492 = vld [vmem:[#allocation8 + $0x154] sm:$0xf]
        %v2493 = vld [vmem:[#allocation8 + $0x158] sm:$0xf]
        %v2494 = vld [vmem:[#allocation8 + $0x15c] sm:$0xf]
        %v2495 = vld [vmem:[#allocation8 + $0x160] sm:$0xf]
        %v2496 = vld [vmem:[#allocation8 + $0x164] sm:$0xf]
        %v2497 = vld [vmem:[#allocation8 + $0x168] sm:$0xf]
        %v2498 = vld [vmem:[#allocation8 + $0x16c] sm:$0xf]
        %v2499 = vld [vmem:[#allocation8 + $0x170] sm:$0xf]
        %v2500 = vld [vmem:[#allocation8 + $0x174] sm:$0xf]
        %v2501 = vld [vmem:[#allocation8 + $0x178] sm:$0xf]
        %v2502 = vld [vmem:[#allocation8 + $0x17c] sm:$0xf]
        %v2503 = vld [vmem:[#allocation8 + $0x180] sm:$0xf]
        %v2504 = vld [vmem:[#allocation8 + $0x184] sm:$0xf]
        %v2505 = vld [vmem:[#allocation8 + $0x188] sm:$0xf]
        %v2506 = vld [vmem:[#allocation8 + $0x18c] sm:$0xf]
        %v2507 = vld [vmem:[#allocation8 + $0x190] sm:$0xf]
        %v2508 = vld [vmem:[#allocation8 + $0x194] sm:$0xf]
        %v2509 = vld [vmem:[#allocation8 + $0x198] sm:$0xf]
        %v2510 = vld [vmem:[#allocation8 + $0x19c] sm:$0xf]
        %v2511 = vld [vmem:[#allocation8 + $0x1a0] sm:$0xf]
        %v2512 = vld [vmem:[#allocation8 + $0x1a4] sm:$0xf]
        %v2513 = vld [vmem:[#allocation8 + $0x1a8] sm:$0xf]
        %v2514 = vld [vmem:[#allocation8 + $0x1ac] sm:$0xf]
        %v2515 = vld [vmem:[#allocation8 + $0x1b0] sm:$0xf]
        %v2516 = vld [vmem:[#allocation8 + $0x1b4] sm:$0xf]
        %v2517 = vld [vmem:[#allocation8 + $0x1b8] sm:$0xf]
        %v2518 = vld [vmem:[#allocation8 + $0x1bc] sm:$0xf]
        %v2519 = vld [vmem:[#allocation8 + $0x1c0] sm:$0xf]
        %v2520 = vld [vmem:[#allocation8 + $0x1c4] sm:$0xf]
        %v2521 = vld [vmem:[#allocation8 + $0x1c8] sm:$0xf]
        %v2522 = vld [vmem:[#allocation8 + $0x1cc] sm:$0xf]
        %v2523 = vld [vmem:[#allocation8 + $0x1d0] sm:$0xf]
        %v2524 = vld [vmem:[#allocation8 + $0x1d4] sm:$0xf]
        %v2525 = vld [vmem:[#allocation8 + $0x1d8] sm:$0xf]
        %v2526 = vld [vmem:[#allocation8 + $0x1dc] sm:$0xf]
        %v2527 = vld [vmem:[#allocation8 + $0x1e0] sm:$0xf]
        %v2528 = vld [vmem:[#allocation8 + $0x1e4] sm:$0xf]
        %v2529 = vld [vmem:[#allocation8 + $0x1e8] sm:$0xf]
        %v2530 = vld [vmem:[#allocation8 + $0x1ec] sm:$0xf]
        %v2531 = vld [vmem:[#allocation8 + $0x1f0] sm:$0xf]
        %v2532 = vld [vmem:[#allocation8 + $0x1f4] sm:$0xf]
        %v2533 = vld [vmem:[#allocation8 + $0x1f8] sm:$0xf]
        %v2534 = vld [vmem:[#allocation8 + $0x1fc] sm:$0xf]
        %v2535 = vld [vmem:[#allocation8 + $0x200] sm:$0xf]
        %v2536 = vld [vmem:[#allocation8 + $0x204] sm:$0xf]
        %v2537 = vld [vmem:[#allocation8 + $0x208] sm:$0xf]
        %v2538 = vld [vmem:[#allocation8 + $0x20c] sm:$0xf]
        %v2539 = vld [vmem:[#allocation8 + $0x210] sm:$0xf]
        %v2540 = vld [vmem:[#allocation8 + $0x214] sm:$0xf]
        %v2541 = vld [vmem:[#allocation8 + $0x218] sm:$0xf]
        %v2542 = vld [vmem:[#allocation8 + $0x21c] sm:$0xf]
        %v2543 = vld [vmem:[#allocation8 + $0x220] sm:$0xf]
        %v2544 = vld [vmem:[#allocation8 + $0x224] sm:$0xf]
        %v2545 = vld [vmem:[#allocation8 + $0x228] sm:$0xf]
        %v2546 = vld [vmem:[#allocation8 + $0x22c] sm:$0xf]
        %v2547 = vld [vmem:[#allocation8 + $0x230] sm:$0xf]
        %v2548 = vld [vmem:[#allocation8 + $0x234] sm:$0xf]
        %v2549 = vld [vmem:[#allocation8 + $0x238] sm:$0xf]
        %v2550 = vld [vmem:[#allocation8 + $0x23c] sm:$0xf]
        %v2551 = vld [vmem:[#allocation8 + $0x240] sm:$0xf]
        %v2552 = vld [vmem:[#allocation8 + $0x244] sm:$0xf]
        %v2553 = vld [vmem:[#allocation8 + $0x248] sm:$0xf]
        %v2554 = vld [vmem:[#allocation8 + $0x24c] sm:$0xf]
        %v2555 = vld [vmem:[#allocation8 + $0x250] sm:$0xf]
        %v2556 = vld [vmem:[#allocation8 + $0x254] sm:$0xf]
        %v2557 = vld [vmem:[#allocation8 + $0x258] sm:$0xf]
        %v2558 = vld [vmem:[#allocation8 + $0x25c] sm:$0xf]
        %v2559 = vld [vmem:[#allocation8 + $0x260] sm:$0xf]
        %v2560 = vld [vmem:[#allocation8 + $0x264] sm:$0xf]
        %v2561 = vld [vmem:[#allocation8 + $0x268] sm:$0xf]
        %v2562 = vld [vmem:[#allocation8 + $0x26c] sm:$0xf]
        %v2563 = vld [vmem:[#allocation8 + $0x270] sm:$0xf]
        %v2564 = vld [vmem:[#allocation8 + $0x274] sm:$0xf]
        %v2565 = vld [vmem:[#allocation8 + $0x278] sm:$0xf]
        %v2566 = vld [vmem:[#allocation8 + $0x27c] sm:$0xf]
        %v2583 = vunpack.c.l.b16 %v2407
        %v2584 = vunpack.c.l.b16 %v2408
        %v2585 = vunpack.c.l.b16 %v2409
        %v2586 = vunpack.c.l.b16 %v2410
        %v2587 = vunpack.c.l.b16 %v2411
        %v2588 = vunpack.c.l.b16 %v2412
        %v2589 = vunpack.c.l.b16 %v2413
        %v2590 = vunpack.c.l.b16 %v2414
        %v2591 = vunpack.c.l.b16 %v2415
        %v2592 = vunpack.c.l.b16 %v2416
        %v2593 = vunpack.c.l.b16 %v2417
        %v2594 = vunpack.c.l.b16 %v2418
        %v2595 = vunpack.c.l.b16 %v2419
        %v2596 = vunpack.c.l.b16 %v2420
        %v2597 = vunpack.c.l.b16 %v2421
        %v2598 = vunpack.c.l.b16 %v2422
        %v2599 = vpack.c.b16 %v2584, %v2583
        %v2600 = vpack.c.b16 %v2586, %v2585
        %v2601 = vpack.c.b16 %v2588, %v2587
        %v2602 = vpack.c.b16 %v2590, %v2589
        %v2603 = vpack.c.b16 %v2592, %v2591
        %v2604 = vpack.c.b16 %v2594, %v2593
        %v2605 = vpack.c.b16 %v2596, %v2595
        %v2606 = vpack.c.b16 %v2598, %v2597
        %2615 = vmatprep.subr.bf16.mxu0 0
        %2616 = vmatpush1.bf16.msra.mxu0 %v2599
        %2617 = vmatprep.subr.bf16.mxu0 0
        %2618 = vmatpush1.bf16.msra.mxu0 %v2600
        %2619 = vmatprep.subr.bf16.mxu0 0
        %2620 = vmatpush1.bf16.msra.mxu0 %v2601
        %2621 = vmatprep.subr.bf16.mxu0 0
        %2622 = vmatpush1.bf16.msra.mxu0 %v2602
        %2623 = vmatprep.subr.bf16.mxu0 0
        %2624 = vmatpush1.bf16.msra.mxu0 %v2603
        %2625 = vmatprep.subr.bf16.mxu0 0
        %2626 = vmatpush1.bf16.msra.mxu0 %v2604
        %2627 = vmatprep.subr.bf16.mxu0 0
        %2628 = vmatpush1.bf16.msra.mxu0 %v2605
        %2629 = vmatprep.subr.bf16.mxu0 0
        %2630 = vmatpush1.bf16.msra.mxu0 %v2606
        %2631 = vmatprep.subr.bf16.mxu0 0
        %2632 = vmatpush1.bf16.msra.mxu0 0
        %2633 = vmatprep.subr.bf16.mxu0 0
        %2634 = vmatpush1.bf16.msra.mxu0 0
        %2635 = vmatprep.subr.bf16.mxu0 0
        %2636 = vmatpush1.bf16.msra.mxu0 0
        %2637 = vmatprep.subr.bf16.mxu0 0
        %2638 = vmatpush1.bf16.msra.mxu0 0
        %2639 = vmatprep.subr.bf16.mxu0 0
        %2640 = vmatpush1.bf16.msra.mxu0 0
        %2641 = vmatprep.subr.bf16.mxu0 0
        %2642 = vmatpush1.bf16.msra.mxu0 0
        %2643 = vmatprep.subr.bf16.mxu0 0
        %2644 = vmatpush1.bf16.msra.mxu0 0
        %2645 = vmatprep.subr.bf16.mxu0 0
        %2646 = vmatpush1.bf16.msra.mxu0 0
        %2647 = vmatprep.mubr.bf16.mxu0 0
        %2648 = vmatmul.mubr.bf16.gmra.mrb[0].mxu0 %v326
        %v2649 = vpop.f32.mrb[0].mxu0
        %v2650 = vadd.f32 0.0, %v2649
        %v2651 = vpop.f32.mrb[0].mxu0
        %v2652 = vpop.f32.mrb[0].mxu0
        %v2653 = vpop.f32.mrb[0].mxu0
        %2654 = vdwg.mxu0
        %v2671 = vunpack.c.l.b16 %v2423
        %v2672 = vunpack.c.l.b16 %v2424
        %v2673 = vunpack.c.l.b16 %v2425
        %v2674 = vunpack.c.l.b16 %v2426
        %v2675 = vunpack.c.l.b16 %v2427
        %v2676 = vunpack.c.l.b16 %v2428
        %v2677 = vunpack.c.l.b16 %v2429
        %v2678 = vunpack.c.l.b16 %v2430
        %v2679 = vunpack.c.l.b16 %v2431
        %v2680 = vunpack.c.l.b16 %v2432
        %v2681 = vunpack.c.l.b16 %v2433
        %v2682 = vunpack.c.l.b16 %v2434
        %v2683 = vunpack.c.l.b16 %v2435
        %v2684 = vunpack.c.l.b16 %v2436
        %v2685 = vunpack.c.l.b16 %v2437
        %v2686 = vunpack.c.l.b16 %v2438
        %v2687 = vpack.c.b16 %v2672, %v2671
        %v2688 = vpack.c.b16 %v2674, %v2673
        %v2689 = vpack.c.b16 %v2676, %v2675
        %v2690 = vpack.c.b16 %v2678, %v2677
        %v2691 = vpack.c.b16 %v2680, %v2679
        %v2692 = vpack.c.b16 %v2682, %v2681
        %v2693 = vpack.c.b16 %v2684, %v2683
        %v2694 = vpack.c.b16 %v2686, %v2685
        %2703 = vmatprep.subr.bf16.mxu0 0
        %2704 = vmatpush1.bf16.msra.mxu0 %v2687
        %2705 = vmatprep.subr.bf16.mxu0 0
        %2706 = vmatpush1.bf16.msra.mxu0 %v2688
        %2707 = vmatprep.subr.bf16.mxu0 0
        %2708 = vmatpush1.bf16.msra.mxu0 %v2689
        %2709 = vmatprep.subr.bf16.mxu0 0
        %2710 = vmatpush1.bf16.msra.mxu0 %v2690
        %2711 = vmatprep.subr.bf16.mxu0 0
        %2712 = vmatpush1.bf16.msra.mxu0 %v2691
        %2713 = vmatprep.subr.bf16.mxu0 0
        %2714 = vmatpush1.bf16.msra.mxu0 %v2692
        %2715 = vmatprep.subr.bf16.mxu0 0
        %2716 = vmatpush1.bf16.msra.mxu0 %v2693
        %2717 = vmatprep.subr.bf16.mxu0 0
        %2718 = vmatpush1.bf16.msra.mxu0 %v2694
        %2719 = vmatprep.subr.bf16.mxu0 0
        %2720 = vmatpush1.bf16.msra.mxu0 0
        %2721 = vmatprep.subr.bf16.mxu0 0
        %2722 = vmatpush1.bf16.msra.mxu0 0
        %2723 = vmatprep.subr.bf16.mxu0 0
        %2724 = vmatpush1.bf16.msra.mxu0 0
        %2725 = vmatprep.subr.bf16.mxu0 0
        %2726 = vmatpush1.bf16.msra.mxu0 0
        %2727 = vmatprep.subr.bf16.mxu0 0
        %2728 = vmatpush1.bf16.msra.mxu0 0
        %2729 = vmatprep.subr.bf16.mxu0 0
        %2730 = vmatpush1.bf16.msra.mxu0 0
        %2731 = vmatprep.subr.bf16.mxu0 0
        %2732 = vmatpush1.bf16.msra.mxu0 0
        %2733 = vmatprep.subr.bf16.mxu0 0
        %2734 = vmatpush1.bf16.msra.mxu0 0
        %2735 = vmatprep.mubr.bf16.mxu0 0
        %2736 = vmatmul.mubr.bf16.gmra.mrb[0].mxu0 %v326
        %v2737 = vpop.f32.mrb[0].mxu0
        %v2738 = vadd.f32 0.0, %v2737
        %v2739 = vpop.f32.mrb[0].mxu0
        %v2740 = vpop.f32.mrb[0].mxu0
        %v2741 = vpop.f32.mrb[0].mxu0
        %2742 = vdwg.mxu0
        %v2759 = vunpack.c.l.b16 %v2439
        %v2760 = vunpack.c.l.b16 %v2440
        %v2761 = vunpack.c.l.b16 %v2441
        %v2762 = vunpack.c.l.b16 %v2442
        %v2763 = vunpack.c.l.b16 %v2443
        %v2764 = vunpack.c.l.b16 %v2444
        %v2765 = vunpack.c.l.b16 %v2445
        %v2766 = vunpack.c.l.b16 %v2446
        %v2767 = vunpack.c.l.b16 %v2447
        %v2768 = vunpack.c.l.b16 %v2448
        %v2769 = vunpack.c.l.b16 %v2449
        %v2770 = vunpack.c.l.b16 %v2450
        %v2771 = vunpack.c.l.b16 %v2451
        %v2772 = vunpack.c.l.b16 %v2452
        %v2773 = vunpack.c.l.b16 %v2453
        %v2774 = vunpack.c.l.b16 %v2454
        %v2775 = vpack.c.b16 %v2760, %v2759
        %v2776 = vpack.c.b16 %v2762, %v2761
        %v2777 = vpack.c.b16 %v2764, %v2763
        %v2778 = vpack.c.b16 %v2766, %v2765
        %v2779 = vpack.c.b16 %v2768, %v2767
        %v2780 = vpack.c.b16 %v2770, %v2769
        %v2781 = vpack.c.b16 %v2772, %v2771
        %v2782 = vpack.c.b16 %v2774, %v2773
        %2791 = vmatprep.subr.bf16.mxu0 0
        %2792 = vmatpush1.bf16.msra.mxu0 %v2775
        %2793 = vmatprep.subr.bf16.mxu0 0
        %2794 = vmatpush1.bf16.msra.mxu0 %v2776
        %2795 = vmatprep.subr.bf16.mxu0 0
        %2796 = vmatpush1.bf16.msra.mxu0 %v2777
        %2797 = vmatprep.subr.bf16.mxu0 0
        %2798 = vmatpush1.bf16.msra.mxu0 %v2778
        %2799 = vmatprep.subr.bf16.mxu0 0
        %2800 = vmatpush1.bf16.msra.mxu0 %v2779
        %2801 = vmatprep.subr.bf16.mxu0 0
        %2802 = vmatpush1.bf16.msra.mxu0 %v2780
        %2803 = vmatprep.subr.bf16.mxu0 0
        %2804 = vmatpush1.bf16.msra.mxu0 %v2781
        %2805 = vmatprep.subr.bf16.mxu0 0
        %2806 = vmatpush1.bf16.msra.mxu0 %v2782
        %2807 = vmatprep.subr.bf16.mxu0 0
        %2808 = vmatpush1.bf16.msra.mxu0 0
        %2809 = vmatprep.subr.bf16.mxu0 0
        %2810 = vmatpush1.bf16.msra.mxu0 0
        %2811 = vmatprep.subr.bf16.mxu0 0
        %2812 = vmatpush1.bf16.msra.mxu0 0
        %2813 = vmatprep.subr.bf16.mxu0 0
        %2814 = vmatpush1.bf16.msra.mxu0 0
        %2815 = vmatprep.subr.bf16.mxu0 0
        %2816 = vmatpush1.bf16.msra.mxu0 0
        %2817 = vmatprep.subr.bf16.mxu0 0
        %2818 = vmatpush1.bf16.msra.mxu0 0
        %2819 = vmatprep.subr.bf16.mxu0 0
        %2820 = vmatpush1.bf16.msra.mxu0 0
        %2821 = vmatprep.subr.bf16.mxu0 0
        %2822 = vmatpush1.bf16.msra.mxu0 0
        %2823 = vmatprep.mubr.bf16.mxu0 0
        %2824 = vmatmul.mubr.bf16.gmra.mrb[0].mxu0 %v326
        %v2825 = vpop.f32.mrb[0].mxu0
        %v2826 = vadd.f32 0.0, %v2825
        %v2827 = vpop.f32.mrb[0].mxu0
        %v2828 = vpop.f32.mrb[0].mxu0
        %v2829 = vpop.f32.mrb[0].mxu0
        %2830 = vdwg.mxu0
        %v2847 = vunpack.c.l.b16 %v2455
        %v2848 = vunpack.c.l.b16 %v2456
        %v2849 = vunpack.c.l.b16 %v2457
        %v2850 = vunpack.c.l.b16 %v2458
        %v2851 = vunpack.c.l.b16 %v2459
        %v2852 = vunpack.c.l.b16 %v2460
        %v2853 = vunpack.c.l.b16 %v2461
        %v2854 = vunpack.c.l.b16 %v2462
        %v2855 = vunpack.c.l.b16 %v2463
        %v2856 = vunpack.c.l.b16 %v2464
        %v2857 = vunpack.c.l.b16 %v2465
        %v2858 = vunpack.c.l.b16 %v2466
        %v2859 = vunpack.c.l.b16 %v2467
        %v2860 = vunpack.c.l.b16 %v2468
        %v2861 = vunpack.c.l.b16 %v2469
        %v2862 = vunpack.c.l.b16 %v2470
        %v2863 = vpack.c.b16 %v2848, %v2847
        %v2864 = vpack.c.b16 %v2850, %v2849
        %v2865 = vpack.c.b16 %v2852, %v2851
        %v2866 = vpack.c.b16 %v2854, %v2853
        %v2867 = vpack.c.b16 %v2856, %v2855
        %v2868 = vpack.c.b16 %v2858, %v2857
        %v2869 = vpack.c.b16 %v2860, %v2859
        %v2870 = vpack.c.b16 %v2862, %v2861
        %2879 = vmatprep.subr.bf16.mxu0 0
        %2880 = vmatpush1.bf16.msra.mxu0 %v2863
        %2881 = vmatprep.subr.bf16.mxu0 0
        %2882 = vmatpush1.bf16.msra.mxu0 %v2864
        %2883 = vmatprep.subr.bf16.mxu0 0
        %2884 = vmatpush1.bf16.msra.mxu0 %v2865
        %2885 = vmatprep.subr.bf16.mxu0 0
        %2886 = vmatpush1.bf16.msra.mxu0 %v2866
        %2887 = vmatprep.subr.bf16.mxu0 0
        %2888 = vmatpush1.bf16.msra.mxu0 %v2867
        %2889 = vmatprep.subr.bf16.mxu0 0
        %2890 = vmatpush1.bf16.msra.mxu0 %v2868
        %2891 = vmatprep.subr.bf16.mxu0 0
        %2892 = vmatpush1.bf16.msra.mxu0 %v2869
        %2893 = vmatprep.subr.bf16.mxu0 0
        %2894 = vmatpush1.bf16.msra.mxu0 %v2870
        %2895 = vmatprep.subr.bf16.mxu0 0
        %2896 = vmatpush1.bf16.msra.mxu0 0
        %2897 = vmatprep.subr.bf16.mxu0 0
        %2898 = vmatpush1.bf16.msra.mxu0 0
        %2899 = vmatprep.subr.bf16.mxu0 0
        %2900 = vmatpush1.bf16.msra.mxu0 0
        %2901 = vmatprep.subr.bf16.mxu0 0
        %2902 = vmatpush1.bf16.msra.mxu0 0
        %2903 = vmatprep.subr.bf16.mxu0 0
        %2904 = vmatpush1.bf16.msra.mxu0 0
        %2905 = vmatprep.subr.bf16.mxu0 0
        %2906 = vmatpush1.bf16.msra.mxu0 0
        %2907 = vmatprep.subr.bf16.mxu0 0
        %2908 = vmatpush1.bf16.msra.mxu0 0
        %2909 = vmatprep.subr.bf16.mxu0 0
        %2910 = vmatpush1.bf16.msra.mxu0 0
        %2911 = vmatprep.mubr.bf16.mxu0 0
        %2912 = vmatmul.mubr.bf16.gmra.mrb[0].mxu0 %v326
        %v2913 = vpop.f32.mrb[0].mxu0
        %v2914 = vadd.f32 0.0, %v2913
        %v2915 = vpop.f32.mrb[0].mxu0
        %v2916 = vpop.f32.mrb[0].mxu0
        %v2917 = vpop.f32.mrb[0].mxu0
        %2918 = vdwg.mxu0
        %v2935 = vunpack.c.l.b16 %v2471
        %v2936 = vunpack.c.l.b16 %v2472
        %v2937 = vunpack.c.l.b16 %v2473
        %v2938 = vunpack.c.l.b16 %v2474
        %v2939 = vunpack.c.l.b16 %v2475
        %v2940 = vunpack.c.l.b16 %v2476
        %v2941 = vunpack.c.l.b16 %v2477
        %v2942 = vunpack.c.l.b16 %v2478
        %v2943 = vunpack.c.l.b16 %v2479
        %v2944 = vunpack.c.l.b16 %v2480
        %v2945 = vunpack.c.l.b16 %v2481
        %v2946 = vunpack.c.l.b16 %v2482
        %v2947 = vunpack.c.l.b16 %v2483
        %v2948 = vunpack.c.l.b16 %v2484
        %v2949 = vunpack.c.l.b16 %v2485
        %v2950 = vunpack.c.l.b16 %v2486
        %v2951 = vpack.c.b16 %v2936, %v2935
        %v2952 = vpack.c.b16 %v2938, %v2937
        %v2953 = vpack.c.b16 %v2940, %v2939
        %v2954 = vpack.c.b16 %v2942, %v2941
        %v2955 = vpack.c.b16 %v2944, %v2943
        %v2956 = vpack.c.b16 %v2946, %v2945
        %v2957 = vpack.c.b16 %v2948, %v2947
        %v2958 = vpack.c.b16 %v2950, %v2949
        %2967 = vmatprep.subr.bf16.mxu0 0
        %2968 = vmatpush1.bf16.msra.mxu0 %v2951
        %2969 = vmatprep.subr.bf16.mxu0 0
        %2970 = vmatpush1.bf16.msra.mxu0 %v2952
        %2971 = vmatprep.subr.bf16.mxu0 0
        %2972 = vmatpush1.bf16.msra.mxu0 %v2953
        %2973 = vmatprep.subr.bf16.mxu0 0
        %2974 = vmatpush1.bf16.msra.mxu0 %v2954
        %2975 = vmatprep.subr.bf16.mxu0 0
        %2976 = vmatpush1.bf16.msra.mxu0 %v2955
        %2977 = vmatprep.subr.bf16.mxu0 0
        %2978 = vmatpush1.bf16.msra.mxu0 %v2956
        %2979 = vmatprep.subr.bf16.mxu0 0
        %2980 = vmatpush1.bf16.msra.mxu0 %v2957
        %2981 = vmatprep.subr.bf16.mxu0 0
        %2982 = vmatpush1.bf16.msra.mxu0 %v2958
        %2983 = vmatprep.subr.bf16.mxu0 0
        %2984 = vmatpush1.bf16.msra.mxu0 0
        %2985 = vmatprep.subr.bf16.mxu0 0
        %2986 = vmatpush1.bf16.msra.mxu0 0
        %2987 = vmatprep.subr.bf16.mxu0 0
        %2988 = vmatpush1.bf16.msra.mxu0 0
        %2989 = vmatprep.subr.bf16.mxu0 0
        %2990 = vmatpush1.bf16.msra.mxu0 0
        %2991 = vmatprep.subr.bf16.mxu0 0
        %2992 = vmatpush1.bf16.msra.mxu0 0
        %2993 = vmatprep.subr.bf16.mxu0 0
        %2994 = vmatpush1.bf16.msra.mxu0 0
        %2995 = vmatprep.subr.bf16.mxu0 0
        %2996 = vmatpush1.bf16.msra.mxu0 0
        %2997 = vmatprep.subr.bf16.mxu0 0
        %2998 = vmatpush1.bf16.msra.mxu0 0
        %2999 = vmatprep.mubr.bf16.mxu0 0
        %3000 = vmatmul.mubr.bf16.gmra.mrb[0].mxu0 %v326
        %v3001 = vpop.f32.mrb[0].mxu0
        %v3002 = vadd.f32 0.0, %v3001
        %v3003 = vpop.f32.mrb[0].mxu0
        %v3004 = vpop.f32.mrb[0].mxu0
        %v3005 = vpop.f32.mrb[0].mxu0
        %3006 = vdwg.mxu0
        %v3023 = vunpack.c.l.b16 %v2487
        %v3024 = vunpack.c.l.b16 %v2488
        %v3025 = vunpack.c.l.b16 %v2489
        %v3026 = vunpack.c.l.b16 %v2490
        %v3027 = vunpack.c.l.b16 %v2491
        %v3028 = vunpack.c.l.b16 %v2492
        %v3029 = vunpack.c.l.b16 %v2493
        %v3030 = vunpack.c.l.b16 %v2494
        %v3031 = vunpack.c.l.b16 %v2495
        %v3032 = vunpack.c.l.b16 %v2496
        %v3033 = vunpack.c.l.b16 %v2497
        %v3034 = vunpack.c.l.b16 %v2498
        %v3035 = vunpack.c.l.b16 %v2499
        %v3036 = vunpack.c.l.b16 %v2500
        %v3037 = vunpack.c.l.b16 %v2501
        %v3038 = vunpack.c.l.b16 %v2502
        %v3039 = vpack.c.b16 %v3024, %v3023
        %v3040 = vpack.c.b16 %v3026, %v3025
        %v3041 = vpack.c.b16 %v3028, %v3027
        %v3042 = vpack.c.b16 %v3030, %v3029
        %v3043 = vpack.c.b16 %v3032, %v3031
        %v3044 = vpack.c.b16 %v3034, %v3033
        %v3045 = vpack.c.b16 %v3036, %v3035
        %v3046 = vpack.c.b16 %v3038, %v3037
        %3055 = vmatprep.subr.bf16.mxu0 0
        %3056 = vmatpush1.bf16.msra.mxu0 %v3039
        %3057 = vmatprep.subr.bf16.mxu0 0
        %3058 = vmatpush1.bf16.msra.mxu0 %v3040
        %3059 = vmatprep.subr.bf16.mxu0 0
        %3060 = vmatpush1.bf16.msra.mxu0 %v3041
        %3061 = vmatprep.subr.bf16.mxu0 0
        %3062 = vmatpush1.bf16.msra.mxu0 %v3042
        %3063 = vmatprep.subr.bf16.mxu0 0
        %3064 = vmatpush1.bf16.msra.mxu0 %v3043
        %3065 = vmatprep.subr.bf16.mxu0 0
        %3066 = vmatpush1.bf16.msra.mxu0 %v3044
        %3067 = vmatprep.subr.bf16.mxu0 0
        %3068 = vmatpush1.bf16.msra.mxu0 %v3045
        %3069 = vmatprep.subr.bf16.mxu0 0
        %3070 = vmatpush1.bf16.msra.mxu0 %v3046
        %3071 = vmatprep.subr.bf16.mxu0 0
        %3072 = vmatpush1.bf16.msra.mxu0 0
        %3073 = vmatprep.subr.bf16.mxu0 0
        %3074 = vmatpush1.bf16.msra.mxu0 0
        %3075 = vmatprep.subr.bf16.mxu0 0
        %3076 = vmatpush1.bf16.msra.mxu0 0
        %3077 = vmatprep.subr.bf16.mxu0 0
        %3078 = vmatpush1.bf16.msra.mxu0 0
        %3079 = vmatprep.subr.bf16.mxu0 0
        %3080 = vmatpush1.bf16.msra.mxu0 0
        %3081 = vmatprep.subr.bf16.mxu0 0
        %3082 = vmatpush1.bf16.msra.mxu0 0
        %3083 = vmatprep.subr.bf16.mxu0 0
        %3084 = vmatpush1.bf16.msra.mxu0 0
        %3085 = vmatprep.subr.bf16.mxu0 0
        %3086 = vmatpush1.bf16.msra.mxu0 0
        %3087 = vmatprep.mubr.bf16.mxu0 0
        %3088 = vmatmul.mubr.bf16.gmra.mrb[0].mxu0 %v326
        %v3089 = vpop.f32.mrb[0].mxu0
        %v3090 = vadd.f32 0.0, %v3089
        %v3091 = vpop.f32.mrb[0].mxu0
        %v3092 = vpop.f32.mrb[0].mxu0
        %v3093 = vpop.f32.mrb[0].mxu0
        %3094 = vdwg.mxu0
        %v3111 = vunpack.c.l.b16 %v2503
        %v3112 = vunpack.c.l.b16 %v2504
        %v3113 = vunpack.c.l.b16 %v2505
        %v3114 = vunpack.c.l.b16 %v2506
        %v3115 = vunpack.c.l.b16 %v2507
        %v3116 = vunpack.c.l.b16 %v2508
        %v3117 = vunpack.c.l.b16 %v2509
        %v3118 = vunpack.c.l.b16 %v2510
        %v3119 = vunpack.c.l.b16 %v2511
        %v3120 = vunpack.c.l.b16 %v2512
        %v3121 = vunpack.c.l.b16 %v2513
        %v3122 = vunpack.c.l.b16 %v2514
        %v3123 = vunpack.c.l.b16 %v2515
        %v3124 = vunpack.c.l.b16 %v2516
        %v3125 = vunpack.c.l.b16 %v2517
        %v3126 = vunpack.c.l.b16 %v2518
        %v3127 = vpack.c.b16 %v3112, %v3111
        %v3128 = vpack.c.b16 %v3114, %v3113
        %v3129 = vpack.c.b16 %v3116, %v3115
        %v3130 = vpack.c.b16 %v3118, %v3117
        %v3131 = vpack.c.b16 %v3120, %v3119
        %v3132 = vpack.c.b16 %v3122, %v3121
        %v3133 = vpack.c.b16 %v3124, %v3123
        %v3134 = vpack.c.b16 %v3126, %v3125
        %3143 = vmatprep.subr.bf16.mxu0 0
        %3144 = vmatpush1.bf16.msra.mxu0 %v3127
        %3145 = vmatprep.subr.bf16.mxu0 0
        %3146 = vmatpush1.bf16.msra.mxu0 %v3128
        %3147 = vmatprep.subr.bf16.mxu0 0
        %3148 = vmatpush1.bf16.msra.mxu0 %v3129
        %3149 = vmatprep.subr.bf16.mxu0 0
        %3150 = vmatpush1.bf16.msra.mxu0 %v3130
        %3151 = vmatprep.subr.bf16.mxu0 0
        %3152 = vmatpush1.bf16.msra.mxu0 %v3131
        %3153 = vmatprep.subr.bf16.mxu0 0
        %3154 = vmatpush1.bf16.msra.mxu0 %v3132
        %3155 = vmatprep.subr.bf16.mxu0 0
        %3156 = vmatpush1.bf16.msra.mxu0 %v3133
        %3157 = vmatprep.subr.bf16.mxu0 0
        %3158 = vmatpush1.bf16.msra.mxu0 %v3134
        %3159 = vmatprep.subr.bf16.mxu0 0
        %3160 = vmatpush1.bf16.msra.mxu0 0
        %3161 = vmatprep.subr.bf16.mxu0 0
        %3162 = vmatpush1.bf16.msra.mxu0 0
        %3163 = vmatprep.subr.bf16.mxu0 0
        %3164 = vmatpush1.bf16.msra.mxu0 0
        %3165 = vmatprep.subr.bf16.mxu0 0
        %3166 = vmatpush1.bf16.msra.mxu0 0
        %3167 = vmatprep.subr.bf16.mxu0 0
        %3168 = vmatpush1.bf16.msra.mxu0 0
        %3169 = vmatprep.subr.bf16.mxu0 0
        %3170 = vmatpush1.bf16.msra.mxu0 0
        %3171 = vmatprep.subr.bf16.mxu0 0
        %3172 = vmatpush1.bf16.msra.mxu0 0
        %3173 = vmatprep.subr.bf16.mxu0 0
        %3174 = vmatpush1.bf16.msra.mxu0 0
        %3175 = vmatprep.mubr.bf16.mxu0 0
        %3176 = vmatmul.mubr.bf16.gmra.mrb[0].mxu0 %v326
        %v3177 = vpop.f32.mrb[0].mxu0
        %v3178 = vadd.f32 0.0, %v3177
        %v3179 = vpop.f32.mrb[0].mxu0
        %v3180 = vpop.f32.mrb[0].mxu0
        %v3181 = vpop.f32.mrb[0].mxu0
        %3182 = vdwg.mxu0
        %v3199 = vunpack.c.l.b16 %v2519
        %v3200 = vunpack.c.l.b16 %v2520
        %v3201 = vunpack.c.l.b16 %v2521
        %v3202 = vunpack.c.l.b16 %v2522
        %v3203 = vunpack.c.l.b16 %v2523
        %v3204 = vunpack.c.l.b16 %v2524
        %v3205 = vunpack.c.l.b16 %v2525
        %v3206 = vunpack.c.l.b16 %v2526
        %v3207 = vunpack.c.l.b16 %v2527
        %v3208 = vunpack.c.l.b16 %v2528
        %v3209 = vunpack.c.l.b16 %v2529
        %v3210 = vunpack.c.l.b16 %v2530
        %v3211 = vunpack.c.l.b16 %v2531
        %v3212 = vunpack.c.l.b16 %v2532
        %v3213 = vunpack.c.l.b16 %v2533
        %v3214 = vunpack.c.l.b16 %v2534
        %v3215 = vpack.c.b16 %v3200, %v3199
        %v3216 = vpack.c.b16 %v3202, %v3201
        %v3217 = vpack.c.b16 %v3204, %v3203
        %v3218 = vpack.c.b16 %v3206, %v3205
        %v3219 = vpack.c.b16 %v3208, %v3207
        %v3220 = vpack.c.b16 %v3210, %v3209
        %v3221 = vpack.c.b16 %v3212, %v3211
        %v3222 = vpack.c.b16 %v3214, %v3213
        %3231 = vmatprep.subr.bf16.mxu0 0
        %3232 = vmatpush1.bf16.msra.mxu0 %v3215
        %3233 = vmatprep.subr.bf16.mxu0 0
        %3234 = vmatpush1.bf16.msra.mxu0 %v3216
        %3235 = vmatprep.subr.bf16.mxu0 0
        %3236 = vmatpush1.bf16.msra.mxu0 %v3217
        %3237 = vmatprep.subr.bf16.mxu0 0
        %3238 = vmatpush1.bf16.msra.mxu0 %v3218
        %3239 = vmatprep.subr.bf16.mxu0 0
        %3240 = vmatpush1.bf16.msra.mxu0 %v3219
        %3241 = vmatprep.subr.bf16.mxu0 0
        %3242 = vmatpush1.bf16.msra.mxu0 %v3220
        %3243 = vmatprep.subr.bf16.mxu0 0
        %3244 = vmatpush1.bf16.msra.mxu0 %v3221
        %3245 = vmatprep.subr.bf16.mxu0 0
        %3246 = vmatpush1.bf16.msra.mxu0 %v3222
        %3247 = vmatprep.subr.bf16.mxu0 0
        %3248 = vmatpush1.bf16.msra.mxu0 0
        %3249 = vmatprep.subr.bf16.mxu0 0
        %3250 = vmatpush1.bf16.msra.mxu0 0
        %3251 = vmatprep.subr.bf16.mxu0 0
        %3252 = vmatpush1.bf16.msra.mxu0 0
        %3253 = vmatprep.subr.bf16.mxu0 0
        %3254 = vmatpush1.bf16.msra.mxu0 0
        %3255 = vmatprep.subr.bf16.mxu0 0
        %3256 = vmatpush1.bf16.msra.mxu0 0
        %3257 = vmatprep.subr.bf16.mxu0 0
        %3258 = vmatpush1.bf16.msra.mxu0 0
        %3259 = vmatprep.subr.bf16.mxu0 0
        %3260 = vmatpush1.bf16.msra.mxu0 0
        %3261 = vmatprep.subr.bf16.mxu0 0
        %3262 = vmatpush1.bf16.msra.mxu0 0
        %3263 = vmatprep.mubr.bf16.mxu0 0
        %3264 = vmatmul.mubr.bf16.gmra.mrb[0].mxu0 %v326
        %v3265 = vpop.f32.mrb[0].mxu0
        %v3266 = vadd.f32 0.0, %v3265
        %v3267 = vpop.f32.mrb[0].mxu0
        %v3268 = vpop.f32.mrb[0].mxu0
        %v3269 = vpop.f32.mrb[0].mxu0
        %3270 = vdwg.mxu0
        %v3287 = vunpack.c.l.b16 %v2535
        %v3288 = vunpack.c.l.b16 %v2536
        %v3289 = vunpack.c.l.b16 %v2537
        %v3290 = vunpack.c.l.b16 %v2538
        %v3291 = vunpack.c.l.b16 %v2539
        %v3292 = vunpack.c.l.b16 %v2540
        %v3293 = vunpack.c.l.b16 %v2541
        %v3294 = vunpack.c.l.b16 %v2542
        %v3295 = vunpack.c.l.b16 %v2543
        %v3296 = vunpack.c.l.b16 %v2544
        %v3297 = vunpack.c.l.b16 %v2545
        %v3298 = vunpack.c.l.b16 %v2546
        %v3299 = vunpack.c.l.b16 %v2547
        %v3300 = vunpack.c.l.b16 %v2548
        %v3301 = vunpack.c.l.b16 %v2549
        %v3302 = vunpack.c.l.b16 %v2550
        %v3303 = vpack.c.b16 %v3288, %v3287
        %v3304 = vpack.c.b16 %v3290, %v3289
        %v3305 = vpack.c.b16 %v3292, %v3291
        %v3306 = vpack.c.b16 %v3294, %v3293
        %v3307 = vpack.c.b16 %v3296, %v3295
        %v3308 = vpack.c.b16 %v3298, %v3297
        %v3309 = vpack.c.b16 %v3300, %v3299
        %v3310 = vpack.c.b16 %v3302, %v3301
        %3319 = vmatprep.subr.bf16.mxu0 0
        %3320 = vmatpush1.bf16.msra.mxu0 %v3303
        %3321 = vmatprep.subr.bf16.mxu0 0
        %3322 = vmatpush1.bf16.msra.mxu0 %v3304
        %3323 = vmatprep.subr.bf16.mxu0 0
        %3324 = vmatpush1.bf16.msra.mxu0 %v3305
        %3325 = vmatprep.subr.bf16.mxu0 0
        %3326 = vmatpush1.bf16.msra.mxu0 %v3306
        %3327 = vmatprep.subr.bf16.mxu0 0
        %3328 = vmatpush1.bf16.msra.mxu0 %v3307
        %3329 = vmatprep.subr.bf16.mxu0 0
        %3330 = vmatpush1.bf16.msra.mxu0 %v3308
        %3331 = vmatprep.subr.bf16.mxu0 0
        %3332 = vmatpush1.bf16.msra.mxu0 %v3309
        %3333 = vmatprep.subr.bf16.mxu0 0
        %3334 = vmatpush1.bf16.msra.mxu0 %v3310
        %3335 = vmatprep.subr.bf16.mxu0 0
        %3336 = vmatpush1.bf16.msra.mxu0 0
        %3337 = vmatprep.subr.bf16.mxu0 0
        %3338 = vmatpush1.bf16.msra.mxu0 0
        %3339 = vmatprep.subr.bf16.mxu0 0
        %3340 = vmatpush1.bf16.msra.mxu0 0
        %3341 = vmatprep.subr.bf16.mxu0 0
        %3342 = vmatpush1.bf16.msra.mxu0 0
        %3343 = vmatprep.subr.bf16.mxu0 0
        %3344 = vmatpush1.bf16.msra.mxu0 0
        %3345 = vmatprep.subr.bf16.mxu0 0
        %3346 = vmatpush1.bf16.msra.mxu0 0
        %3347 = vmatprep.subr.bf16.mxu0 0
        %3348 = vmatpush1.bf16.msra.mxu0 0
        %3349 = vmatprep.subr.bf16.mxu0 0
        %3350 = vmatpush1.bf16.msra.mxu0 0
        %3351 = vmatprep.mubr.bf16.mxu0 0
        %3352 = vmatmul.mubr.bf16.gmra.mrb[0].mxu0 %v326
        %v3353 = vpop.f32.mrb[0].mxu0
        %v3354 = vadd.f32 0.0, %v3353
        %v3355 = vpop.f32.mrb[0].mxu0
        %v3356 = vpop.f32.mrb[0].mxu0
        %v3357 = vpop.f32.mrb[0].mxu0
        %3358 = vdwg.mxu0
        %v3375 = vunpack.c.l.b16 %v2551
        %v3376 = vunpack.c.l.b16 %v2552
        %v3377 = vunpack.c.l.b16 %v2553
        %v3378 = vunpack.c.l.b16 %v2554
        %v3379 = vunpack.c.l.b16 %v2555
        %v3380 = vunpack.c.l.b16 %v2556
        %v3381 = vunpack.c.l.b16 %v2557
        %v3382 = vunpack.c.l.b16 %v2558
        %v3383 = vunpack.c.l.b16 %v2559
        %v3384 = vunpack.c.l.b16 %v2560
        %v3385 = vunpack.c.l.b16 %v2561
        %v3386 = vunpack.c.l.b16 %v2562
        %v3387 = vunpack.c.l.b16 %v2563
        %v3388 = vunpack.c.l.b16 %v2564
        %v3389 = vunpack.c.l.b16 %v2565
        %v3390 = vunpack.c.l.b16 %v2566
        %v3391 = vpack.c.b16 %v3376, %v3375
        %v3392 = vpack.c.b16 %v3378, %v3377
        %v3393 = vpack.c.b16 %v3380, %v3379
        %v3394 = vpack.c.b16 %v3382, %v3381
        %v3395 = vpack.c.b16 %v3384, %v3383
        %v3396 = vpack.c.b16 %v3386, %v3385
        %v3397 = vpack.c.b16 %v3388, %v3387
        %v3398 = vpack.c.b16 %v3390, %v3389
        %3407 = vmatprep.subr.bf16.mxu0 0
        %3408 = vmatpush1.bf16.msra.mxu0 %v3391
        %3409 = vmatprep.subr.bf16.mxu0 0
        %3410 = vmatpush1.bf16.msra.mxu0 %v3392
        %3411 = vmatprep.subr.bf16.mxu0 0
        %3412 = vmatpush1.bf16.msra.mxu0 %v3393
        %3413 = vmatprep.subr.bf16.mxu0 0
        %3414 = vmatpush1.bf16.msra.mxu0 %v3394
        %3415 = vmatprep.subr.bf16.mxu0 0
        %3416 = vmatpush1.bf16.msra.mxu0 %v3395
        %3417 = vmatprep.subr.bf16.mxu0 0
        %3418 = vmatpush1.bf16.msra.mxu0 %v3396
        %3419 = vmatprep.subr.bf16.mxu0 0
        %3420 = vmatpush1.bf16.msra.mxu0 %v3397
        %3421 = vmatprep.subr.bf16.mxu0 0
        %3422 = vmatpush1.bf16.msra.mxu0 %v3398
        %3423 = vmatprep.subr.bf16.mxu0 0
        %3424 = vmatpush1.bf16.msra.mxu0 0
        %3425 = vmatprep.subr.bf16.mxu0 0
        %3426 = vmatpush1.bf16.msra.mxu0 0
        %3427 = vmatprep.subr.bf16.mxu0 0
        %3428 = vmatpush1.bf16.msra.mxu0 0
        %3429 = vmatprep.subr.bf16.mxu0 0
        %3430 = vmatpush1.bf16.msra.mxu0 0
        %3431 = vmatprep.subr.bf16.mxu0 0
        %3432 = vmatpush1.bf16.msra.mxu0 0
        %3433 = vmatprep.subr.bf16.mxu0 0
        %3434 = vmatpush1.bf16.msra.mxu0 0
        %3435 = vmatprep.subr.bf16.mxu0 0
        %3436 = vmatpush1.bf16.msra.mxu0 0
        %3437 = vmatprep.subr.bf16.mxu0 0
        %3438 = vmatpush1.bf16.msra.mxu0 0
        %3439 = vmatprep.mubr.bf16.mxu0 0
        %3440 = vmatmul.mubr.bf16.gmra.mrb[0].mxu0 %v326
        %v3441 = vpop.f32.mrb[0].mxu0
        %v3442 = vadd.f32 0.0, %v3441
        %v3443 = vpop.f32.mrb[0].mxu0
        %v3444 = vpop.f32.mrb[0].mxu0
        %v3445 = vpop.f32.mrb[0].mxu0
        %3446 = vdwg.mxu0
        %v3447 = vpack.c.bf16 %v570, %v570
        %v3448 = vpack.c.bf16 %v658, %v658
        %v3449 = vpack.c.bf16 %v746, %v746
        %v3450 = vpack.c.bf16 %v834, %v834
        %v3451 = vpack.c.bf16 %v922, %v922
        %v3452 = vpack.c.bf16 %v1010, %v1010
        %v3453 = vpack.c.bf16 %v1098, %v1098
        %v3454 = vpack.c.bf16 %v1186, %v1186
        %v3455 = vpack.c.bf16 %v1274, %v1274
        %v3456 = vpack.c.bf16 %v1362, %v1362
        %v3457 = vpack.c.bf16 %v1610, %v1610
        %v3458 = vpack.c.bf16 %v1698, %v1698
        %v3459 = vpack.c.bf16 %v1786, %v1786
        %v3460 = vpack.c.bf16 %v1874, %v1874
        %v3461 = vpack.c.bf16 %v1962, %v1962
        %v3462 = vpack.c.bf16 %v2050, %v2050
        %v3463 = vpack.c.bf16 %v2138, %v2138
        %v3464 = vpack.c.bf16 %v2226, %v2226
        %v3465 = vpack.c.bf16 %v2314, %v2314
        %v3466 = vpack.c.bf16 %v2402, %v2402
        %3467 = vmatprep.subr.bf16.mxu0 0
        %3468 = vmatpush1.bf16.xpose.msra.mxu0 %v3457
        %3469 = vmatprep.subr.bf16.mxu0 0
        %3470 = vmatpush1.bf16.xpose.msra.mxu0 0
        %3471 = vmatprep.subr.bf16.mxu0 0
        %3472 = vmatpush1.bf16.xpose.msra.mxu0 0
        %3473 = vmatprep.subr.bf16.mxu0 0
        %3474 = vmatpush1.bf16.xpose.msra.mxu0 0
        %3475 = vmatprep.subr.bf16.mxu0 0
        %3476 = vmatpush1.bf16.xpose.msra.mxu0 0
        %3477 = vmatprep.subr.bf16.mxu0 0
        %3478 = vmatpush1.bf16.xpose.msra.mxu0 0
        %3479 = vmatprep.subr.bf16.mxu0 0
        %3480 = vmatpush1.bf16.xpose.msra.mxu0 0
        %3481 = vmatprep.subr.bf16.mxu0 0
        %3482 = vmatpush1.bf16.xpose.msra.mxu0 0
        %3483 = vmatprep.subr.bf16.mxu0 0
        %3484 = vmatpush1.bf16.xpose.msra.mxu0 0
        %3485 = vmatprep.subr.bf16.mxu0 0
        %3486 = vmatpush1.bf16.xpose.msra.mxu0 0
        %3487 = vmatprep.subr.bf16.mxu0 0
        %3488 = vmatpush1.bf16.xpose.msra.mxu0 0
        %3489 = vmatprep.subr.bf16.mxu0 0
        %3490 = vmatpush1.bf16.xpose.msra.mxu0 0
        %3491 = vmatprep.subr.bf16.mxu0 0
        %3492 = vmatpush1.bf16.xpose.msra.mxu0 0
        %3493 = vmatprep.subr.bf16.mxu0 0
        %3494 = vmatpush1.bf16.xpose.msra.mxu0 0
        %3495 = vmatprep.subr.bf16.mxu0 0
        %3496 = vmatpush1.bf16.xpose.msra.mxu0 0
        %3497 = vmatprep.subr.bf16.mxu0 0
        %3498 = vmatpush1.bf16.xpose.msra.mxu0 0
        %3499 = vmatprep.mubr.bf16.mxu0 0
        %3500 = vmatmul.mubr.bf16.gmra.mrb[0].mxu0 %v3447
        %v3501 = vpop.f32.mrb[0].mxu0
        %v3502 = vadd.f32 0.0, %v3501
        %v3503 = vpop.f32.mrb[0].mxu0
        %v3504 = vpop.f32.mrb[0].mxu0
        %v3505 = vpop.f32.mrb[0].mxu0
        %3506 = vdwg.mxu0
        %3507 = vmatprep.subr.bf16.mxu0 0
        %3508 = vmatpush1.bf16.xpose.msra.mxu0 %v3458
        %3509 = vmatprep.subr.bf16.mxu0 0
        %3510 = vmatpush1.bf16.xpose.msra.mxu0 0
        %3511 = vmatprep.subr.bf16.mxu0 0
        %3512 = vmatpush1.bf16.xpose.msra.mxu0 0
        %3513 = vmatprep.subr.bf16.mxu0 0
        %3514 = vmatpush1.bf16.xpose.msra.mxu0 0
        %3515 = vmatprep.subr.bf16.mxu0 0
        %3516 = vmatpush1.bf16.xpose.msra.mxu0 0
        %3517 = vmatprep.subr.bf16.mxu0 0
        %3518 = vmatpush1.bf16.xpose.msra.mxu0 0
        %3519 = vmatprep.subr.bf16.mxu0 0
        %3520 = vmatpush1.bf16.xpose.msra.mxu0 0
        %3521 = vmatprep.subr.bf16.mxu0 0
        %3522 = vmatpush1.bf16.xpose.msra.mxu0 0
        %3523 = vmatprep.subr.bf16.mxu0 0
        %3524 = vmatpush1.bf16.xpose.msra.mxu0 0
        %3525 = vmatprep.subr.bf16.mxu0 0
        %3526 = vmatpush1.bf16.xpose.msra.mxu0 0
        %3527 = vmatprep.subr.bf16.mxu0 0
        %3528 = vmatpush1.bf16.xpose.msra.mxu0 0
        %3529 = vmatprep.subr.bf16.mxu0 0
        %3530 = vmatpush1.bf16.xpose.msra.mxu0 0
        %3531 = vmatprep.subr.bf16.mxu0 0
        %3532 = vmatpush1.bf16.xpose.msra.mxu0 0
        %3533 = vmatprep.subr.bf16.mxu0 0
        %3534 = vmatpush1.bf16.xpose.msra.mxu0 0
        %3535 = vmatprep.subr.bf16.mxu0 0
        %3536 = vmatpush1.bf16.xpose.msra.mxu0 0
        %3537 = vmatprep.subr.bf16.mxu0 0
        %3538 = vmatpush1.bf16.xpose.msra.mxu0 0
        %3539 = vmatprep.mubr.bf16.mxu0 0
        %3540 = vmatmul.mubr.bf16.gmra.mrb[0].mxu0 %v3448
        %v3541 = vpop.f32.mrb[0].mxu0
        %v3542 = vadd.f32 0.0, %v3541
        %v3543 = vpop.f32.mrb[0].mxu0
        %v3544 = vpop.f32.mrb[0].mxu0
        %v3545 = vpop.f32.mrb[0].mxu0
        %3546 = vdwg.mxu0
        %3547 = vmatprep.subr.bf16.mxu0 0
        %3548 = vmatpush1.bf16.xpose.msra.mxu0 %v3459
        %3549 = vmatprep.subr.bf16.mxu0 0
        %3550 = vmatpush1.bf16.xpose.msra.mxu0 0
        %3551 = vmatprep.subr.bf16.mxu0 0
        %3552 = vmatpush1.bf16.xpose.msra.mxu0 0
        %3553 = vmatprep.subr.bf16.mxu0 0
        %3554 = vmatpush1.bf16.xpose.msra.mxu0 0
        %3555 = vmatprep.subr.bf16.mxu0 0
        %3556 = vmatpush1.bf16.xpose.msra.mxu0 0
        %3557 = vmatprep.subr.bf16.mxu0 0
        %3558 = vmatpush1.bf16.xpose.msra.mxu0 0
        %3559 = vmatprep.subr.bf16.mxu0 0
        %3560 = vmatpush1.bf16.xpose.msra.mxu0 0
        %3561 = vmatprep.subr.bf16.mxu0 0
        %3562 = vmatpush1.bf16.xpose.msra.mxu0 0
        %3563 = vmatprep.subr.bf16.mxu0 0
        %3564 = vmatpush1.bf16.xpose.msra.mxu0 0
        %3565 = vmatprep.subr.bf16.mxu0 0
        %3566 = vmatpush1.bf16.xpose.msra.mxu0 0
        %3567 = vmatprep.subr.bf16.mxu0 0
        %3568 = vmatpush1.bf16.xpose.msra.mxu0 0
        %3569 = vmatprep.subr.bf16.mxu0 0
        %3570 = vmatpush1.bf16.xpose.msra.mxu0 0
        %3571 = vmatprep.subr.bf16.mxu0 0
        %3572 = vmatpush1.bf16.xpose.msra.mxu0 0
        %3573 = vmatprep.subr.bf16.mxu0 0
        %3574 = vmatpush1.bf16.xpose.msra.mxu0 0
        %3575 = vmatprep.subr.bf16.mxu0 0
        %3576 = vmatpush1.bf16.xpose.msra.mxu0 0
        %3577 = vmatprep.subr.bf16.mxu0 0
        %3578 = vmatpush1.bf16.xpose.msra.mxu0 0
        %3579 = vmatprep.mubr.bf16.mxu0 0
        %3580 = vmatmul.mubr.bf16.gmra.mrb[0].mxu0 %v3449
        %v3581 = vpop.f32.mrb[0].mxu0
        %v3582 = vadd.f32 0.0, %v3581
        %v3583 = vpop.f32.mrb[0].mxu0
        %v3584 = vpop.f32.mrb[0].mxu0
        %v3585 = vpop.f32.mrb[0].mxu0
        %3586 = vdwg.mxu0
        %3587 = vmatprep.subr.bf16.mxu0 0
        %3588 = vmatpush1.bf16.xpose.msra.mxu0 %v3460
        %3589 = vmatprep.subr.bf16.mxu0 0
        %3590 = vmatpush1.bf16.xpose.msra.mxu0 0
        %3591 = vmatprep.subr.bf16.mxu0 0
        %3592 = vmatpush1.bf16.xpose.msra.mxu0 0
        %3593 = vmatprep.subr.bf16.mxu0 0
        %3594 = vmatpush1.bf16.xpose.msra.mxu0 0
        %3595 = vmatprep.subr.bf16.mxu0 0
        %3596 = vmatpush1.bf16.xpose.msra.mxu0 0
        %3597 = vmatprep.subr.bf16.mxu0 0
        %3598 = vmatpush1.bf16.xpose.msra.mxu0 0
        %3599 = vmatprep.subr.bf16.mxu0 0
        %3600 = vmatpush1.bf16.xpose.msra.mxu0 0
        %3601 = vmatprep.subr.bf16.mxu0 0
        %3602 = vmatpush1.bf16.xpose.msra.mxu0 0
        %3603 = vmatprep.subr.bf16.mxu0 0
        %3604 = vmatpush1.bf16.xpose.msra.mxu0 0
        %3605 = vmatprep.subr.bf16.mxu0 0
        %3606 = vmatpush1.bf16.xpose.msra.mxu0 0
        %3607 = vmatprep.subr.bf16.mxu0 0
        %3608 = vmatpush1.bf16.xpose.msra.mxu0 0
        %3609 = vmatprep.subr.bf16.mxu0 0
        %3610 = vmatpush1.bf16.xpose.msra.mxu0 0
        %3611 = vmatprep.subr.bf16.mxu0 0
        %3612 = vmatpush1.bf16.xpose.msra.mxu0 0
        %3613 = vmatprep.subr.bf16.mxu0 0
        %3614 = vmatpush1.bf16.xpose.msra.mxu0 0
        %3615 = vmatprep.subr.bf16.mxu0 0
        %3616 = vmatpush1.bf16.xpose.msra.mxu0 0
        %3617 = vmatprep.subr.bf16.mxu0 0
        %3618 = vmatpush1.bf16.xpose.msra.mxu0 0
        %3619 = vmatprep.mubr.bf16.mxu0 0
        %3620 = vmatmul.mubr.bf16.gmra.mrb[0].mxu0 %v3450
        %v3621 = vpop.f32.mrb[0].mxu0
        %v3622 = vadd.f32 0.0, %v3621
        %v3623 = vpop.f32.mrb[0].mxu0
        %v3624 = vpop.f32.mrb[0].mxu0
        %v3625 = vpop.f32.mrb[0].mxu0
        %3626 = vdwg.mxu0
        %3627 = vmatprep.subr.bf16.mxu0 0
        %3628 = vmatpush1.bf16.xpose.msra.mxu0 %v3461
        %3629 = vmatprep.subr.bf16.mxu0 0
        %3630 = vmatpush1.bf16.xpose.msra.mxu0 0
        %3631 = vmatprep.subr.bf16.mxu0 0
        %3632 = vmatpush1.bf16.xpose.msra.mxu0 0
        %3633 = vmatprep.subr.bf16.mxu0 0
        %3634 = vmatpush1.bf16.xpose.msra.mxu0 0
        %3635 = vmatprep.subr.bf16.mxu0 0
        %3636 = vmatpush1.bf16.xpose.msra.mxu0 0
        %3637 = vmatprep.subr.bf16.mxu0 0
        %3638 = vmatpush1.bf16.xpose.msra.mxu0 0
        %3639 = vmatprep.subr.bf16.mxu0 0
        %3640 = vmatpush1.bf16.xpose.msra.mxu0 0
        %3641 = vmatprep.subr.bf16.mxu0 0
        %3642 = vmatpush1.bf16.xpose.msra.mxu0 0
        %3643 = vmatprep.subr.bf16.mxu0 0
        %3644 = vmatpush1.bf16.xpose.msra.mxu0 0
        %3645 = vmatprep.subr.bf16.mxu0 0
        %3646 = vmatpush1.bf16.xpose.msra.mxu0 0
        %3647 = vmatprep.subr.bf16.mxu0 0
        %3648 = vmatpush1.bf16.xpose.msra.mxu0 0
        %3649 = vmatprep.subr.bf16.mxu0 0
        %3650 = vmatpush1.bf16.xpose.msra.mxu0 0
        %3651 = vmatprep.subr.bf16.mxu0 0
        %3652 = vmatpush1.bf16.xpose.msra.mxu0 0
        %3653 = vmatprep.subr.bf16.mxu0 0
        %3654 = vmatpush1.bf16.xpose.msra.mxu0 0
        %3655 = vmatprep.subr.bf16.mxu0 0
        %3656 = vmatpush1.bf16.xpose.msra.mxu0 0
        %3657 = vmatprep.subr.bf16.mxu0 0
        %3658 = vmatpush1.bf16.xpose.msra.mxu0 0
        %3659 = vmatprep.mubr.bf16.mxu0 0
        %3660 = vmatmul.mubr.bf16.gmra.mrb[0].mxu0 %v3451
        %v3661 = vpop.f32.mrb[0].mxu0
        %v3662 = vadd.f32 0.0, %v3661
        %v3663 = vpop.f32.mrb[0].mxu0
        %v3664 = vpop.f32.mrb[0].mxu0
        %v3665 = vpop.f32.mrb[0].mxu0
        %3666 = vdwg.mxu0
        %3667 = vmatprep.subr.bf16.mxu0 0
        %3668 = vmatpush1.bf16.xpose.msra.mxu0 %v3462
        %3669 = vmatprep.subr.bf16.mxu0 0
        %3670 = vmatpush1.bf16.xpose.msra.mxu0 0
        %3671 = vmatprep.subr.bf16.mxu0 0
        %3672 = vmatpush1.bf16.xpose.msra.mxu0 0
        %3673 = vmatprep.subr.bf16.mxu0 0
        %3674 = vmatpush1.bf16.xpose.msra.mxu0 0
        %3675 = vmatprep.subr.bf16.mxu0 0
        %3676 = vmatpush1.bf16.xpose.msra.mxu0 0
        %3677 = vmatprep.subr.bf16.mxu0 0
        %3678 = vmatpush1.bf16.xpose.msra.mxu0 0
        %3679 = vmatprep.subr.bf16.mxu0 0
        %3680 = vmatpush1.bf16.xpose.msra.mxu0 0
        %3681 = vmatprep.subr.bf16.mxu0 0
        %3682 = vmatpush1.bf16.xpose.msra.mxu0 0
        %3683 = vmatprep.subr.bf16.mxu0 0
        %3684 = vmatpush1.bf16.xpose.msra.mxu0 0
        %3685 = vmatprep.subr.bf16.mxu0 0
        %3686 = vmatpush1.bf16.xpose.msra.mxu0 0
        %3687 = vmatprep.subr.bf16.mxu0 0
        %3688 = vmatpush1.bf16.xpose.msra.mxu0 0
        %3689 = vmatprep.subr.bf16.mxu0 0
        %3690 = vmatpush1.bf16.xpose.msra.mxu0 0
        %3691 = vmatprep.subr.bf16.mxu0 0
        %3692 = vmatpush1.bf16.xpose.msra.mxu0 0
        %3693 = vmatprep.subr.bf16.mxu0 0
        %3694 = vmatpush1.bf16.xpose.msra.mxu0 0
        %3695 = vmatprep.subr.bf16.mxu0 0
        %3696 = vmatpush1.bf16.xpose.msra.mxu0 0
        %3697 = vmatprep.subr.bf16.mxu0 0
        %3698 = vmatpush1.bf16.xpose.msra.mxu0 0
        %3699 = vmatprep.mubr.bf16.mxu0 0
        %3700 = vmatmul.mubr.bf16.gmra.mrb[0].mxu0 %v3452
        %v3701 = vpop.f32.mrb[0].mxu0
        %v3702 = vadd.f32 0.0, %v3701
        %v3703 = vpop.f32.mrb[0].mxu0
        %v3704 = vpop.f32.mrb[0].mxu0
        %v3705 = vpop.f32.mrb[0].mxu0
        %3706 = vdwg.mxu0
        %3707 = vmatprep.subr.bf16.mxu0 0
        %3708 = vmatpush1.bf16.xpose.msra.mxu0 %v3463
        %3709 = vmatprep.subr.bf16.mxu0 0
        %3710 = vmatpush1.bf16.xpose.msra.mxu0 0
        %3711 = vmatprep.subr.bf16.mxu0 0
        %3712 = vmatpush1.bf16.xpose.msra.mxu0 0
        %3713 = vmatprep.subr.bf16.mxu0 0
        %3714 = vmatpush1.bf16.xpose.msra.mxu0 0
        %3715 = vmatprep.subr.bf16.mxu0 0
        %3716 = vmatpush1.bf16.xpose.msra.mxu0 0
        %3717 = vmatprep.subr.bf16.mxu0 0
        %3718 = vmatpush1.bf16.xpose.msra.mxu0 0
        %3719 = vmatprep.subr.bf16.mxu0 0
        %3720 = vmatpush1.bf16.xpose.msra.mxu0 0
        %3721 = vmatprep.subr.bf16.mxu0 0
        %3722 = vmatpush1.bf16.xpose.msra.mxu0 0
        %3723 = vmatprep.subr.bf16.mxu0 0
        %3724 = vmatpush1.bf16.xpose.msra.mxu0 0
        %3725 = vmatprep.subr.bf16.mxu0 0
        %3726 = vmatpush1.bf16.xpose.msra.mxu0 0
        %3727 = vmatprep.subr.bf16.mxu0 0
        %3728 = vmatpush1.bf16.xpose.msra.mxu0 0
        %3729 = vmatprep.subr.bf16.mxu0 0
        %3730 = vmatpush1.bf16.xpose.msra.mxu0 0
        %3731 = vmatprep.subr.bf16.mxu0 0
        %3732 = vmatpush1.bf16.xpose.msra.mxu0 0
        %3733 = vmatprep.subr.bf16.mxu0 0
        %3734 = vmatpush1.bf16.xpose.msra.mxu0 0
        %3735 = vmatprep.subr.bf16.mxu0 0
        %3736 = vmatpush1.bf16.xpose.msra.mxu0 0
        %3737 = vmatprep.subr.bf16.mxu0 0
        %3738 = vmatpush1.bf16.xpose.msra.mxu0 0
        %3739 = vmatprep.mubr.bf16.mxu0 0
        %3740 = vmatmul.mubr.bf16.gmra.mrb[0].mxu0 %v3453
        %v3741 = vpop.f32.mrb[0].mxu0
        %v3742 = vadd.f32 0.0, %v3741
        %v3743 = vpop.f32.mrb[0].mxu0
        %v3744 = vpop.f32.mrb[0].mxu0
        %v3745 = vpop.f32.mrb[0].mxu0
        %3746 = vdwg.mxu0
        %3747 = vmatprep.subr.bf16.mxu0 0
        %3748 = vmatpush1.bf16.xpose.msra.mxu0 %v3464
        %3749 = vmatprep.subr.bf16.mxu0 0
        %3750 = vmatpush1.bf16.xpose.msra.mxu0 0
        %3751 = vmatprep.subr.bf16.mxu0 0
        %3752 = vmatpush1.bf16.xpose.msra.mxu0 0
        %3753 = vmatprep.subr.bf16.mxu0 0
        %3754 = vmatpush1.bf16.xpose.msra.mxu0 0
        %3755 = vmatprep.subr.bf16.mxu0 0
        %3756 = vmatpush1.bf16.xpose.msra.mxu0 0
        %3757 = vmatprep.subr.bf16.mxu0 0
        %3758 = vmatpush1.bf16.xpose.msra.mxu0 0
        %3759 = vmatprep.subr.bf16.mxu0 0
        %3760 = vmatpush1.bf16.xpose.msra.mxu0 0
        %3761 = vmatprep.subr.bf16.mxu0 0
        %3762 = vmatpush1.bf16.xpose.msra.mxu0 0
        %3763 = vmatprep.subr.bf16.mxu0 0
        %3764 = vmatpush1.bf16.xpose.msra.mxu0 0
        %3765 = vmatprep.subr.bf16.mxu0 0
        %3766 = vmatpush1.bf16.xpose.msra.mxu0 0
        %3767 = vmatprep.subr.bf16.mxu0 0
        %3768 = vmatpush1.bf16.xpose.msra.mxu0 0
        %3769 = vmatprep.subr.bf16.mxu0 0
        %3770 = vmatpush1.bf16.xpose.msra.mxu0 0
        %3771 = vmatprep.subr.bf16.mxu0 0
        %3772 = vmatpush1.bf16.xpose.msra.mxu0 0
        %3773 = vmatprep.subr.bf16.mxu0 0
        %3774 = vmatpush1.bf16.xpose.msra.mxu0 0
        %3775 = vmatprep.subr.bf16.mxu0 0
        %3776 = vmatpush1.bf16.xpose.msra.mxu0 0
        %3777 = vmatprep.subr.bf16.mxu0 0
        %3778 = vmatpush1.bf16.xpose.msra.mxu0 0
        %3779 = vmatprep.mubr.bf16.mxu0 0
        %3780 = vmatmul.mubr.bf16.gmra.mrb[0].mxu0 %v3454
        %v3781 = vpop.f32.mrb[0].mxu0
        %v3782 = vadd.f32 0.0, %v3781
        %v3783 = vpop.f32.mrb[0].mxu0
        %v3784 = vpop.f32.mrb[0].mxu0
        %v3785 = vpop.f32.mrb[0].mxu0
        %3786 = vdwg.mxu0
        %3787 = vmatprep.subr.bf16.mxu0 0
        %3788 = vmatpush1.bf16.xpose.msra.mxu0 %v3465
        %3789 = vmatprep.subr.bf16.mxu0 0
        %3790 = vmatpush1.bf16.xpose.msra.mxu0 0
        %3791 = vmatprep.subr.bf16.mxu0 0
        %3792 = vmatpush1.bf16.xpose.msra.mxu0 0
        %3793 = vmatprep.subr.bf16.mxu0 0
        %3794 = vmatpush1.bf16.xpose.msra.mxu0 0
        %3795 = vmatprep.subr.bf16.mxu0 0
        %3796 = vmatpush1.bf16.xpose.msra.mxu0 0
        %3797 = vmatprep.subr.bf16.mxu0 0
        %3798 = vmatpush1.bf16.xpose.msra.mxu0 0
        %3799 = vmatprep.subr.bf16.mxu0 0
        %3800 = vmatpush1.bf16.xpose.msra.mxu0 0
        %3801 = vmatprep.subr.bf16.mxu0 0
        %3802 = vmatpush1.bf16.xpose.msra.mxu0 0
        %3803 = vmatprep.subr.bf16.mxu0 0
        %3804 = vmatpush1.bf16.xpose.msra.mxu0 0
        %3805 = vmatprep.subr.bf16.mxu0 0
        %3806 = vmatpush1.bf16.xpose.msra.mxu0 0
        %3807 = vmatprep.subr.bf16.mxu0 0
        %3808 = vmatpush1.bf16.xpose.msra.mxu0 0
        %3809 = vmatprep.subr.bf16.mxu0 0
        %3810 = vmatpush1.bf16.xpose.msra.mxu0 0
        %3811 = vmatprep.subr.bf16.mxu0 0
        %3812 = vmatpush1.bf16.xpose.msra.mxu0 0
        %3813 = vmatprep.subr.bf16.mxu0 0
        %3814 = vmatpush1.bf16.xpose.msra.mxu0 0
        %3815 = vmatprep.subr.bf16.mxu0 0
        %3816 = vmatpush1.bf16.xpose.msra.mxu0 0
        %3817 = vmatprep.subr.bf16.mxu0 0
        %3818 = vmatpush1.bf16.xpose.msra.mxu0 0
        %3819 = vmatprep.mubr.bf16.mxu0 0
        %3820 = vmatmul.mubr.bf16.gmra.mrb[0].mxu0 %v3455
        %v3821 = vpop.f32.mrb[0].mxu0
        %v3822 = vadd.f32 0.0, %v3821
        %v3823 = vpop.f32.mrb[0].mxu0
        %v3824 = vpop.f32.mrb[0].mxu0
        %v3825 = vpop.f32.mrb[0].mxu0
        %3826 = vdwg.mxu0
        %3827 = vmatprep.subr.bf16.mxu0 0
        %3828 = vmatpush1.bf16.xpose.msra.mxu0 %v3466
        %3829 = vmatprep.subr.bf16.mxu0 0
        %3830 = vmatpush1.bf16.xpose.msra.mxu0 0
        %3831 = vmatprep.subr.bf16.mxu0 0
        %3832 = vmatpush1.bf16.xpose.msra.mxu0 0
        %3833 = vmatprep.subr.bf16.mxu0 0
        %3834 = vmatpush1.bf16.xpose.msra.mxu0 0
        %3835 = vmatprep.subr.bf16.mxu0 0
        %3836 = vmatpush1.bf16.xpose.msra.mxu0 0
        %3837 = vmatprep.subr.bf16.mxu0 0
        %3838 = vmatpush1.bf16.xpose.msra.mxu0 0
        %3839 = vmatprep.subr.bf16.mxu0 0
        %3840 = vmatpush1.bf16.xpose.msra.mxu0 0
        %3841 = vmatprep.subr.bf16.mxu0 0
        %3842 = vmatpush1.bf16.xpose.msra.mxu0 0
        %3843 = vmatprep.subr.bf16.mxu0 0
        %3844 = vmatpush1.bf16.xpose.msra.mxu0 0
        %3845 = vmatprep.subr.bf16.mxu0 0
        %3846 = vmatpush1.bf16.xpose.msra.mxu0 0
        %3847 = vmatprep.subr.bf16.mxu0 0
        %3848 = vmatpush1.bf16.xpose.msra.mxu0 0
        %3849 = vmatprep.subr.bf16.mxu0 0
        %3850 = vmatpush1.bf16.xpose.msra.mxu0 0
        %3851 = vmatprep.subr.bf16.mxu0 0
        %3852 = vmatpush1.bf16.xpose.msra.mxu0 0
        %3853 = vmatprep.subr.bf16.mxu0 0
        %3854 = vmatpush1.bf16.xpose.msra.mxu0 0
        %3855 = vmatprep.subr.bf16.mxu0 0
        %3856 = vmatpush1.bf16.xpose.msra.mxu0 0
        %3857 = vmatprep.subr.bf16.mxu0 0
        %3858 = vmatpush1.bf16.xpose.msra.mxu0 0
        %3859 = vmatprep.mubr.bf16.mxu0 0
        %3860 = vmatmul.mubr.bf16.gmra.mrb[0].mxu0 %v3456
        %v3861 = vpop.f32.mrb[0].mxu0
        %v3862 = vadd.f32 0.0, %v3861
        %v3863 = vpop.f32.mrb[0].mxu0
        %v3864 = vpop.f32.mrb[0].mxu0
        %v3865 = vpop.f32.mrb[0].mxu0
        %3866 = vdwg.mxu0
        %v3867 = vmul.f32 %v3502, 0.5
        %v3868 = vmul.f32 %v3542, 0.5
        %v3869 = vmul.f32 %v3582, 0.5
        %v3870 = vmul.f32 %v3622, 0.5
        %v3871 = vmul.f32 %v3662, 0.5
        %v3872 = vmul.f32 %v3702, 0.5
        %v3873 = vmul.f32 %v3742, 0.5
        %v3874 = vmul.f32 %v3782, 0.5
        %v3875 = vmul.f32 %v3822, 0.5
        %v3876 = vmul.f32 %v3862, 0.5
        %vm3877 = vcmask 64512
        %v3878 = vsel %vm3877, %v3867, -inf
        %3879 = vmax.xlane.f32.xlu0 %v3878
        %v3880 = vpop.xlane.xlu0 %3879
        %v3881 = vsel %vm3877, %v3868, -inf
        %3882 = vmax.xlane.f32.xlu0 %v3881
        %v3883 = vpop.xlane.xlu0 %3882
        %v3884 = vsel %vm3877, %v3869, -inf
        %3885 = vmax.xlane.f32.xlu0 %v3884
        %v3886 = vpop.xlane.xlu0 %3885
        %v3887 = vsel %vm3877, %v3870, -inf
        %3888 = vmax.xlane.f32.xlu0 %v3887
        %v3889 = vpop.xlane.xlu0 %3888
        %v3890 = vsel %vm3877, %v3871, -inf
        %3891 = vmax.xlane.f32.xlu0 %v3890
        %v3892 = vpop.xlane.xlu0 %3891
        %v3893 = vsel %vm3877, %v3872, -inf
        %3894 = vmax.xlane.f32.xlu0 %v3893
        %v3895 = vpop.xlane.xlu0 %3894
        %v3896 = vsel %vm3877, %v3873, -inf
        %3897 = vmax.xlane.f32.xlu0 %v3896
        %v3898 = vpop.xlane.xlu0 %3897
        %v3899 = vsel %vm3877, %v3874, -inf
        %3900 = vmax.xlane.f32.xlu0 %v3899
        %v3901 = vpop.xlane.xlu0 %3900
        %v3902 = vsel %vm3877, %v3875, -inf
        %3903 = vmax.xlane.f32.xlu0 %v3902
        %v3904 = vpop.xlane.xlu0 %3903
        %v3905 = vsel %vm3877, %v3876, -inf
        %3906 = vmax.xlane.f32.xlu0 %v3905
        %v3907 = vpop.xlane.xlu0 %3906
        %v3908 = vsub.f32 %v3867, %v3880
        %v3909 = vsub.f32 %v3868, %v3883
        %v3910 = vsub.f32 %v3869, %v3886
        %v3911 = vsub.f32 %v3870, %v3889
        %v3912 = vsub.f32 %v3871, %v3892
        %v3913 = vsub.f32 %v3872, %v3895
        %v3914 = vsub.f32 %v3873, %v3898
        %v3915 = vsub.f32 %v3874, %v3901
        %v3916 = vsub.f32 %v3875, %v3904
        %v3917 = vsub.f32 %v3876, %v3907
        %v3918 = vmul.f32 %v3908, 1.442695
        %v3919 = vpow.pop %v3918
        %v3920 = vmul.f32 %v3909, 1.442695
        %v3921 = vpow.pop %v3920
        %v3922 = vmul.f32 %v3910, 1.442695
        %v3923 = vpow.pop %v3922
        %v3924 = vmul.f32 %v3911, 1.442695
        %v3925 = vpow.pop %v3924
        %v3926 = vmul.f32 %v3912, 1.442695
        %v3927 = vpow.pop %v3926
        %v3928 = vmul.f32 %v3913, 1.442695
        %v3929 = vpow.pop %v3928
        %v3930 = vmul.f32 %v3914, 1.442695
        %v3931 = vpow.pop %v3930
        %v3932 = vmul.f32 %v3915, 1.442695
        %v3933 = vpow.pop %v3932
        %v3934 = vmul.f32 %v3916, 1.442695
        %v3935 = vpow.pop %v3934
        %v3936 = vmul.f32 %v3917, 1.442695
        %v3937 = vpow.pop %v3936
        %v3938 = vsel %vm3877, %v3919, 0.0
        %3939 = vadd.xlane.f32.xlu0 %v3938
        %v3940 = vpop.xlane.xlu0 %3939
        %v3941 = vsel %vm3877, %v3921, 0.0
        %3942 = vadd.xlane.f32.xlu0 %v3941
        %v3943 = vpop.xlane.xlu0 %3942
        %v3944 = vsel %vm3877, %v3923, 0.0
        %3945 = vadd.xlane.f32.xlu0 %v3944
        %v3946 = vpop.xlane.xlu0 %3945
        %v3947 = vsel %vm3877, %v3925, 0.0
        %3948 = vadd.xlane.f32.xlu0 %v3947
        %v3949 = vpop.xlane.xlu0 %3948
        %v3950 = vsel %vm3877, %v3927, 0.0
        %3951 = vadd.xlane.f32.xlu0 %v3950
        %v3952 = vpop.xlane.xlu0 %3951
        %v3953 = vsel %vm3877, %v3929, 0.0
        %3954 = vadd.xlane.f32.xlu0 %v3953
        %v3955 = vpop.xlane.xlu0 %3954
        %v3956 = vsel %vm3877, %v3931, 0.0
        %3957 = vadd.xlane.f32.xlu0 %v3956
        %v3958 = vpop.xlane.xlu0 %3957
        %v3959 = vsel %vm3877, %v3933, 0.0
        %3960 = vadd.xlane.f32.xlu0 %v3959
        %v3961 = vpop.xlane.xlu0 %3960
        %v3962 = vsel %vm3877, %v3935, 0.0
        %3963 = vadd.xlane.f32.xlu0 %v3962
        %v3964 = vpop.xlane.xlu0 %3963
        %v3965 = vsel %vm3877, %v3937, 0.0
        %3966 = vadd.xlane.f32.xlu0 %v3965
        %v3967 = vpop.xlane.xlu0 %3966
        %v3968 = vrcp.pop %v3940
        %v3969 = vrcp.pop %v3943
        %v3970 = vrcp.pop %v3946
        %v3971 = vrcp.pop %v3949
        %v3972 = vrcp.pop %v3952
        %v3973 = vrcp.pop %v3955
        %v3974 = vrcp.pop %v3958
        %v3975 = vrcp.pop %v3961
        %v3976 = vrcp.pop %v3964
        %v3977 = vrcp.pop %v3967
        %v3978 = vmul.f32 %v3919, %v3968
        %v3979 = vmul.f32 %v3921, %v3969
        %v3980 = vmul.f32 %v3923, %v3970
        %v3981 = vmul.f32 %v3925, %v3971
        %v3982 = vmul.f32 %v3927, %v3972
        %v3983 = vmul.f32 %v3929, %v3973
        %v3984 = vmul.f32 %v3931, %v3974
        %v3985 = vmul.f32 %v3933, %v3975
        %v3986 = vmul.f32 %v3935, %v3976
        %v3987 = vmul.f32 %v3937, %v3977
        %v3988 = vpack.c.bf16 %v3978, %v3978
        %v3989 = vpack.c.bf16 %v3979, %v3979
        %v3990 = vpack.c.bf16 %v3980, %v3980
        %v3991 = vpack.c.bf16 %v3981, %v3981
        %v3992 = vpack.c.bf16 %v3982, %v3982
        %v3993 = vpack.c.bf16 %v3983, %v3983
        %v3994 = vpack.c.bf16 %v3984, %v3984
        %v3995 = vpack.c.bf16 %v3985, %v3985
        %v3996 = vpack.c.bf16 %v3986, %v3986
        %v3997 = vpack.c.bf16 %v3987, %v3987
        %v3998 = vpack.c.bf16 %v2650, %v2650
        %v3999 = vpack.c.bf16 %v2738, %v2738
        %v4000 = vpack.c.bf16 %v2826, %v2826
        %v4001 = vpack.c.bf16 %v2914, %v2914
        %v4002 = vpack.c.bf16 %v3002, %v3002
        %v4003 = vpack.c.bf16 %v3090, %v3090
        %v4004 = vpack.c.bf16 %v3178, %v3178
        %v4005 = vpack.c.bf16 %v3266, %v3266
        %v4006 = vpack.c.bf16 %v3354, %v3354
        %v4007 = vpack.c.bf16 %v3442, %v3442
        %v4009 = vsel %vm3877, %v3988, 0
        %vm4011 = vcmask 1043456
        %v4013 = vsel %vm4011, %v3998, 0
        %4015 = vmatprep.subr.bf16.mxu0 0
        %4016 = vmatpush1.bf16.msra.mxu0 %v4013
        %4017 = vmatprep.subr.bf16.mxu0 0
        %4018 = vmatpush1.bf16.msra.mxu0 0
        %4019 = vmatprep.subr.bf16.mxu0 0
        %4020 = vmatpush1.bf16.msra.mxu0 0
        %4021 = vmatprep.subr.bf16.mxu0 0
        %4022 = vmatpush1.bf16.msra.mxu0 0
        %4023 = vmatprep.subr.bf16.mxu0 0
        %4024 = vmatpush1.bf16.msra.mxu0 0
        %4025 = vmatprep.subr.bf16.mxu0 0
        %4026 = vmatpush1.bf16.msra.mxu0 0
        %4027 = vmatprep.subr.bf16.mxu0 0
        %4028 = vmatpush1.bf16.msra.mxu0 0
        %4029 = vmatprep.subr.bf16.mxu0 0
        %4030 = vmatpush1.bf16.msra.mxu0 0
        %4031 = vmatprep.subr.bf16.mxu0 0
        %4032 = vmatpush1.bf16.msra.mxu0 0
        %4033 = vmatprep.subr.bf16.mxu0 0
        %4034 = vmatpush1.bf16.msra.mxu0 0
        %4035 = vmatprep.subr.bf16.mxu0 0
        %4036 = vmatpush1.bf16.msra.mxu0 0
        %4037 = vmatprep.subr.bf16.mxu0 0
        %4038 = vmatpush1.bf16.msra.mxu0 0
        %4039 = vmatprep.subr.bf16.mxu0 0
        %4040 = vmatpush1.bf16.msra.mxu0 0
        %4041 = vmatprep.subr.bf16.mxu0 0
        %4042 = vmatpush1.bf16.msra.mxu0 0
        %4043 = vmatprep.subr.bf16.mxu0 0
        %4044 = vmatpush1.bf16.msra.mxu0 0
        %4045 = vmatprep.subr.bf16.mxu0 0
        %4046 = vmatpush1.bf16.msra.mxu0 0
        %4047 = vmatprep.mubr.bf16.mxu0 0
        %4048 = vmatmul.mubr.bf16.gmra.mrb[0].mxu0 %v4009
        %v4049 = vpop.f32.mrb[0].mxu0
        %v4050 = vadd.f32 0.0, %v4049
        %v4051 = vpop.f32.mrb[0].mxu0
        %v4052 = vpop.f32.mrb[0].mxu0
        %v4053 = vpop.f32.mrb[0].mxu0
        %4054 = vdwg.mxu0
        %v4056 = vsel %vm3877, %v3989, 0
        %v4059 = vsel %vm4011, %v3999, 0
        %4061 = vmatprep.subr.bf16.mxu0 0
        %4062 = vmatpush1.bf16.msra.mxu0 %v4059
        %4063 = vmatprep.subr.bf16.mxu0 0
        %4064 = vmatpush1.bf16.msra.mxu0 0
        %4065 = vmatprep.subr.bf16.mxu0 0
        %4066 = vmatpush1.bf16.msra.mxu0 0
        %4067 = vmatprep.subr.bf16.mxu0 0
        %4068 = vmatpush1.bf16.msra.mxu0 0
        %4069 = vmatprep.subr.bf16.mxu0 0
        %4070 = vmatpush1.bf16.msra.mxu0 0
        %4071 = vmatprep.subr.bf16.mxu0 0
        %4072 = vmatpush1.bf16.msra.mxu0 0
        %4073 = vmatprep.subr.bf16.mxu0 0
        %4074 = vmatpush1.bf16.msra.mxu0 0
        %4075 = vmatprep.subr.bf16.mxu0 0
        %4076 = vmatpush1.bf16.msra.mxu0 0
        %4077 = vmatprep.subr.bf16.mxu0 0
        %4078 = vmatpush1.bf16.msra.mxu0 0
        %4079 = vmatprep.subr.bf16.mxu0 0
        %4080 = vmatpush1.bf16.msra.mxu0 0
        %4081 = vmatprep.subr.bf16.mxu0 0
        %4082 = vmatpush1.bf16.msra.mxu0 0
        %4083 = vmatprep.subr.bf16.mxu0 0
        %4084 = vmatpush1.bf16.msra.mxu0 0
        %4085 = vmatprep.subr.bf16.mxu0 0
        %4086 = vmatpush1.bf16.msra.mxu0 0
        %4087 = vmatprep.subr.bf16.mxu0 0
        %4088 = vmatpush1.bf16.msra.mxu0 0
        %4089 = vmatprep.subr.bf16.mxu0 0
        %4090 = vmatpush1.bf16.msra.mxu0 0
        %4091 = vmatprep.subr.bf16.mxu0 0
        %4092 = vmatpush1.bf16.msra.mxu0 0
        %4093 = vmatprep.mubr.bf16.mxu0 0
        %4094 = vmatmul.mubr.bf16.gmra.mrb[0].mxu0 %v4056
        %v4095 = vpop.f32.mrb[0].mxu0
        %v4096 = vadd.f32 0.0, %v4095
        %v4097 = vpop.f32.mrb[0].mxu0
        %v4098 = vpop.f32.mrb[0].mxu0
        %v4099 = vpop.f32.mrb[0].mxu0
        %4100 = vdwg.mxu0
        %v4102 = vsel %vm3877, %v3990, 0
        %v4105 = vsel %vm4011, %v4000, 0
        %4107 = vmatprep.subr.bf16.mxu0 0
        %4108 = vmatpush1.bf16.msra.mxu0 %v4105
        %4109 = vmatprep.subr.bf16.mxu0 0
        %4110 = vmatpush1.bf16.msra.mxu0 0
        %4111 = vmatprep.subr.bf16.mxu0 0
        %4112 = vmatpush1.bf16.msra.mxu0 0
        %4113 = vmatprep.subr.bf16.mxu0 0
        %4114 = vmatpush1.bf16.msra.mxu0 0
        %4115 = vmatprep.subr.bf16.mxu0 0
        %4116 = vmatpush1.bf16.msra.mxu0 0
        %4117 = vmatprep.subr.bf16.mxu0 0
        %4118 = vmatpush1.bf16.msra.mxu0 0
        %4119 = vmatprep.subr.bf16.mxu0 0
        %4120 = vmatpush1.bf16.msra.mxu0 0
        %4121 = vmatprep.subr.bf16.mxu0 0
        %4122 = vmatpush1.bf16.msra.mxu0 0
        %4123 = vmatprep.subr.bf16.mxu0 0
        %4124 = vmatpush1.bf16.msra.mxu0 0
        %4125 = vmatprep.subr.bf16.mxu0 0
        %4126 = vmatpush1.bf16.msra.mxu0 0
        %4127 = vmatprep.subr.bf16.mxu0 0
        %4128 = vmatpush1.bf16.msra.mxu0 0
        %4129 = vmatprep.subr.bf16.mxu0 0
        %4130 = vmatpush1.bf16.msra.mxu0 0
        %4131 = vmatprep.subr.bf16.mxu0 0
        %4132 = vmatpush1.bf16.msra.mxu0 0
        %4133 = vmatprep.subr.bf16.mxu0 0
        %4134 = vmatpush1.bf16.msra.mxu0 0
        %4135 = vmatprep.subr.bf16.mxu0 0
        %4136 = vmatpush1.bf16.msra.mxu0 0
        %4137 = vmatprep.subr.bf16.mxu0 0
        %4138 = vmatpush1.bf16.msra.mxu0 0
        %4139 = vmatprep.mubr.bf16.mxu0 0
        %4140 = vmatmul.mubr.bf16.gmra.mrb[0].mxu0 %v4102
        %v4141 = vpop.f32.mrb[0].mxu0
        %v4142 = vadd.f32 0.0, %v4141
        %v4143 = vpop.f32.mrb[0].mxu0
        %v4144 = vpop.f32.mrb[0].mxu0
        %v4145 = vpop.f32.mrb[0].mxu0
        %4146 = vdwg.mxu0
        %v4148 = vsel %vm3877, %v3991, 0
        %v4151 = vsel %vm4011, %v4001, 0
        %4153 = vmatprep.subr.bf16.mxu0 0
        %4154 = vmatpush1.bf16.msra.mxu0 %v4151
        %4155 = vmatprep.subr.bf16.mxu0 0
        %4156 = vmatpush1.bf16.msra.mxu0 0
        %4157 = vmatprep.subr.bf16.mxu0 0
        %4158 = vmatpush1.bf16.msra.mxu0 0
        %4159 = vmatprep.subr.bf16.mxu0 0
        %4160 = vmatpush1.bf16.msra.mxu0 0
        %4161 = vmatprep.subr.bf16.mxu0 0
        %4162 = vmatpush1.bf16.msra.mxu0 0
        %4163 = vmatprep.subr.bf16.mxu0 0
        %4164 = vmatpush1.bf16.msra.mxu0 0
        %4165 = vmatprep.subr.bf16.mxu0 0
        %4166 = vmatpush1.bf16.msra.mxu0 0
        %4167 = vmatprep.subr.bf16.mxu0 0
        %4168 = vmatpush1.bf16.msra.mxu0 0
        %4169 = vmatprep.subr.bf16.mxu0 0
        %4170 = vmatpush1.bf16.msra.mxu0 0
        %4171 = vmatprep.subr.bf16.mxu0 0
        %4172 = vmatpush1.bf16.msra.mxu0 0
        %4173 = vmatprep.subr.bf16.mxu0 0
        %4174 = vmatpush1.bf16.msra.mxu0 0
        %4175 = vmatprep.subr.bf16.mxu0 0
        %4176 = vmatpush1.bf16.msra.mxu0 0
        %4177 = vmatprep.subr.bf16.mxu0 0
        %4178 = vmatpush1.bf16.msra.mxu0 0
        %4179 = vmatprep.subr.bf16.mxu0 0
        %4180 = vmatpush1.bf16.msra.mxu0 0
        %4181 = vmatprep.subr.bf16.mxu0 0
        %4182 = vmatpush1.bf16.msra.mxu0 0
        %4183 = vmatprep.subr.bf16.mxu0 0
        %4184 = vmatpush1.bf16.msra.mxu0 0
        %4185 = vmatprep.mubr.bf16.mxu0 0
        %4186 = vmatmul.mubr.bf16.gmra.mrb[0].mxu0 %v4148
        %v4187 = vpop.f32.mrb[0].mxu0
        %v4188 = vadd.f32 0.0, %v4187
        %v4189 = vpop.f32.mrb[0].mxu0
        %v4190 = vpop.f32.mrb[0].mxu0
        %v4191 = vpop.f32.mrb[0].mxu0
        %4192 = vdwg.mxu0
        %v4194 = vsel %vm3877, %v3992, 0
        %v4197 = vsel %vm4011, %v4002, 0
        %4199 = vmatprep.subr.bf16.mxu0 0
        %4200 = vmatpush1.bf16.msra.mxu0 %v4197
        %4201 = vmatprep.subr.bf16.mxu0 0
        %4202 = vmatpush1.bf16.msra.mxu0 0
        %4203 = vmatprep.subr.bf16.mxu0 0
        %4204 = vmatpush1.bf16.msra.mxu0 0
        %4205 = vmatprep.subr.bf16.mxu0 0
        %4206 = vmatpush1.bf16.msra.mxu0 0
        %4207 = vmatprep.subr.bf16.mxu0 0
        %4208 = vmatpush1.bf16.msra.mxu0 0
        %4209 = vmatprep.subr.bf16.mxu0 0
        %4210 = vmatpush1.bf16.msra.mxu0 0
        %4211 = vmatprep.subr.bf16.mxu0 0
        %4212 = vmatpush1.bf16.msra.mxu0 0
        %4213 = vmatprep.subr.bf16.mxu0 0
        %4214 = vmatpush1.bf16.msra.mxu0 0
        %4215 = vmatprep.subr.bf16.mxu0 0
        %4216 = vmatpush1.bf16.msra.mxu0 0
        %4217 = vmatprep.subr.bf16.mxu0 0
        %4218 = vmatpush1.bf16.msra.mxu0 0
        %4219 = vmatprep.subr.bf16.mxu0 0
        %4220 = vmatpush1.bf16.msra.mxu0 0
        %4221 = vmatprep.subr.bf16.mxu0 0
        %4222 = vmatpush1.bf16.msra.mxu0 0
        %4223 = vmatprep.subr.bf16.mxu0 0
        %4224 = vmatpush1.bf16.msra.mxu0 0
        %4225 = vmatprep.subr.bf16.mxu0 0
        %4226 = vmatpush1.bf16.msra.mxu0 0
        %4227 = vmatprep.subr.bf16.mxu0 0
        %4228 = vmatpush1.bf16.msra.mxu0 0
        %4229 = vmatprep.subr.bf16.mxu0 0
        %4230 = vmatpush1.bf16.msra.mxu0 0
        %4231 = vmatprep.mubr.bf16.mxu0 0
        %4232 = vmatmul.mubr.bf16.gmra.mrb[0].mxu0 %v4194
        %v4233 = vpop.f32.mrb[0].mxu0
        %v4234 = vadd.f32 0.0, %v4233
        %v4235 = vpop.f32.mrb[0].mxu0
        %v4236 = vpop.f32.mrb[0].mxu0
        %v4237 = vpop.f32.mrb[0].mxu0
        %4238 = vdwg.mxu0
        %v4240 = vsel %vm3877, %v3993, 0
        %v4243 = vsel %vm4011, %v4003, 0
        %4245 = vmatprep.subr.bf16.mxu0 0
        %4246 = vmatpush1.bf16.msra.mxu0 %v4243
        %4247 = vmatprep.subr.bf16.mxu0 0
        %4248 = vmatpush1.bf16.msra.mxu0 0
        %4249 = vmatprep.subr.bf16.mxu0 0
        %4250 = vmatpush1.bf16.msra.mxu0 0
        %4251 = vmatprep.subr.bf16.mxu0 0
        %4252 = vmatpush1.bf16.msra.mxu0 0
        %4253 = vmatprep.subr.bf16.mxu0 0
        %4254 = vmatpush1.bf16.msra.mxu0 0
        %4255 = vmatprep.subr.bf16.mxu0 0
        %4256 = vmatpush1.bf16.msra.mxu0 0
        %4257 = vmatprep.subr.bf16.mxu0 0
        %4258 = vmatpush1.bf16.msra.mxu0 0
        %4259 = vmatprep.subr.bf16.mxu0 0
        %4260 = vmatpush1.bf16.msra.mxu0 0
        %4261 = vmatprep.subr.bf16.mxu0 0
        %4262 = vmatpush1.bf16.msra.mxu0 0
        %4263 = vmatprep.subr.bf16.mxu0 0
        %4264 = vmatpush1.bf16.msra.mxu0 0
        %4265 = vmatprep.subr.bf16.mxu0 0
        %4266 = vmatpush1.bf16.msra.mxu0 0
        %4267 = vmatprep.subr.bf16.mxu0 0
        %4268 = vmatpush1.bf16.msra.mxu0 0
        %4269 = vmatprep.subr.bf16.mxu0 0
        %4270 = vmatpush1.bf16.msra.mxu0 0
        %4271 = vmatprep.subr.bf16.mxu0 0
        %4272 = vmatpush1.bf16.msra.mxu0 0
        %4273 = vmatprep.subr.bf16.mxu0 0
        %4274 = vmatpush1.bf16.msra.mxu0 0
        %4275 = vmatprep.subr.bf16.mxu0 0
        %4276 = vmatpush1.bf16.msra.mxu0 0
        %4277 = vmatprep.mubr.bf16.mxu0 0
        %4278 = vmatmul.mubr.bf16.gmra.mrb[0].mxu0 %v4240
        %v4279 = vpop.f32.mrb[0].mxu0
        %v4280 = vadd.f32 0.0, %v4279
        %v4281 = vpop.f32.mrb[0].mxu0
        %v4282 = vpop.f32.mrb[0].mxu0
        %v4283 = vpop.f32.mrb[0].mxu0
        %4284 = vdwg.mxu0
        %v4286 = vsel %vm3877, %v3994, 0
        %v4289 = vsel %vm4011, %v4004, 0
        %4291 = vmatprep.subr.bf16.mxu0 0
        %4292 = vmatpush1.bf16.msra.mxu0 %v4289
        %4293 = vmatprep.subr.bf16.mxu0 0
        %4294 = vmatpush1.bf16.msra.mxu0 0
        %4295 = vmatprep.subr.bf16.mxu0 0
        %4296 = vmatpush1.bf16.msra.mxu0 0
        %4297 = vmatprep.subr.bf16.mxu0 0
        %4298 = vmatpush1.bf16.msra.mxu0 0
        %4299 = vmatprep.subr.bf16.mxu0 0
        %4300 = vmatpush1.bf16.msra.mxu0 0
        %4301 = vmatprep.subr.bf16.mxu0 0
        %4302 = vmatpush1.bf16.msra.mxu0 0
        %4303 = vmatprep.subr.bf16.mxu0 0
        %4304 = vmatpush1.bf16.msra.mxu0 0
        %4305 = vmatprep.subr.bf16.mxu0 0
        %4306 = vmatpush1.bf16.msra.mxu0 0
        %4307 = vmatprep.subr.bf16.mxu0 0
        %4308 = vmatpush1.bf16.msra.mxu0 0
        %4309 = vmatprep.subr.bf16.mxu0 0
        %4310 = vmatpush1.bf16.msra.mxu0 0
        %4311 = vmatprep.subr.bf16.mxu0 0
        %4312 = vmatpush1.bf16.msra.mxu0 0
        %4313 = vmatprep.subr.bf16.mxu0 0
        %4314 = vmatpush1.bf16.msra.mxu0 0
        %4315 = vmatprep.subr.bf16.mxu0 0
        %4316 = vmatpush1.bf16.msra.mxu0 0
        %4317 = vmatprep.subr.bf16.mxu0 0
        %4318 = vmatpush1.bf16.msra.mxu0 0
        %4319 = vmatprep.subr.bf16.mxu0 0
        %4320 = vmatpush1.bf16.msra.mxu0 0
        %4321 = vmatprep.subr.bf16.mxu0 0
        %4322 = vmatpush1.bf16.msra.mxu0 0
        %4323 = vmatprep.mubr.bf16.mxu0 0
        %4324 = vmatmul.mubr.bf16.gmra.mrb[0].mxu0 %v4286
        %v4325 = vpop.f32.mrb[0].mxu0
        %v4326 = vadd.f32 0.0, %v4325
        %v4327 = vpop.f32.mrb[0].mxu0
        %v4328 = vpop.f32.mrb[0].mxu0
        %v4329 = vpop.f32.mrb[0].mxu0
        %4330 = vdwg.mxu0
        %v4332 = vsel %vm3877, %v3995, 0
        %v4335 = vsel %vm4011, %v4005, 0
        %4337 = vmatprep.subr.bf16.mxu0 0
        %4338 = vmatpush1.bf16.msra.mxu0 %v4335
        %4339 = vmatprep.subr.bf16.mxu0 0
        %4340 = vmatpush1.bf16.msra.mxu0 0
        %4341 = vmatprep.subr.bf16.mxu0 0
        %4342 = vmatpush1.bf16.msra.mxu0 0
        %4343 = vmatprep.subr.bf16.mxu0 0
        %4344 = vmatpush1.bf16.msra.mxu0 0
        %4345 = vmatprep.subr.bf16.mxu0 0
        %4346 = vmatpush1.bf16.msra.mxu0 0
        %4347 = vmatprep.subr.bf16.mxu0 0
        %4348 = vmatpush1.bf16.msra.mxu0 0
        %4349 = vmatprep.subr.bf16.mxu0 0
        %4350 = vmatpush1.bf16.msra.mxu0 0
        %4351 = vmatprep.subr.bf16.mxu0 0
        %4352 = vmatpush1.bf16.msra.mxu0 0
        %4353 = vmatprep.subr.bf16.mxu0 0
        %4354 = vmatpush1.bf16.msra.mxu0 0
        %4355 = vmatprep.subr.bf16.mxu0 0
        %4356 = vmatpush1.bf16.msra.mxu0 0
        %4357 = vmatprep.subr.bf16.mxu0 0
        %4358 = vmatpush1.bf16.msra.mxu0 0
        %4359 = vmatprep.subr.bf16.mxu0 0
        %4360 = vmatpush1.bf16.msra.mxu0 0
        %4361 = vmatprep.subr.bf16.mxu0 0
        %4362 = vmatpush1.bf16.msra.mxu0 0
        %4363 = vmatprep.subr.bf16.mxu0 0
        %4364 = vmatpush1.bf16.msra.mxu0 0
        %4365 = vmatprep.subr.bf16.mxu0 0
        %4366 = vmatpush1.bf16.msra.mxu0 0
        %4367 = vmatprep.subr.bf16.mxu0 0
        %4368 = vmatpush1.bf16.msra.mxu0 0
        %4369 = vmatprep.mubr.bf16.mxu0 0
        %4370 = vmatmul.mubr.bf16.gmra.mrb[0].mxu0 %v4332
        %v4371 = vpop.f32.mrb[0].mxu0
        %v4372 = vadd.f32 0.0, %v4371
        %v4373 = vpop.f32.mrb[0].mxu0
        %v4374 = vpop.f32.mrb[0].mxu0
        %v4375 = vpop.f32.mrb[0].mxu0
        %4376 = vdwg.mxu0
        %v4378 = vsel %vm3877, %v3996, 0
        %v4381 = vsel %vm4011, %v4006, 0
        %4383 = vmatprep.subr.bf16.mxu0 0
        %4384 = vmatpush1.bf16.msra.mxu0 %v4381
        %4385 = vmatprep.subr.bf16.mxu0 0
        %4386 = vmatpush1.bf16.msra.mxu0 0
        %4387 = vmatprep.subr.bf16.mxu0 0
        %4388 = vmatpush1.bf16.msra.mxu0 0
        %4389 = vmatprep.subr.bf16.mxu0 0
        %4390 = vmatpush1.bf16.msra.mxu0 0
        %4391 = vmatprep.subr.bf16.mxu0 0
        %4392 = vmatpush1.bf16.msra.mxu0 0
        %4393 = vmatprep.subr.bf16.mxu0 0
        %4394 = vmatpush1.bf16.msra.mxu0 0
        %4395 = vmatprep.subr.bf16.mxu0 0
        %4396 = vmatpush1.bf16.msra.mxu0 0
        %4397 = vmatprep.subr.bf16.mxu0 0
        %4398 = vmatpush1.bf16.msra.mxu0 0
        %4399 = vmatprep.subr.bf16.mxu0 0
        %4400 = vmatpush1.bf16.msra.mxu0 0
        %4401 = vmatprep.subr.bf16.mxu0 0
        %4402 = vmatpush1.bf16.msra.mxu0 0
        %4403 = vmatprep.subr.bf16.mxu0 0
        %4404 = vmatpush1.bf16.msra.mxu0 0
        %4405 = vmatprep.subr.bf16.mxu0 0
        %4406 = vmatpush1.bf16.msra.mxu0 0
        %4407 = vmatprep.subr.bf16.mxu0 0
        %4408 = vmatpush1.bf16.msra.mxu0 0
        %4409 = vmatprep.subr.bf16.mxu0 0
        %4410 = vmatpush1.bf16.msra.mxu0 0
        %4411 = vmatprep.subr.bf16.mxu0 0
        %4412 = vmatpush1.bf16.msra.mxu0 0
        %4413 = vmatprep.subr.bf16.mxu0 0
        %4414 = vmatpush1.bf16.msra.mxu0 0
        %4415 = vmatprep.mubr.bf16.mxu0 0
        %4416 = vmatmul.mubr.bf16.gmra.mrb[0].mxu0 %v4378
        %v4417 = vpop.f32.mrb[0].mxu0
        %v4418 = vadd.f32 0.0, %v4417
        %v4419 = vpop.f32.mrb[0].mxu0
        %v4420 = vpop.f32.mrb[0].mxu0
        %v4421 = vpop.f32.mrb[0].mxu0
        %4422 = vdwg.mxu0
        %v4424 = vsel %vm3877, %v3997, 0
        %v4427 = vsel %vm4011, %v4007, 0
        %4429 = vmatprep.subr.bf16.mxu0 0
        %4430 = vmatpush1.bf16.msra.mxu0 %v4427
        %4431 = vmatprep.subr.bf16.mxu0 0
        %4432 = vmatpush1.bf16.msra.mxu0 0
        %4433 = vmatprep.subr.bf16.mxu0 0
        %4434 = vmatpush1.bf16.msra.mxu0 0
        %4435 = vmatprep.subr.bf16.mxu0 0
        %4436 = vmatpush1.bf16.msra.mxu0 0
        %4437 = vmatprep.subr.bf16.mxu0 0
        %4438 = vmatpush1.bf16.msra.mxu0 0
        %4439 = vmatprep.subr.bf16.mxu0 0
        %4440 = vmatpush1.bf16.msra.mxu0 0
        %4441 = vmatprep.subr.bf16.mxu0 0
        %4442 = vmatpush1.bf16.msra.mxu0 0
        %4443 = vmatprep.subr.bf16.mxu0 0
        %4444 = vmatpush1.bf16.msra.mxu0 0
        %4445 = vmatprep.subr.bf16.mxu0 0
        %4446 = vmatpush1.bf16.msra.mxu0 0
        %4447 = vmatprep.subr.bf16.mxu0 0
        %4448 = vmatpush1.bf16.msra.mxu0 0
        %4449 = vmatprep.subr.bf16.mxu0 0
        %4450 = vmatpush1.bf16.msra.mxu0 0
        %4451 = vmatprep.subr.bf16.mxu0 0
        %4452 = vmatpush1.bf16.msra.mxu0 0
        %4453 = vmatprep.subr.bf16.mxu0 0
        %4454 = vmatpush1.bf16.msra.mxu0 0
        %4455 = vmatprep.subr.bf16.mxu0 0
        %4456 = vmatpush1.bf16.msra.mxu0 0
        %4457 = vmatprep.subr.bf16.mxu0 0
        %4458 = vmatpush1.bf16.msra.mxu0 0
        %4459 = vmatprep.subr.bf16.mxu0 0
        %4460 = vmatpush1.bf16.msra.mxu0 0
        %4461 = vmatprep.mubr.bf16.mxu0 0
        %4462 = vmatmul.mubr.bf16.gmra.mrb[0].mxu0 %v4424
        %v4463 = vpop.f32.mrb[0].mxu0
        %v4464 = vadd.f32 0.0, %v4463
        %v4465 = vpop.f32.mrb[0].mxu0
        %v4466 = vpop.f32.mrb[0].mxu0
        %v4467 = vpop.f32.mrb[0].mxu0
        %4468 = vdwg.mxu0
        %v4469 = vpack.c.bf16 %v4050, %v4050
        %v4470 = vpack.c.bf16 %v4096, %v4096
        %v4471 = vpack.c.bf16 %v4142, %v4142
        %v4472 = vpack.c.bf16 %v4188, %v4188
        %v4473 = vpack.c.bf16 %v4234, %v4234
        %v4474 = vpack.c.bf16 %v4280, %v4280
        %v4475 = vpack.c.bf16 %v4326, %v4326
        %v4476 = vpack.c.bf16 %v4372, %v4372
        %v4477 = vpack.c.bf16 %v4418, %v4418
        %v4478 = vpack.c.bf16 %v4464, %v4464
        %v4479 = vld [vmem:[#allocation10] sm:$0xf]
        %v4480 = vld [vmem:[#allocation10 + $0x4] sm:$0xf]
        %v4481 = vld [vmem:[#allocation10 + $0x8] sm:$0xf]
        %v4482 = vld [vmem:[#allocation10 + $0xc] sm:$0xf]
        %v4483 = vld [vmem:[#allocation10 + $0x10] sm:$0xf]
        %v4484 = vld [vmem:[#allocation10 + $0x14] sm:$0xf]
        %v4485 = vld [vmem:[#allocation10 + $0x18] sm:$0xf]
        %v4486 = vld [vmem:[#allocation10 + $0x1c] sm:$0xf]
        %v4487 = vld [vmem:[#allocation10 + $0x20] sm:$0xf]
        %v4488 = vld [vmem:[#allocation10 + $0x24] sm:$0xf]
        %v4489 = vld [vmem:[#allocation10 + $0x28] sm:$0xf]
        %v4490 = vld [vmem:[#allocation10 + $0x2c] sm:$0xf]
        %v4491 = vld [vmem:[#allocation10 + $0x30] sm:$0xf]
        %v4492 = vld [vmem:[#allocation10 + $0x34] sm:$0xf]
        %v4493 = vld [vmem:[#allocation10 + $0x38] sm:$0xf]
        %v4494 = vld [vmem:[#allocation10 + $0x3c] sm:$0xf]
        %v4495 = vld [vmem:[#allocation10 + $0x40] sm:$0xf]
        %v4496 = vld [vmem:[#allocation10 + $0x44] sm:$0xf]
        %v4497 = vld [vmem:[#allocation10 + $0x48] sm:$0xf]
        %v4498 = vld [vmem:[#allocation10 + $0x4c] sm:$0xf]
        %v4499 = vld [vmem:[#allocation10 + $0x50] sm:$0xf]
        %v4500 = vld [vmem:[#allocation10 + $0x54] sm:$0xf]
        %v4501 = vld [vmem:[#allocation10 + $0x58] sm:$0xf]
        %v4502 = vld [vmem:[#allocation10 + $0x5c] sm:$0xf]
        %v4503 = vld [vmem:[#allocation10 + $0x60] sm:$0xf]
        %v4504 = vld [vmem:[#allocation10 + $0x64] sm:$0xf]
        %v4505 = vld [vmem:[#allocation10 + $0x68] sm:$0xf]
        %v4506 = vld [vmem:[#allocation10 + $0x6c] sm:$0xf]
        %v4507 = vld [vmem:[#allocation10 + $0x70] sm:$0xf]
        %v4508 = vld [vmem:[#allocation10 + $0x74] sm:$0xf]
        %v4509 = vld [vmem:[#allocation10 + $0x78] sm:$0xf]
        %v4510 = vld [vmem:[#allocation10 + $0x7c] sm:$0xf]
        %v4511 = vld [vmem:[#allocation10 + $0x80] sm:$0xf]
        %v4512 = vld [vmem:[#allocation10 + $0x84] sm:$0xf]
        %v4513 = vld [vmem:[#allocation10 + $0x88] sm:$0xf]
        %v4514 = vld [vmem:[#allocation10 + $0x8c] sm:$0xf]
        %v4515 = vld [vmem:[#allocation10 + $0x90] sm:$0xf]
        %v4516 = vld [vmem:[#allocation10 + $0x94] sm:$0xf]
        %v4517 = vld [vmem:[#allocation10 + $0x98] sm:$0xf]
        %v4518 = vld [vmem:[#allocation10 + $0x9c] sm:$0xf]
        %v4519 = vld [vmem:[#allocation10 + $0xa0] sm:$0xf]
        %v4520 = vld [vmem:[#allocation10 + $0xa4] sm:$0xf]
        %v4521 = vld [vmem:[#allocation10 + $0xa8] sm:$0xf]
        %v4522 = vld [vmem:[#allocation10 + $0xac] sm:$0xf]
        %v4523 = vld [vmem:[#allocation10 + $0xb0] sm:$0xf]
        %v4524 = vld [vmem:[#allocation10 + $0xb4] sm:$0xf]
        %v4525 = vld [vmem:[#allocation10 + $0xb8] sm:$0xf]
        %v4526 = vld [vmem:[#allocation10 + $0xbc] sm:$0xf]
        %v4527 = vld [vmem:[#allocation10 + $0xc0] sm:$0xf]
        %v4528 = vld [vmem:[#allocation10 + $0xc4] sm:$0xf]
        %v4529 = vld [vmem:[#allocation10 + $0xc8] sm:$0xf]
        %v4530 = vld [vmem:[#allocation10 + $0xcc] sm:$0xf]
        %v4531 = vld [vmem:[#allocation10 + $0xd0] sm:$0xf]
        %v4532 = vld [vmem:[#allocation10 + $0xd4] sm:$0xf]
        %v4533 = vld [vmem:[#allocation10 + $0xd8] sm:$0xf]
        %v4534 = vld [vmem:[#allocation10 + $0xdc] sm:$0xf]
        %v4535 = vld [vmem:[#allocation10 + $0xe0] sm:$0xf]
        %v4536 = vld [vmem:[#allocation10 + $0xe4] sm:$0xf]
        %v4537 = vld [vmem:[#allocation10 + $0xe8] sm:$0xf]
        %v4538 = vld [vmem:[#allocation10 + $0xec] sm:$0xf]
        %v4539 = vld [vmem:[#allocation10 + $0xf0] sm:$0xf]
        %v4540 = vld [vmem:[#allocation10 + $0xf4] sm:$0xf]
        %v4541 = vld [vmem:[#allocation10 + $0xf8] sm:$0xf]
        %v4542 = vld [vmem:[#allocation10 + $0xfc] sm:$0xf]
        %v4543 = vld [vmem:[#allocation10 + $0x100] sm:$0xf]
        %v4544 = vld [vmem:[#allocation10 + $0x104] sm:$0xf]
        %v4545 = vld [vmem:[#allocation10 + $0x108] sm:$0xf]
        %v4546 = vld [vmem:[#allocation10 + $0x10c] sm:$0xf]
        %v4547 = vld [vmem:[#allocation10 + $0x110] sm:$0xf]
        %v4548 = vld [vmem:[#allocation10 + $0x114] sm:$0xf]
        %v4549 = vld [vmem:[#allocation10 + $0x118] sm:$0xf]
        %v4550 = vld [vmem:[#allocation10 + $0x11c] sm:$0xf]
        %v4551 = vld [vmem:[#allocation10 + $0x120] sm:$0xf]
        %v4552 = vld [vmem:[#allocation10 + $0x124] sm:$0xf]
        %v4553 = vld [vmem:[#allocation10 + $0x128] sm:$0xf]
        %v4554 = vld [vmem:[#allocation10 + $0x12c] sm:$0xf]
        %v4555 = vld [vmem:[#allocation10 + $0x130] sm:$0xf]
        %v4556 = vld [vmem:[#allocation10 + $0x134] sm:$0xf]
        %v4557 = vld [vmem:[#allocation10 + $0x138] sm:$0xf]
        %v4558 = vld [vmem:[#allocation10 + $0x13c] sm:$0xf]
        %v4559 = vld [vmem:[#allocation10 + $0x140] sm:$0xf]
        %v4560 = vld [vmem:[#allocation10 + $0x144] sm:$0xf]
        %v4561 = vld [vmem:[#allocation10 + $0x148] sm:$0xf]
        %v4562 = vld [vmem:[#allocation10 + $0x14c] sm:$0xf]
        %v4563 = vld [vmem:[#allocation10 + $0x150] sm:$0xf]
        %v4564 = vld [vmem:[#allocation10 + $0x154] sm:$0xf]
        %v4565 = vld [vmem:[#allocation10 + $0x158] sm:$0xf]
        %v4566 = vld [vmem:[#allocation10 + $0x15c] sm:$0xf]
        %v4567 = vld [vmem:[#allocation10 + $0x160] sm:$0xf]
        %v4568 = vld [vmem:[#allocation10 + $0x164] sm:$0xf]
        %v4569 = vld [vmem:[#allocation10 + $0x168] sm:$0xf]
        %v4570 = vld [vmem:[#allocation10 + $0x16c] sm:$0xf]
        %v4571 = vld [vmem:[#allocation10 + $0x170] sm:$0xf]
        %v4572 = vld [vmem:[#allocation10 + $0x174] sm:$0xf]
        %v4573 = vld [vmem:[#allocation10 + $0x178] sm:$0xf]
        %v4574 = vld [vmem:[#allocation10 + $0x17c] sm:$0xf]
        %v4575 = vld [vmem:[#allocation10 + $0x180] sm:$0xf]
        %v4576 = vld [vmem:[#allocation10 + $0x184] sm:$0xf]
        %v4577 = vld [vmem:[#allocation10 + $0x188] sm:$0xf]
        %v4578 = vld [vmem:[#allocation10 + $0x18c] sm:$0xf]
        %v4579 = vld [vmem:[#allocation10 + $0x190] sm:$0xf]
        %v4580 = vld [vmem:[#allocation10 + $0x194] sm:$0xf]
        %v4581 = vld [vmem:[#allocation10 + $0x198] sm:$0xf]
        %v4582 = vld [vmem:[#allocation10 + $0x19c] sm:$0xf]
        %v4583 = vld [vmem:[#allocation10 + $0x1a0] sm:$0xf]
        %v4584 = vld [vmem:[#allocation10 + $0x1a4] sm:$0xf]
        %v4585 = vld [vmem:[#allocation10 + $0x1a8] sm:$0xf]
        %v4586 = vld [vmem:[#allocation10 + $0x1ac] sm:$0xf]
        %v4587 = vld [vmem:[#allocation10 + $0x1b0] sm:$0xf]
        %v4588 = vld [vmem:[#allocation10 + $0x1b4] sm:$0xf]
        %v4589 = vld [vmem:[#allocation10 + $0x1b8] sm:$0xf]
        %v4590 = vld [vmem:[#allocation10 + $0x1bc] sm:$0xf]
        %v4591 = vld [vmem:[#allocation10 + $0x1c0] sm:$0xf]
        %v4592 = vld [vmem:[#allocation10 + $0x1c4] sm:$0xf]
        %v4593 = vld [vmem:[#allocation10 + $0x1c8] sm:$0xf]
        %v4594 = vld [vmem:[#allocation10 + $0x1cc] sm:$0xf]
        %v4595 = vld [vmem:[#allocation10 + $0x1d0] sm:$0xf]
        %v4596 = vld [vmem:[#allocation10 + $0x1d4] sm:$0xf]
        %v4597 = vld [vmem:[#allocation10 + $0x1d8] sm:$0xf]
        %v4598 = vld [vmem:[#allocation10 + $0x1dc] sm:$0xf]
        %v4599 = vld [vmem:[#allocation10 + $0x1e0] sm:$0xf]
        %v4600 = vld [vmem:[#allocation10 + $0x1e4] sm:$0xf]
        %v4601 = vld [vmem:[#allocation10 + $0x1e8] sm:$0xf]
        %v4602 = vld [vmem:[#allocation10 + $0x1ec] sm:$0xf]
        %v4603 = vld [vmem:[#allocation10 + $0x1f0] sm:$0xf]
        %v4604 = vld [vmem:[#allocation10 + $0x1f4] sm:$0xf]
        %v4605 = vld [vmem:[#allocation10 + $0x1f8] sm:$0xf]
        %v4606 = vld [vmem:[#allocation10 + $0x1fc] sm:$0xf]
        %v4607 = vld [vmem:[#allocation10 + $0x200] sm:$0xf]
        %v4608 = vld [vmem:[#allocation10 + $0x204] sm:$0xf]
        %v4609 = vld [vmem:[#allocation10 + $0x208] sm:$0xf]
        %v4610 = vld [vmem:[#allocation10 + $0x20c] sm:$0xf]
        %v4611 = vld [vmem:[#allocation10 + $0x210] sm:$0xf]
        %v4612 = vld [vmem:[#allocation10 + $0x214] sm:$0xf]
        %v4613 = vld [vmem:[#allocation10 + $0x218] sm:$0xf]
        %v4614 = vld [vmem:[#allocation10 + $0x21c] sm:$0xf]
        %v4615 = vld [vmem:[#allocation10 + $0x220] sm:$0xf]
        %v4616 = vld [vmem:[#allocation10 + $0x224] sm:$0xf]
        %v4617 = vld [vmem:[#allocation10 + $0x228] sm:$0xf]
        %v4618 = vld [vmem:[#allocation10 + $0x22c] sm:$0xf]
        %v4619 = vld [vmem:[#allocation10 + $0x230] sm:$0xf]
        %v4620 = vld [vmem:[#allocation10 + $0x234] sm:$0xf]
        %v4621 = vld [vmem:[#allocation10 + $0x238] sm:$0xf]
        %v4622 = vld [vmem:[#allocation10 + $0x23c] sm:$0xf]
        %v4623 = vld [vmem:[#allocation10 + $0x240] sm:$0xf]
        %v4624 = vld [vmem:[#allocation10 + $0x244] sm:$0xf]
        %v4625 = vld [vmem:[#allocation10 + $0x248] sm:$0xf]
        %v4626 = vld [vmem:[#allocation10 + $0x24c] sm:$0xf]
        %v4627 = vld [vmem:[#allocation10 + $0x250] sm:$0xf]
        %v4628 = vld [vmem:[#allocation10 + $0x254] sm:$0xf]
        %v4629 = vld [vmem:[#allocation10 + $0x258] sm:$0xf]
        %v4630 = vld [vmem:[#allocation10 + $0x25c] sm:$0xf]
        %v4631 = vld [vmem:[#allocation10 + $0x260] sm:$0xf]
        %v4632 = vld [vmem:[#allocation10 + $0x264] sm:$0xf]
        %v4633 = vld [vmem:[#allocation10 + $0x268] sm:$0xf]
        %v4634 = vld [vmem:[#allocation10 + $0x26c] sm:$0xf]
        %v4635 = vld [vmem:[#allocation10 + $0x270] sm:$0xf]
        %v4636 = vld [vmem:[#allocation10 + $0x274] sm:$0xf]
        %v4637 = vld [vmem:[#allocation10 + $0x278] sm:$0xf]
        %v4638 = vld [vmem:[#allocation10 + $0x27c] sm:$0xf]
        %v4655 = vunpack.c.l.b16 %v4479
        %v4656 = vunpack.c.l.b16 %v4480
        %v4657 = vunpack.c.l.b16 %v4481
        %v4658 = vunpack.c.l.b16 %v4482
        %v4659 = vunpack.c.l.b16 %v4483
        %v4660 = vunpack.c.l.b16 %v4484
        %v4661 = vunpack.c.l.b16 %v4485
        %v4662 = vunpack.c.l.b16 %v4486
        %v4663 = vunpack.c.l.b16 %v4487
        %v4664 = vunpack.c.l.b16 %v4488
        %v4665 = vunpack.c.l.b16 %v4489
        %v4666 = vunpack.c.l.b16 %v4490
        %v4667 = vunpack.c.l.b16 %v4491
        %v4668 = vunpack.c.l.b16 %v4492
        %v4669 = vunpack.c.l.b16 %v4493
        %v4670 = vunpack.c.l.b16 %v4494
        %v4671 = vpack.c.b16 %v4656, %v4655
        %v4672 = vpack.c.b16 %v4658, %v4657
        %v4673 = vpack.c.b16 %v4660, %v4659
        %v4674 = vpack.c.b16 %v4662, %v4661
        %v4675 = vpack.c.b16 %v4664, %v4663
        %v4676 = vpack.c.b16 %v4666, %v4665
        %v4677 = vpack.c.b16 %v4668, %v4667
        %v4678 = vpack.c.b16 %v4670, %v4669
        %4687 = vmatprep.subr.bf16.mxu0 0
        %4688 = vmatpush1.bf16.msra.mxu0 %v4671
        %4689 = vmatprep.subr.bf16.mxu0 0
        %4690 = vmatpush1.bf16.msra.mxu0 %v4672
        %4691 = vmatprep.subr.bf16.mxu0 0
        %4692 = vmatpush1.bf16.msra.mxu0 %v4673
        %4693 = vmatprep.subr.bf16.mxu0 0
        %4694 = vmatpush1.bf16.msra.mxu0 %v4674
        %4695 = vmatprep.subr.bf16.mxu0 0
        %4696 = vmatpush1.bf16.msra.mxu0 %v4675
        %4697 = vmatprep.subr.bf16.mxu0 0
        %4698 = vmatpush1.bf16.msra.mxu0 %v4676
        %4699 = vmatprep.subr.bf16.mxu0 0
        %4700 = vmatpush1.bf16.msra.mxu0 %v4677
        %4701 = vmatprep.subr.bf16.mxu0 0
        %4702 = vmatpush1.bf16.msra.mxu0 %v4678
        %4703 = vmatprep.subr.bf16.mxu0 0
        %4704 = vmatpush1.bf16.msra.mxu0 0
        %4705 = vmatprep.subr.bf16.mxu0 0
        %4706 = vmatpush1.bf16.msra.mxu0 0
        %4707 = vmatprep.subr.bf16.mxu0 0
        %4708 = vmatpush1.bf16.msra.mxu0 0
        %4709 = vmatprep.subr.bf16.mxu0 0
        %4710 = vmatpush1.bf16.msra.mxu0 0
        %4711 = vmatprep.subr.bf16.mxu0 0
        %4712 = vmatpush1.bf16.msra.mxu0 0
        %4713 = vmatprep.subr.bf16.mxu0 0
        %4714 = vmatpush1.bf16.msra.mxu0 0
        %4715 = vmatprep.subr.bf16.mxu0 0
        %4716 = vmatpush1.bf16.msra.mxu0 0
        %4717 = vmatprep.subr.bf16.mxu0 0
        %4718 = vmatpush1.bf16.msra.mxu0 0
        %4719 = vmatprep.mubr.bf16.mxu0 0
        %4720 = vmatmul.mubr.bf16.gmra.mrb[0].mxu0 %v4469
        %v4721 = vpop.f32.mrb[0].mxu0
        %v4722 = vadd.f32 0.0, %v4721
        %v4723 = vpop.f32.mrb[0].mxu0
        %v4724 = vpop.f32.mrb[0].mxu0
        %v4725 = vpop.f32.mrb[0].mxu0
        %4726 = vdwg.mxu0
        %v4743 = vunpack.c.l.b16 %v4495
        %v4744 = vunpack.c.l.b16 %v4496
        %v4745 = vunpack.c.l.b16 %v4497
        %v4746 = vunpack.c.l.b16 %v4498
        %v4747 = vunpack.c.l.b16 %v4499
        %v4748 = vunpack.c.l.b16 %v4500
        %v4749 = vunpack.c.l.b16 %v4501
        %v4750 = vunpack.c.l.b16 %v4502
        %v4751 = vunpack.c.l.b16 %v4503
        %v4752 = vunpack.c.l.b16 %v4504
        %v4753 = vunpack.c.l.b16 %v4505
        %v4754 = vunpack.c.l.b16 %v4506
        %v4755 = vunpack.c.l.b16 %v4507
        %v4756 = vunpack.c.l.b16 %v4508
        %v4757 = vunpack.c.l.b16 %v4509
        %v4758 = vunpack.c.l.b16 %v4510
        %v4759 = vpack.c.b16 %v4744, %v4743
        %v4760 = vpack.c.b16 %v4746, %v4745
        %v4761 = vpack.c.b16 %v4748, %v4747
        %v4762 = vpack.c.b16 %v4750, %v4749
        %v4763 = vpack.c.b16 %v4752, %v4751
        %v4764 = vpack.c.b16 %v4754, %v4753
        %v4765 = vpack.c.b16 %v4756, %v4755
        %v4766 = vpack.c.b16 %v4758, %v4757
        %4775 = vmatprep.subr.bf16.mxu0 0
        %4776 = vmatpush1.bf16.msra.mxu0 %v4759
        %4777 = vmatprep.subr.bf16.mxu0 0
        %4778 = vmatpush1.bf16.msra.mxu0 %v4760
        %4779 = vmatprep.subr.bf16.mxu0 0
        %4780 = vmatpush1.bf16.msra.mxu0 %v4761
        %4781 = vmatprep.subr.bf16.mxu0 0
        %4782 = vmatpush1.bf16.msra.mxu0 %v4762
        %4783 = vmatprep.subr.bf16.mxu0 0
        %4784 = vmatpush1.bf16.msra.mxu0 %v4763
        %4785 = vmatprep.subr.bf16.mxu0 0
        %4786 = vmatpush1.bf16.msra.mxu0 %v4764
        %4787 = vmatprep.subr.bf16.mxu0 0
        %4788 = vmatpush1.bf16.msra.mxu0 %v4765
        %4789 = vmatprep.subr.bf16.mxu0 0
        %4790 = vmatpush1.bf16.msra.mxu0 %v4766
        %4791 = vmatprep.subr.bf16.mxu0 0
        %4792 = vmatpush1.bf16.msra.mxu0 0
        %4793 = vmatprep.subr.bf16.mxu0 0
        %4794 = vmatpush1.bf16.msra.mxu0 0
        %4795 = vmatprep.subr.bf16.mxu0 0
        %4796 = vmatpush1.bf16.msra.mxu0 0
        %4797 = vmatprep.subr.bf16.mxu0 0
        %4798 = vmatpush1.bf16.msra.mxu0 0
        %4799 = vmatprep.subr.bf16.mxu0 0
        %4800 = vmatpush1.bf16.msra.mxu0 0
        %4801 = vmatprep.subr.bf16.mxu0 0
        %4802 = vmatpush1.bf16.msra.mxu0 0
        %4803 = vmatprep.subr.bf16.mxu0 0
        %4804 = vmatpush1.bf16.msra.mxu0 0
        %4805 = vmatprep.subr.bf16.mxu0 0
        %4806 = vmatpush1.bf16.msra.mxu0 0
        %4807 = vmatprep.mubr.bf16.mxu0 0
        %4808 = vmatmul.mubr.bf16.gmra.mrb[0].mxu0 %v4470
        %v4809 = vpop.f32.mrb[0].mxu0
        %v4810 = vadd.f32 0.0, %v4809
        %v4811 = vpop.f32.mrb[0].mxu0
        %v4812 = vpop.f32.mrb[0].mxu0
        %v4813 = vpop.f32.mrb[0].mxu0
        %4814 = vdwg.mxu0
        %v4831 = vunpack.c.l.b16 %v4511
        %v4832 = vunpack.c.l.b16 %v4512
        %v4833 = vunpack.c.l.b16 %v4513
        %v4834 = vunpack.c.l.b16 %v4514
        %v4835 = vunpack.c.l.b16 %v4515
        %v4836 = vunpack.c.l.b16 %v4516
        %v4837 = vunpack.c.l.b16 %v4517
        %v4838 = vunpack.c.l.b16 %v4518
        %v4839 = vunpack.c.l.b16 %v4519
        %v4840 = vunpack.c.l.b16 %v4520
        %v4841 = vunpack.c.l.b16 %v4521
        %v4842 = vunpack.c.l.b16 %v4522
        %v4843 = vunpack.c.l.b16 %v4523
        %v4844 = vunpack.c.l.b16 %v4524
        %v4845 = vunpack.c.l.b16 %v4525
        %v4846 = vunpack.c.l.b16 %v4526
        %v4847 = vpack.c.b16 %v4832, %v4831
        %v4848 = vpack.c.b16 %v4834, %v4833
        %v4849 = vpack.c.b16 %v4836, %v4835
        %v4850 = vpack.c.b16 %v4838, %v4837
        %v4851 = vpack.c.b16 %v4840, %v4839
        %v4852 = vpack.c.b16 %v4842, %v4841
        %v4853 = vpack.c.b16 %v4844, %v4843
        %v4854 = vpack.c.b16 %v4846, %v4845
        %4863 = vmatprep.subr.bf16.mxu0 0
        %4864 = vmatpush1.bf16.msra.mxu0 %v4847
        %4865 = vmatprep.subr.bf16.mxu0 0
        %4866 = vmatpush1.bf16.msra.mxu0 %v4848
        %4867 = vmatprep.subr.bf16.mxu0 0
        %4868 = vmatpush1.bf16.msra.mxu0 %v4849
        %4869 = vmatprep.subr.bf16.mxu0 0
        %4870 = vmatpush1.bf16.msra.mxu0 %v4850
        %4871 = vmatprep.subr.bf16.mxu0 0
        %4872 = vmatpush1.bf16.msra.mxu0 %v4851
        %4873 = vmatprep.subr.bf16.mxu0 0
        %4874 = vmatpush1.bf16.msra.mxu0 %v4852
        %4875 = vmatprep.subr.bf16.mxu0 0
        %4876 = vmatpush1.bf16.msra.mxu0 %v4853
        %4877 = vmatprep.subr.bf16.mxu0 0
        %4878 = vmatpush1.bf16.msra.mxu0 %v4854
        %4879 = vmatprep.subr.bf16.mxu0 0
        %4880 = vmatpush1.bf16.msra.mxu0 0
        %4881 = vmatprep.subr.bf16.mxu0 0
        %4882 = vmatpush1.bf16.msra.mxu0 0
        %4883 = vmatprep.subr.bf16.mxu0 0
        %4884 = vmatpush1.bf16.msra.mxu0 0
        %4885 = vmatprep.subr.bf16.mxu0 0
        %4886 = vmatpush1.bf16.msra.mxu0 0
        %4887 = vmatprep.subr.bf16.mxu0 0
        %4888 = vmatpush1.bf16.msra.mxu0 0
        %4889 = vmatprep.subr.bf16.mxu0 0
        %4890 = vmatpush1.bf16.msra.mxu0 0
        %4891 = vmatprep.subr.bf16.mxu0 0
        %4892 = vmatpush1.bf16.msra.mxu0 0
        %4893 = vmatprep.subr.bf16.mxu0 0
        %4894 = vmatpush1.bf16.msra.mxu0 0
        %4895 = vmatprep.mubr.bf16.mxu0 0
        %4896 = vmatmul.mubr.bf16.gmra.mrb[0].mxu0 %v4471
        %v4897 = vpop.f32.mrb[0].mxu0
        %v4898 = vadd.f32 0.0, %v4897
        %v4899 = vpop.f32.mrb[0].mxu0
        %v4900 = vpop.f32.mrb[0].mxu0
        %v4901 = vpop.f32.mrb[0].mxu0
        %4902 = vdwg.mxu0
        %v4919 = vunpack.c.l.b16 %v4527
        %v4920 = vunpack.c.l.b16 %v4528
        %v4921 = vunpack.c.l.b16 %v4529
        %v4922 = vunpack.c.l.b16 %v4530
        %v4923 = vunpack.c.l.b16 %v4531
        %v4924 = vunpack.c.l.b16 %v4532
        %v4925 = vunpack.c.l.b16 %v4533
        %v4926 = vunpack.c.l.b16 %v4534
        %v4927 = vunpack.c.l.b16 %v4535
        %v4928 = vunpack.c.l.b16 %v4536
        %v4929 = vunpack.c.l.b16 %v4537
        %v4930 = vunpack.c.l.b16 %v4538
        %v4931 = vunpack.c.l.b16 %v4539
        %v4932 = vunpack.c.l.b16 %v4540
        %v4933 = vunpack.c.l.b16 %v4541
        %v4934 = vunpack.c.l.b16 %v4542
        %v4935 = vpack.c.b16 %v4920, %v4919
        %v4936 = vpack.c.b16 %v4922, %v4921
        %v4937 = vpack.c.b16 %v4924, %v4923
        %v4938 = vpack.c.b16 %v4926, %v4925
        %v4939 = vpack.c.b16 %v4928, %v4927
        %v4940 = vpack.c.b16 %v4930, %v4929
        %v4941 = vpack.c.b16 %v4932, %v4931
        %v4942 = vpack.c.b16 %v4934, %v4933
        %4951 = vmatprep.subr.bf16.mxu0 0
        %4952 = vmatpush1.bf16.msra.mxu0 %v4935
        %4953 = vmatprep.subr.bf16.mxu0 0
        %4954 = vmatpush1.bf16.msra.mxu0 %v4936
        %4955 = vmatprep.subr.bf16.mxu0 0
        %4956 = vmatpush1.bf16.msra.mxu0 %v4937
        %4957 = vmatprep.subr.bf16.mxu0 0
        %4958 = vmatpush1.bf16.msra.mxu0 %v4938
        %4959 = vmatprep.subr.bf16.mxu0 0
        %4960 = vmatpush1.bf16.msra.mxu0 %v4939
        %4961 = vmatprep.subr.bf16.mxu0 0
        %4962 = vmatpush1.bf16.msra.mxu0 %v4940
        %4963 = vmatprep.subr.bf16.mxu0 0
        %4964 = vmatpush1.bf16.msra.mxu0 %v4941
        %4965 = vmatprep.subr.bf16.mxu0 0
        %4966 = vmatpush1.bf16.msra.mxu0 %v4942
        %4967 = vmatprep.subr.bf16.mxu0 0
        %4968 = vmatpush1.bf16.msra.mxu0 0
        %4969 = vmatprep.subr.bf16.mxu0 0
        %4970 = vmatpush1.bf16.msra.mxu0 0
        %4971 = vmatprep.subr.bf16.mxu0 0
        %4972 = vmatpush1.bf16.msra.mxu0 0
        %4973 = vmatprep.subr.bf16.mxu0 0
        %4974 = vmatpush1.bf16.msra.mxu0 0
        %4975 = vmatprep.subr.bf16.mxu0 0
        %4976 = vmatpush1.bf16.msra.mxu0 0
        %4977 = vmatprep.subr.bf16.mxu0 0
        %4978 = vmatpush1.bf16.msra.mxu0 0
        %4979 = vmatprep.subr.bf16.mxu0 0
        %4980 = vmatpush1.bf16.msra.mxu0 0
        %4981 = vmatprep.subr.bf16.mxu0 0
        %4982 = vmatpush1.bf16.msra.mxu0 0
        %4983 = vmatprep.mubr.bf16.mxu0 0
        %4984 = vmatmul.mubr.bf16.gmra.mrb[0].mxu0 %v4472
        %v4985 = vpop.f32.mrb[0].mxu0
        %v4986 = vadd.f32 0.0, %v4985
        %v4987 = vpop.f32.mrb[0].mxu0
        %v4988 = vpop.f32.mrb[0].mxu0
        %v4989 = vpop.f32.mrb[0].mxu0
        %4990 = vdwg.mxu0
        %v5007 = vunpack.c.l.b16 %v4543
        %v5008 = vunpack.c.l.b16 %v4544
        %v5009 = vunpack.c.l.b16 %v4545
        %v5010 = vunpack.c.l.b16 %v4546
        %v5011 = vunpack.c.l.b16 %v4547
        %v5012 = vunpack.c.l.b16 %v4548
        %v5013 = vunpack.c.l.b16 %v4549
        %v5014 = vunpack.c.l.b16 %v4550
        %v5015 = vunpack.c.l.b16 %v4551
        %v5016 = vunpack.c.l.b16 %v4552
        %v5017 = vunpack.c.l.b16 %v4553
        %v5018 = vunpack.c.l.b16 %v4554
        %v5019 = vunpack.c.l.b16 %v4555
        %v5020 = vunpack.c.l.b16 %v4556
        %v5021 = vunpack.c.l.b16 %v4557
        %v5022 = vunpack.c.l.b16 %v4558
        %v5023 = vpack.c.b16 %v5008, %v5007
        %v5024 = vpack.c.b16 %v5010, %v5009
        %v5025 = vpack.c.b16 %v5012, %v5011
        %v5026 = vpack.c.b16 %v5014, %v5013
        %v5027 = vpack.c.b16 %v5016, %v5015
        %v5028 = vpack.c.b16 %v5018, %v5017
        %v5029 = vpack.c.b16 %v5020, %v5019
        %v5030 = vpack.c.b16 %v5022, %v5021
        %5039 = vmatprep.subr.bf16.mxu0 0
        %5040 = vmatpush1.bf16.msra.mxu0 %v5023
        %5041 = vmatprep.subr.bf16.mxu0 0
        %5042 = vmatpush1.bf16.msra.mxu0 %v5024
        %5043 = vmatprep.subr.bf16.mxu0 0
        %5044 = vmatpush1.bf16.msra.mxu0 %v5025
        %5045 = vmatprep.subr.bf16.mxu0 0
        %5046 = vmatpush1.bf16.msra.mxu0 %v5026
        %5047 = vmatprep.subr.bf16.mxu0 0
        %5048 = vmatpush1.bf16.msra.mxu0 %v5027
        %5049 = vmatprep.subr.bf16.mxu0 0
        %5050 = vmatpush1.bf16.msra.mxu0 %v5028
        %5051 = vmatprep.subr.bf16.mxu0 0
        %5052 = vmatpush1.bf16.msra.mxu0 %v5029
        %5053 = vmatprep.subr.bf16.mxu0 0
        %5054 = vmatpush1.bf16.msra.mxu0 %v5030
        %5055 = vmatprep.subr.bf16.mxu0 0
        %5056 = vmatpush1.bf16.msra.mxu0 0
        %5057 = vmatprep.subr.bf16.mxu0 0
        %5058 = vmatpush1.bf16.msra.mxu0 0
        %5059 = vmatprep.subr.bf16.mxu0 0
        %5060 = vmatpush1.bf16.msra.mxu0 0
        %5061 = vmatprep.subr.bf16.mxu0 0
        %5062 = vmatpush1.bf16.msra.mxu0 0
        %5063 = vmatprep.subr.bf16.mxu0 0
        %5064 = vmatpush1.bf16.msra.mxu0 0
        %5065 = vmatprep.subr.bf16.mxu0 0
        %5066 = vmatpush1.bf16.msra.mxu0 0
        %5067 = vmatprep.subr.bf16.mxu0 0
        %5068 = vmatpush1.bf16.msra.mxu0 0
        %5069 = vmatprep.subr.bf16.mxu0 0
        %5070 = vmatpush1.bf16.msra.mxu0 0
        %5071 = vmatprep.mubr.bf16.mxu0 0
        %5072 = vmatmul.mubr.bf16.gmra.mrb[0].mxu0 %v4473
        %v5073 = vpop.f32.mrb[0].mxu0
        %v5074 = vadd.f32 0.0, %v5073
        %v5075 = vpop.f32.mrb[0].mxu0
        %v5076 = vpop.f32.mrb[0].mxu0
        %v5077 = vpop.f32.mrb[0].mxu0
        %5078 = vdwg.mxu0
        %v5095 = vunpack.c.l.b16 %v4559
        %v5096 = vunpack.c.l.b16 %v4560
        %v5097 = vunpack.c.l.b16 %v4561
        %v5098 = vunpack.c.l.b16 %v4562
        %v5099 = vunpack.c.l.b16 %v4563
        %v5100 = vunpack.c.l.b16 %v4564
        %v5101 = vunpack.c.l.b16 %v4565
        %v5102 = vunpack.c.l.b16 %v4566
        %v5103 = vunpack.c.l.b16 %v4567
        %v5104 = vunpack.c.l.b16 %v4568
        %v5105 = vunpack.c.l.b16 %v4569
        %v5106 = vunpack.c.l.b16 %v4570
        %v5107 = vunpack.c.l.b16 %v4571
        %v5108 = vunpack.c.l.b16 %v4572
        %v5109 = vunpack.c.l.b16 %v4573
        %v5110 = vunpack.c.l.b16 %v4574
        %v5111 = vpack.c.b16 %v5096, %v5095
        %v5112 = vpack.c.b16 %v5098, %v5097
        %v5113 = vpack.c.b16 %v5100, %v5099
        %v5114 = vpack.c.b16 %v5102, %v5101
        %v5115 = vpack.c.b16 %v5104, %v5103
        %v5116 = vpack.c.b16 %v5106, %v5105
        %v5117 = vpack.c.b16 %v5108, %v5107
        %v5118 = vpack.c.b16 %v5110, %v5109
        %5127 = vmatprep.subr.bf16.mxu0 0
        %5128 = vmatpush1.bf16.msra.mxu0 %v5111
        %5129 = vmatprep.subr.bf16.mxu0 0
        %5130 = vmatpush1.bf16.msra.mxu0 %v5112
        %5131 = vmatprep.subr.bf16.mxu0 0
        %5132 = vmatpush1.bf16.msra.mxu0 %v5113
        %5133 = vmatprep.subr.bf16.mxu0 0
        %5134 = vmatpush1.bf16.msra.mxu0 %v5114
        %5135 = vmatprep.subr.bf16.mxu0 0
        %5136 = vmatpush1.bf16.msra.mxu0 %v5115
        %5137 = vmatprep.subr.bf16.mxu0 0
        %5138 = vmatpush1.bf16.msra.mxu0 %v5116
        %5139 = vmatprep.subr.bf16.mxu0 0
        %5140 = vmatpush1.bf16.msra.mxu0 %v5117
        %5141 = vmatprep.subr.bf16.mxu0 0
        %5142 = vmatpush1.bf16.msra.mxu0 %v5118
        %5143 = vmatprep.subr.bf16.mxu0 0
        %5144 = vmatpush1.bf16.msra.mxu0 0
        %5145 = vmatprep.subr.bf16.mxu0 0
        %5146 = vmatpush1.bf16.msra.mxu0 0
        %5147 = vmatprep.subr.bf16.mxu0 0
        %5148 = vmatpush1.bf16.msra.mxu0 0
        %5149 = vmatprep.subr.bf16.mxu0 0
        %5150 = vmatpush1.bf16.msra.mxu0 0
        %5151 = vmatprep.subr.bf16.mxu0 0
        %5152 = vmatpush1.bf16.msra.mxu0 0
        %5153 = vmatprep.subr.bf16.mxu0 0
        %5154 = vmatpush1.bf16.msra.mxu0 0
        %5155 = vmatprep.subr.bf16.mxu0 0
        %5156 = vmatpush1.bf16.msra.mxu0 0
        %5157 = vmatprep.subr.bf16.mxu0 0
        %5158 = vmatpush1.bf16.msra.mxu0 0
        %5159 = vmatprep.mubr.bf16.mxu0 0
        %5160 = vmatmul.mubr.bf16.gmra.mrb[0].mxu0 %v4474
        %v5161 = vpop.f32.mrb[0].mxu0
        %v5162 = vadd.f32 0.0, %v5161
        %v5163 = vpop.f32.mrb[0].mxu0
        %v5164 = vpop.f32.mrb[0].mxu0
        %v5165 = vpop.f32.mrb[0].mxu0
        %5166 = vdwg.mxu0
        %v5183 = vunpack.c.l.b16 %v4575
        %v5184 = vunpack.c.l.b16 %v4576
        %v5185 = vunpack.c.l.b16 %v4577
        %v5186 = vunpack.c.l.b16 %v4578
        %v5187 = vunpack.c.l.b16 %v4579
        %v5188 = vunpack.c.l.b16 %v4580
        %v5189 = vunpack.c.l.b16 %v4581
        %v5190 = vunpack.c.l.b16 %v4582
        %v5191 = vunpack.c.l.b16 %v4583
        %v5192 = vunpack.c.l.b16 %v4584
        %v5193 = vunpack.c.l.b16 %v4585
        %v5194 = vunpack.c.l.b16 %v4586
        %v5195 = vunpack.c.l.b16 %v4587
        %v5196 = vunpack.c.l.b16 %v4588
        %v5197 = vunpack.c.l.b16 %v4589
        %v5198 = vunpack.c.l.b16 %v4590
        %v5199 = vpack.c.b16 %v5184, %v5183
        %v5200 = vpack.c.b16 %v5186, %v5185
        %v5201 = vpack.c.b16 %v5188, %v5187
        %v5202 = vpack.c.b16 %v5190, %v5189
        %v5203 = vpack.c.b16 %v5192, %v5191
        %v5204 = vpack.c.b16 %v5194, %v5193
        %v5205 = vpack.c.b16 %v5196, %v5195
        %v5206 = vpack.c.b16 %v5198, %v5197
        %5215 = vmatprep.subr.bf16.mxu0 0
        %5216 = vmatpush1.bf16.msra.mxu0 %v5199
        %5217 = vmatprep.subr.bf16.mxu0 0
        %5218 = vmatpush1.bf16.msra.mxu0 %v5200
        %5219 = vmatprep.subr.bf16.mxu0 0
        %5220 = vmatpush1.bf16.msra.mxu0 %v5201
        %5221 = vmatprep.subr.bf16.mxu0 0
        %5222 = vmatpush1.bf16.msra.mxu0 %v5202
        %5223 = vmatprep.subr.bf16.mxu0 0
        %5224 = vmatpush1.bf16.msra.mxu0 %v5203
        %5225 = vmatprep.subr.bf16.mxu0 0
        %5226 = vmatpush1.bf16.msra.mxu0 %v5204
        %5227 = vmatprep.subr.bf16.mxu0 0
        %5228 = vmatpush1.bf16.msra.mxu0 %v5205
        %5229 = vmatprep.subr.bf16.mxu0 0
        %5230 = vmatpush1.bf16.msra.mxu0 %v5206
        %5231 = vmatprep.subr.bf16.mxu0 0
        %5232 = vmatpush1.bf16.msra.mxu0 0
        %5233 = vmatprep.subr.bf16.mxu0 0
        %5234 = vmatpush1.bf16.msra.mxu0 0
        %5235 = vmatprep.subr.bf16.mxu0 0
        %5236 = vmatpush1.bf16.msra.mxu0 0
        %5237 = vmatprep.subr.bf16.mxu0 0
        %5238 = vmatpush1.bf16.msra.mxu0 0
        %5239 = vmatprep.subr.bf16.mxu0 0
        %5240 = vmatpush1.bf16.msra.mxu0 0
        %5241 = vmatprep.subr.bf16.mxu0 0
        %5242 = vmatpush1.bf16.msra.mxu0 0
        %5243 = vmatprep.subr.bf16.mxu0 0
        %5244 = vmatpush1.bf16.msra.mxu0 0
        %5245 = vmatprep.subr.bf16.mxu0 0
        %5246 = vmatpush1.bf16.msra.mxu0 0
        %5247 = vmatprep.mubr.bf16.mxu0 0
        %5248 = vmatmul.mubr.bf16.gmra.mrb[0].mxu0 %v4475
        %v5249 = vpop.f32.mrb[0].mxu0
        %v5250 = vadd.f32 0.0, %v5249
        %v5251 = vpop.f32.mrb[0].mxu0
        %v5252 = vpop.f32.mrb[0].mxu0
        %v5253 = vpop.f32.mrb[0].mxu0
        %5254 = vdwg.mxu0
        %v5271 = vunpack.c.l.b16 %v4591
        %v5272 = vunpack.c.l.b16 %v4592
        %v5273 = vunpack.c.l.b16 %v4593
        %v5274 = vunpack.c.l.b16 %v4594
        %v5275 = vunpack.c.l.b16 %v4595
        %v5276 = vunpack.c.l.b16 %v4596
        %v5277 = vunpack.c.l.b16 %v4597
        %v5278 = vunpack.c.l.b16 %v4598
        %v5279 = vunpack.c.l.b16 %v4599
        %v5280 = vunpack.c.l.b16 %v4600
        %v5281 = vunpack.c.l.b16 %v4601
        %v5282 = vunpack.c.l.b16 %v4602
        %v5283 = vunpack.c.l.b16 %v4603
        %v5284 = vunpack.c.l.b16 %v4604
        %v5285 = vunpack.c.l.b16 %v4605
        %v5286 = vunpack.c.l.b16 %v4606
        %v5287 = vpack.c.b16 %v5272, %v5271
        %v5288 = vpack.c.b16 %v5274, %v5273
        %v5289 = vpack.c.b16 %v5276, %v5275
        %v5290 = vpack.c.b16 %v5278, %v5277
        %v5291 = vpack.c.b16 %v5280, %v5279
        %v5292 = vpack.c.b16 %v5282, %v5281
        %v5293 = vpack.c.b16 %v5284, %v5283
        %v5294 = vpack.c.b16 %v5286, %v5285
        %5303 = vmatprep.subr.bf16.mxu0 0
        %5304 = vmatpush1.bf16.msra.mxu0 %v5287
        %5305 = vmatprep.subr.bf16.mxu0 0
        %5306 = vmatpush1.bf16.msra.mxu0 %v5288
        %5307 = vmatprep.subr.bf16.mxu0 0
        %5308 = vmatpush1.bf16.msra.mxu0 %v5289
        %5309 = vmatprep.subr.bf16.mxu0 0
        %5310 = vmatpush1.bf16.msra.mxu0 %v5290
        %5311 = vmatprep.subr.bf16.mxu0 0
        %5312 = vmatpush1.bf16.msra.mxu0 %v5291
        %5313 = vmatprep.subr.bf16.mxu0 0
        %5314 = vmatpush1.bf16.msra.mxu0 %v5292
        %5315 = vmatprep.subr.bf16.mxu0 0
        %5316 = vmatpush1.bf16.msra.mxu0 %v5293
        %5317 = vmatprep.subr.bf16.mxu0 0
        %5318 = vmatpush1.bf16.msra.mxu0 %v5294
        %5319 = vmatprep.subr.bf16.mxu0 0
        %5320 = vmatpush1.bf16.msra.mxu0 0
        %5321 = vmatprep.subr.bf16.mxu0 0
        %5322 = vmatpush1.bf16.msra.mxu0 0
        %5323 = vmatprep.subr.bf16.mxu0 0
        %5324 = vmatpush1.bf16.msra.mxu0 0
        %5325 = vmatprep.subr.bf16.mxu0 0
        %5326 = vmatpush1.bf16.msra.mxu0 0
        %5327 = vmatprep.subr.bf16.mxu0 0
        %5328 = vmatpush1.bf16.msra.mxu0 0
        %5329 = vmatprep.subr.bf16.mxu0 0
        %5330 = vmatpush1.bf16.msra.mxu0 0
        %5331 = vmatprep.subr.bf16.mxu0 0
        %5332 = vmatpush1.bf16.msra.mxu0 0
        %5333 = vmatprep.subr.bf16.mxu0 0
        %5334 = vmatpush1.bf16.msra.mxu0 0
        %5335 = vmatprep.mubr.bf16.mxu0 0
        %5336 = vmatmul.mubr.bf16.gmra.mrb[0].mxu0 %v4476
        %v5337 = vpop.f32.mrb[0].mxu0
        %v5338 = vadd.f32 0.0, %v5337
        %v5339 = vpop.f32.mrb[0].mxu0
        %v5340 = vpop.f32.mrb[0].mxu0
        %v5341 = vpop.f32.mrb[0].mxu0
        %5342 = vdwg.mxu0
        %v5359 = vunpack.c.l.b16 %v4607
        %v5360 = vunpack.c.l.b16 %v4608
        %v5361 = vunpack.c.l.b16 %v4609
        %v5362 = vunpack.c.l.b16 %v4610
        %v5363 = vunpack.c.l.b16 %v4611
        %v5364 = vunpack.c.l.b16 %v4612
        %v5365 = vunpack.c.l.b16 %v4613
        %v5366 = vunpack.c.l.b16 %v4614
        %v5367 = vunpack.c.l.b16 %v4615
        %v5368 = vunpack.c.l.b16 %v4616
        %v5369 = vunpack.c.l.b16 %v4617
        %v5370 = vunpack.c.l.b16 %v4618
        %v5371 = vunpack.c.l.b16 %v4619
        %v5372 = vunpack.c.l.b16 %v4620
        %v5373 = vunpack.c.l.b16 %v4621
        %v5374 = vunpack.c.l.b16 %v4622
        %v5375 = vpack.c.b16 %v5360, %v5359
        %v5376 = vpack.c.b16 %v5362, %v5361
        %v5377 = vpack.c.b16 %v5364, %v5363
        %v5378 = vpack.c.b16 %v5366, %v5365
        %v5379 = vpack.c.b16 %v5368, %v5367
        %v5380 = vpack.c.b16 %v5370, %v5369
        %v5381 = vpack.c.b16 %v5372, %v5371
        %v5382 = vpack.c.b16 %v5374, %v5373
        %5391 = vmatprep.subr.bf16.mxu0 0
        %5392 = vmatpush1.bf16.msra.mxu0 %v5375
        %5393 = vmatprep.subr.bf16.mxu0 0
        %5394 = vmatpush1.bf16.msra.mxu0 %v5376
        %5395 = vmatprep.subr.bf16.mxu0 0
        %5396 = vmatpush1.bf16.msra.mxu0 %v5377
        %5397 = vmatprep.subr.bf16.mxu0 0
        %5398 = vmatpush1.bf16.msra.mxu0 %v5378
        %5399 = vmatprep.subr.bf16.mxu0 0
        %5400 = vmatpush1.bf16.msra.mxu0 %v5379
        %5401 = vmatprep.subr.bf16.mxu0 0
        %5402 = vmatpush1.bf16.msra.mxu0 %v5380
        %5403 = vmatprep.subr.bf16.mxu0 0
        %5404 = vmatpush1.bf16.msra.mxu0 %v5381
        %5405 = vmatprep.subr.bf16.mxu0 0
        %5406 = vmatpush1.bf16.msra.mxu0 %v5382
        %5407 = vmatprep.subr.bf16.mxu0 0
        %5408 = vmatpush1.bf16.msra.mxu0 0
        %5409 = vmatprep.subr.bf16.mxu0 0
        %5410 = vmatpush1.bf16.msra.mxu0 0
        %5411 = vmatprep.subr.bf16.mxu0 0
        %5412 = vmatpush1.bf16.msra.mxu0 0
        %5413 = vmatprep.subr.bf16.mxu0 0
        %5414 = vmatpush1.bf16.msra.mxu0 0
        %5415 = vmatprep.subr.bf16.mxu0 0
        %5416 = vmatpush1.bf16.msra.mxu0 0
        %5417 = vmatprep.subr.bf16.mxu0 0
        %5418 = vmatpush1.bf16.msra.mxu0 0
        %5419 = vmatprep.subr.bf16.mxu0 0
        %5420 = vmatpush1.bf16.msra.mxu0 0
        %5421 = vmatprep.subr.bf16.mxu0 0
        %5422 = vmatpush1.bf16.msra.mxu0 0
        %5423 = vmatprep.mubr.bf16.mxu0 0
        %5424 = vmatmul.mubr.bf16.gmra.mrb[0].mxu0 %v4477
        %v5425 = vpop.f32.mrb[0].mxu0
        %v5426 = vadd.f32 0.0, %v5425
        %v5427 = vpop.f32.mrb[0].mxu0
        %v5428 = vpop.f32.mrb[0].mxu0
        %v5429 = vpop.f32.mrb[0].mxu0
        %5430 = vdwg.mxu0
        %v5447 = vunpack.c.l.b16 %v4623
        %v5448 = vunpack.c.l.b16 %v4624
        %v5449 = vunpack.c.l.b16 %v4625
        %v5450 = vunpack.c.l.b16 %v4626
        %v5451 = vunpack.c.l.b16 %v4627
        %v5452 = vunpack.c.l.b16 %v4628
        %v5453 = vunpack.c.l.b16 %v4629
        %v5454 = vunpack.c.l.b16 %v4630
        %v5455 = vunpack.c.l.b16 %v4631
        %v5456 = vunpack.c.l.b16 %v4632
        %v5457 = vunpack.c.l.b16 %v4633
        %v5458 = vunpack.c.l.b16 %v4634
        %v5459 = vunpack.c.l.b16 %v4635
        %v5460 = vunpack.c.l.b16 %v4636
        %v5461 = vunpack.c.l.b16 %v4637
        %v5462 = vunpack.c.l.b16 %v4638
        %v5463 = vpack.c.b16 %v5448, %v5447
        %v5464 = vpack.c.b16 %v5450, %v5449
        %v5465 = vpack.c.b16 %v5452, %v5451
        %v5466 = vpack.c.b16 %v5454, %v5453
        %v5467 = vpack.c.b16 %v5456, %v5455
        %v5468 = vpack.c.b16 %v5458, %v5457
        %v5469 = vpack.c.b16 %v5460, %v5459
        %v5470 = vpack.c.b16 %v5462, %v5461
        %5479 = vmatprep.subr.bf16.mxu0 0
        %5480 = vmatpush1.bf16.msra.mxu0 %v5463
        %5481 = vmatprep.subr.bf16.mxu0 0
        %5482 = vmatpush1.bf16.msra.mxu0 %v5464
        %5483 = vmatprep.subr.bf16.mxu0 0
        %5484 = vmatpush1.bf16.msra.mxu0 %v5465
        %5485 = vmatprep.subr.bf16.mxu0 0
        %5486 = vmatpush1.bf16.msra.mxu0 %v5466
        %5487 = vmatprep.subr.bf16.mxu0 0
        %5488 = vmatpush1.bf16.msra.mxu0 %v5467
        %5489 = vmatprep.subr.bf16.mxu0 0
        %5490 = vmatpush1.bf16.msra.mxu0 %v5468
        %5491 = vmatprep.subr.bf16.mxu0 0
        %5492 = vmatpush1.bf16.msra.mxu0 %v5469
        %5493 = vmatprep.subr.bf16.mxu0 0
        %5494 = vmatpush1.bf16.msra.mxu0 %v5470
        %5495 = vmatprep.subr.bf16.mxu0 0
        %5496 = vmatpush1.bf16.msra.mxu0 0
        %5497 = vmatprep.subr.bf16.mxu0 0
        %5498 = vmatpush1.bf16.msra.mxu0 0
        %5499 = vmatprep.subr.bf16.mxu0 0
        %5500 = vmatpush1.bf16.msra.mxu0 0
        %5501 = vmatprep.subr.bf16.mxu0 0
        %5502 = vmatpush1.bf16.msra.mxu0 0
        %5503 = vmatprep.subr.bf16.mxu0 0
        %5504 = vmatpush1.bf16.msra.mxu0 0
        %5505 = vmatprep.subr.bf16.mxu0 0
        %5506 = vmatpush1.bf16.msra.mxu0 0
        %5507 = vmatprep.subr.bf16.mxu0 0
        %5508 = vmatpush1.bf16.msra.mxu0 0
        %5509 = vmatprep.subr.bf16.mxu0 0
        %5510 = vmatpush1.bf16.msra.mxu0 0
        %5511 = vmatprep.mubr.bf16.mxu0 0
        %5512 = vmatmul.mubr.bf16.gmra.mrb[0].mxu0 %v4478
        %v5513 = vpop.f32.mrb[0].mxu0
        %v5514 = vadd.f32 0.0, %v5513
        %v5515 = vpop.f32.mrb[0].mxu0
        %v5516 = vpop.f32.mrb[0].mxu0
        %v5517 = vpop.f32.mrb[0].mxu0
        %5518 = vdwg.mxu0
        %v5519 = vadd.f32 %v4722, %v4810
        %v5520 = vadd.f32 %v5519, %v4898
        %v5521 = vadd.f32 %v5520, %v4986
        %v5522 = vadd.f32 %v5521, %v5074
        %v5523 = vadd.f32 %v5522, %v5162
        %v5524 = vadd.f32 %v5523, %v5250
        %v5525 = vadd.f32 %v5524, %v5338
        %v5526 = vadd.f32 %v5525, %v5426
        %v5527 = vadd.f32 %v5526, %v5514
        %v5528 = vld [vmem:[%s5] sm:$0x1]
        %v5530 = vlaneseq
        %v5531 = vshrl.u32 %v5530, 7
        %v5532 = vsub.s32 0, %v5531
        %v5533 = vrot.slane %v5528, %v5532
        %v5535 = vadd.f32 %v5527, %v5533
        %5536 = vst [vmem:[%s324] sm:$0xff] %v5535
        %s5537 = sand.u32 %s164, 1
        %s5538 = scalar_lea.sflag [#allocation4], %s5537
        %s5539 = sand.u32 %s164, 1
        %s5540 = smul.addr %s5539, 8
        %s5541 = scalar_lea.vmem [#allocation11], %s5540
        // Predicated region
        $region65: #{tpu_custom_call.1} parent=43 // pred_check
          %p5542 = pneg %p174
        $region66: #{tpu_custom_call.1} parent=43 // pred_check_branch
          %5544 = sbr.rel (%p5542) target = $region68
        $region67: #{tpu_custom_call.1} parent=43 // pred_region
          %s5546 = ssub.s32 128, 128
          %5547 = vsyncadd %s5538, %s5546
          %s5548 = smul.addr %s25, 128
          %s5549 = scalar_lea.hbm %s6, %s5548
          %s5551 = sshll.u32 %s5541, 4
          %s5552 = int_to_ptr.vmem [resolvable:$true] %s5551
          %5554 = dma.vmem_to_hbm [thread:$0]  %s5552, 128, %s5549, %s5538
        $region68: #{tpu_custom_call.1} parent=43 // pred_fallthru
          _
      $region44: #{tpu_custom_call.1} parent=5 // pred_fallthru
        _
      %p5555 = scmp.le.s32.totalorder 2, %s20
      // Predicated region
      $region69: #{tpu_custom_call.1} parent=5 // pred_check
        %p5556 = pneg %p5555
      $region70: #{tpu_custom_call.1} parent=5 // pred_check_branch
        %5558 = sbr.rel (%p5556) target = $region72
      $region71: #{tpu_custom_call.1} parent=5 // pred_region
        %s5559 = ssub.s32 %s20, 2
        // Predicated region
        $region73: #{tpu_custom_call.1} parent=71 // pred_check
          %p5560 = pneg %p180
        $region74: #{tpu_custom_call.1} parent=71 // pred_check_branch
          %5562 = sbr.rel (%p5560) target = $region76
        $region75: #{tpu_custom_call.1} parent=71 // pred_region
          %s5563 = sand.u32 %s165, 1
          %s5564 = scalar_lea.sflag [#allocation4], %s5563
          %s5565 = sand.u32 %s165, 1
          %s5566 = smul.addr %s5565, 8
          %s5567 = scalar_lea.vmem [#allocation11], %s5566
          %5568 = dma.done %s5564, 128
        $region76: #{tpu_custom_call.1} parent=71 // pred_fallthru
          _
      $region72: #{tpu_custom_call.1} parent=5 // pred_fallthru
        _
    $region6: #{tpu_custom_call.1} parent=1 // loop_footer
      %s24 = sadd.s32 1, %s20
    $region7: #{tpu_custom_call.1} parent=1 // loop_footer_branch
      %19 = sbr.rel target = $region3
    $region8: #{tpu_custom_call.1} parent=1 // loop_exit
      _
    %5569 = vsyncpa [#allocation3], 1
    %s5570 = scalar_lea.sflag [#allocation3], 1
    %5571 = vsyncpa %s5570, 1
    %5572 = vsyncpa [#allocation6], 1
    %5573 = vsyncpa [#allocation9], 1
    %5574 = vsyncpa [#allocation4], 1
    %s5575 = scalar_lea.sflag [#allocation4], 1
    %5576 = vsyncpa %s5575, 1

</llo_original>
